<compile_context>
chip_gen: v5e
topology: v5e:2x2
jax: 0.10.0
libtpu: 0.0.40
codegen_flags: <defaults>
</compile_context>

<pallas_src>
import functools

import jax
import jax.numpy as jnp
from jax.experimental import pallas as pl
from jax.experimental.pallas import tpu as pltpu


TILE_M = 1024  # lane tile for the flattened spatial axis (multiple of 128)


def _m_tiling(m):
    """Pick (block_m, grid) for the flattened-spatial (lane) axis."""
    if m <= TILE_M:
        return m, (1,)               # full dim (allowed even if not %128)
    return TILE_M, (pl.cdiv(m, TILE_M),)


# ----------------------------- Pallas kernels -----------------------------

def _matmul_bias_act_kernel(w_ref, x_ref, b_ref, o_ref, *, act):
    # w: (R, K) bf16 (resident), x: (K, tm) bf16, b: (R, 1) f32, o: (R, tm) bf16
    acc = jnp.dot(w_ref[...], x_ref[...], preferred_element_type=jnp.float32)
    acc = acc + b_ref[...]                      # f32 epilogue
    if act == "relu":
        acc = jnp.maximum(acc, 0.0)
    elif act == "tanh01":                       # tanh followed by 0.5*(x+1)
        acc = 0.5 * (jnp.tanh(acc) + 1.0)
    o_ref[...] = acc.astype(o_ref.dtype)


def matmul_bias_act(w, x, b, act="none"):
    # Computes (R, M) = w (R, K) @ x (K, M) + b, lane-dense over M.
    R, K = w.shape
    K2, M = x.shape
    assert K == K2 and b.shape == (R, 1)
    tm, grid = _m_tiling(M)
    kernel = functools.partial(_matmul_bias_act_kernel, act=act)
    cost = pl.CostEstimate(
        flops=int(2 * R * K * M),
        transcendentals=int(R * M) if act == "tanh01" else 0,
        bytes_accessed=int(2 * (R * K + K * M + R * M) + 4 * R),
    )
    return pl.pallas_call(
        kernel,
        grid=grid,
        in_specs=[
            pl.BlockSpec((R, K), lambda i: (0, 0)),    # weight stays resident
            pl.BlockSpec((K, tm), lambda i: (0, i)),   # activation tile (pipelined)
            pl.BlockSpec((R, 1), lambda i: (0, 0)),    # bias resident
        ],
        out_specs=pl.BlockSpec((R, tm), lambda i: (0, i)),
        out_shape=jax.ShapeDtypeStruct((R, M), jnp.bfloat16),
        compiler_params=pltpu.CompilerParams(dimension_semantics=("parallel",)),
        cost_estimate=cost,
    )(w, x, b)


def _decoder_head_kernel(w1_ref, b1_ref, w2_ref, b2_ref, x_ref, o_ref):
    # Fused: Conv2d(1x1) -> ConvTranspose2d(k3,s3) taps -> tanh -> 0.5*(x+1).
    h = jnp.dot(w1_ref[...], x_ref[...], preferred_element_type=jnp.float32)
    h = (h + b1_ref[...]).astype(w2_ref.dtype)
    acc = jnp.dot(w2_ref[...], h, preferred_element_type=jnp.float32) + b2_ref[...]
    o_ref[...] = (0.5 * (jnp.tanh(acc) + 1.0)).astype(o_ref.dtype)


def decoder_head(w1, b1, w2, b2, x):
    R1, K1 = w1.shape
    R2, K2 = w2.shape
    K, M = x.shape
    assert K == K1 and K2 == R1 and b1.shape == (R1, 1) and b2.shape == (R2, 1)
    tm, grid = _m_tiling(M)
    cost = pl.CostEstimate(
        flops=int(2 * M * (R1 * K1 + R2 * K2)),
        transcendentals=int(R2 * M),
        bytes_accessed=int(2 * (R1 * K1 + R2 * K2 + K * M + R2 * M) + 4 * (R1 + R2)),
    )
    return pl.pallas_call(
        _decoder_head_kernel,
        grid=grid,
        in_specs=[
            pl.BlockSpec((R1, K1), lambda i: (0, 0)),
            pl.BlockSpec((R1, 1), lambda i: (0, 0)),
            pl.BlockSpec((R2, K2), lambda i: (0, 0)),
            pl.BlockSpec((R2, 1), lambda i: (0, 0)),
            pl.BlockSpec((K, tm), lambda i: (0, i)),
        ],
        out_specs=pl.BlockSpec((R2, tm), lambda i: (0, i)),
        out_shape=jax.ShapeDtypeStruct((R2, M), jnp.bfloat16),
        compiler_params=pltpu.CompilerParams(dimension_semantics=("parallel",)),
        cost_estimate=cost,
    )(w1, b1, w2, b2, x)


def _max4_kernel(a_ref, b_ref, c_ref, d_ref, o_ref):
    o_ref[...] = jnp.maximum(jnp.maximum(a_ref[...], b_ref[...]),
                             jnp.maximum(c_ref[...], d_ref[...]))


def maxpool2(x4):
    # x4: (C, N, H, W), H and W even (matches nn.MaxPool2d(2) on even sizes).
    C, N, H, W = x4.shape
    OH, OW = H // 2, W // 2
    Mq = N * OH * OW
    quads = [x4[:, :, a::2, b::2].reshape(C, Mq) for a in (0, 1) for b in (0, 1)]
    tm, grid = _m_tiling(Mq)
    cost = pl.CostEstimate(flops=int(3 * C * Mq), transcendentals=0,
                           bytes_accessed=int(2 * 5 * C * Mq))

    def spec():
        return pl.BlockSpec((C, tm), lambda i: (0, i))

    y2 = pl.pallas_call(
        _max4_kernel,
        grid=grid,
        in_specs=[spec(), spec(), spec(), spec()],
        out_specs=spec(),
        out_shape=jax.ShapeDtypeStruct((C, Mq), x4.dtype),
        compiler_params=pltpu.CompilerParams(dimension_semantics=("parallel",)),
        cost_estimate=cost,
    )(*quads)
    return y2.reshape(C, N, OH, OW)


# --------------------------- layer wrappers (glue) --------------------------

def conv3x3_relu(x4, w2, b):
    # ConvBlock: Conv2d(k=3, stride=1, valid) + ReLU.  x4: (C, N, H, W).
    C, N, H, W = x4.shape
    OC = w2.shape[0]
    OH, OW = H - 2, W - 2
    patches = jnp.concatenate(
        [x4[:, :, kh:kh + OH, kw:kw + OW] for kh in range(3) for kw in range(3)],
        axis=0)                                      # (9C, N, OH, OW), rows (kh,kw,c)
    y2 = matmul_bias_act(w2, patches.reshape(9 * C, N * OH * OW), b, act="relu")
    return y2.reshape(OC, N, OH, OW)


def conv_transpose2x2_s2(x4, w2, b4):
    # ConvTranspose2d(k=2, stride=2): all 4 taps in one matmul, interleave after.
    C, N, H, W = x4.shape
    OC = w2.shape[0] // 4
    y2 = matmul_bias_act(w2, x4.reshape(C, N * H * W), b4, act="none")
    y = y2.reshape(OC, 2, 2, N, H, W)                # (oc, a, b, n, i, j)
    y = jnp.transpose(y, (0, 3, 4, 1, 5, 2))         # (oc, n, i, a, j, b)
    return y.reshape(OC, N, 2 * H, 2 * W)            # out[oc, n, 2i+a, 2j+b]


def decoder_tail(x4, w1, b1, w2, b2):
    # Fused Conv2d(1x1) -> ConvTranspose2d(k=3, s=3, p=4) -> tanh -> 0.5*(x+1).
    # stride == kernel, so the taps are exactly the interleaved output: a single
    # reshape/transpose + static crop replaces the old per-pixel gather.
    C, N, H, W = x4.shape
    OC = w2.shape[0] // 9
    y2 = decoder_head(w1, b1, w2, b2, x4.reshape(C, N * H * W))
    y = y2.reshape(OC, 3, 3, N, H, W)                # (oc, a, b, n, i, j)
    y = jnp.transpose(y, (0, 3, 4, 1, 5, 2))         # (oc, n, i, a, j, b)
    y = y.reshape(OC, N, 3 * H, 3 * W)
    pad = 4
    oh, ow = 3 * H - 2 * pad, 3 * W - 2 * pad        # (H-1)*3 + 3 - 2*pad
    return y[:, :, pad:pad + oh, pad:pad + ow]


def center_crop(x4, hh, ww):
    # matches torchvision CenterCrop (size differences here are even)
    _, _, H, W = x4.shape
    top, left = (H - hh) // 2, (W - ww) // 2
    return x4[:, :, top:top + hh, left:left + ww]


# ------------------------------ parameters ---------------------------------

def init_params(key, cfg):
    enc_cfg = cfg['encoder']['layers']
    dec_cfg = cfg['decoder']['layers']
    out_ch = cfg['decoder']['out_ch']
    keys = iter(jax.random.split(key, 64))
    nk = lambda: next(keys)

    def conv_init(ic, oc):
        fan_in = ic * 9
        w = jax.random.normal(nk(), (oc, 3, 3, ic), jnp.float32) * (2.0 / fan_in) ** 0.5
        b = jax.random.normal(nk(), (oc,), jnp.float32) * 0.01
        # weight columns ordered (kh, kw, c) to match the im2col patch rows
        return w.reshape(oc, 9 * ic).astype(jnp.bfloat16), b.reshape(oc, 1)

    enc = []
    for i in range(len(enc_cfg) - 1):
        layer = enc_cfg[i]
        for j in range(len(layer) - 1):
            w, b = conv_init(layer[j], layer[j + 1])
            enc.append(('conv', w, b))
        enc.append(('pool',))
    layer = enc_cfg[-1]
    for j in range(len(layer) - 1):
        w, b = conv_init(layer[j], layer[j + 1])
        enc.append(('conv', w, b))

    dec = []
    for i in range(len(dec_cfg)):
        layer = dec_cfg[i]
        ic, oc = layer[0], layer[0] // 2
        w = jax.random.normal(nk(), (oc, 2, 2, ic), jnp.float32) * (1.0 / ic) ** 0.5
        b = jax.random.normal(nk(), (oc,), jnp.float32) * 0.01
        # rows ordered (oc, a, b); bias repeated per tap
        dec.append(('upconv', w.reshape(4 * oc, ic).astype(jnp.bfloat16),
                    jnp.repeat(b, 4).reshape(4 * oc, 1)))
        for j in range(len(layer) - 1):
            w, b = conv_init(layer[j], layer[j + 1])
            dec.append(('conv', w, b))
    ic = dec_cfg[-1][-1]
    w = jax.random.normal(nk(), (out_ch, ic), jnp.float32) * (1.0 / ic) ** 0.5
    b = jax.random.normal(nk(), (out_ch,), jnp.float32) * 0.01
    dec.append(('conv1x1', w.astype(jnp.bfloat16), b.reshape(out_ch, 1)))

    # self.upconv1 = ConvTranspose2d(3, 3, kernel_size=3, stride=3, padding=4)
    w_up = jax.random.normal(nk(), (3, 3, 3, 3), jnp.float32) * (1.0 / 3.0) ** 0.5
    b_up = jax.random.normal(nk(), (3,), jnp.float32) * 0.01
    upconv1 = (w_up.reshape(27, 3).astype(jnp.bfloat16),     # rows (oc, a, b)
               jnp.repeat(b_up, 9).reshape(27, 1))
    return {'enc': enc, 'dec': dec, 'upconv1': upconv1}


# ------------------------------ forward pass --------------------------------

def unet_forward(params, x_nchw):
    # NCHW -> channels-first, spatial-on-lanes layout (C, N, H, W), bf16.
    x = jnp.transpose(x_nchw, (1, 0, 2, 3)).astype(jnp.bfloat16)

    enc_out = []
    for layer in params['enc']:
        if layer[0] == 'pool':
            enc_out.append(x)                       # save skip BEFORE pooling
            x = maxpool2(x)
        else:
            _, w, b = layer
            x = conv3x3_relu(x, w, b)
    enc_out = enc_out[::-1]

    k = 0
    for layer in params['dec']:
        kind = layer[0]
        if kind == 'upconv':
            _, w, b = layer
            x = conv_transpose2x2_s2(x, w, b)
            skip = center_crop(enc_out[k], x.shape[2], x.shape[3])
            x = jnp.concatenate([x, skip], axis=0)  # channel concat (axis 0)
            k += 1
        elif kind == 'conv':
            _, w, b = layer
            x = conv3x3_relu(x, w, b)
        else:  # 'conv1x1' -> fused with upconv1 + tanh + 0.5*(x+1)
            _, w1, b1 = layer
            w2, b2 = params['upconv1']
            x = decoder_tail(x, w1, b1, w2, b2)

    # (C, N, H, W) -> NCHW, back to f32
    return jnp.transpose(x, (1, 0, 2, 3)).astype(jnp.float32)


# ---------------------------------- main -------------------------------------

if __name__ == "__main__":
    # Small U-Net config consistent with the PyTorch constructor.
    cfg = {
        'encoder': {'layers': [[3, 8, 8], [8, 16, 16], [16, 32, 32]]},
        'decoder': {'layers': [[32, 16, 16], [16, 8, 8]], 'out_ch': 3},
    }
    key = jax.random.PRNGKey(0)
    pkey, xkey = jax.random.split(key)
    params = init_params(pkey, cfg)

    # NCHW input, like the PyTorch module.  44x44 keeps every valid conv /
    # pool / transpose-conv spatial size positive (output is (2, 3, 4, 4)).
    x = jax.random.normal(xkey, (2, 3, 44, 44), jnp.float32)

    fwd = jax.jit(functools.partial(unet_forward, params))   # one program, no per-op dispatch
    out = jax.block_until_ready(fwd(x))
    assert out.shape == (2, 3, 4, 4), out.shape
    assert bool(jnp.all(out >= 0.0)) and bool(jnp.all(out <= 1.0))
    print("KERNEL_OK")
</pallas_src>

<mosaic_0001>
module attributes {stable_mosaic.version = 11 : i64} {
  func.func @_matmul_bias_act_kernel(%arg0: i32, %arg1: memref<8x27xbf16, #tpu.memory_space<vmem>>, %arg2: memref<27x1024xbf16, #tpu.memory_space<vmem>>, %arg3: memref<8x1xf32, #tpu.memory_space<vmem>>, %arg4: memref<8x1024xbf16, #tpu.memory_space<vmem>>) attributes {dimension_semantics = [#tpu.dimension_semantics<parallel>], iteration_bounds = array<i64: 4>, scalar_prefetch = 0 : i64, scratch_operands = 0 : i64, tpu.core_type = #tpu.core_type<tc>, window_params = [{pipeline_mode = #tpu.pipeline_mode<synchronous>, transform_indices = @transform_0, window_bounds = array<i64: 8, 27>}, {transform_indices = @transform_1, window_bounds = array<i64: 27, 1024>}, {pipeline_mode = #tpu.pipeline_mode<synchronous>, transform_indices = @transform_2, window_bounds = array<i64: 8, 1>}, {transform_indices = @transform_3, window_bounds = array<i64: 8, 1024>}]} {
    %c0 = arith.constant 0 : index
    %c0_0 = arith.constant 0 : index
    %0 = vector.load %arg1[%c0, %c0_0] : memref<8x27xbf16, #tpu.memory_space<vmem>>, vector<8x27xbf16>
    %c0_1 = arith.constant 0 : index
    %c0_2 = arith.constant 0 : index
    %1 = vector.load %arg2[%c0_1, %c0_2] : memref<27x1024xbf16, #tpu.memory_space<vmem>>, vector<27x1024xbf16>
    %cst = arith.constant dense<0.000000e+00> : vector<8x1024xf32>
    %2 = tpu.matmul %0, %1, %cst {dimension_numbers = #tpu.dot_dimension_numbers<[1], [0], [0], [1], [0, 0, 1, 1], [], []>} : vector<8x27xbf16>, vector<27x1024xbf16>, vector<8x1024xf32> -> vector<8x1024xf32>
    %c0_3 = arith.constant 0 : index
    %c0_4 = arith.constant 0 : index
    %3 = vector.load %arg3[%c0_3, %c0_4] : memref<8x1xf32, #tpu.memory_space<vmem>>, vector<8x1xf32>
    %4 = vector.broadcast %3 : vector<8x1xf32> to vector<8x1024xf32>
    %5 = arith.addf %2, %4 : vector<8x1024xf32>
    %cst_5 = arith.constant 0.000000e+00 : f32
    %6 = vector.broadcast %cst_5 : f32 to vector<8x1024xf32>
    %7 = arith.maximumf %5, %6 : vector<8x1024xf32>
    %8 = arith.truncf %7 : vector<8x1024xf32> to vector<8x1024xbf16>
    %c0_6 = arith.constant 0 : index
    %c0_7 = arith.constant 0 : index
    %9 = vector.load %arg4[%c0_6, %c0_7] : memref<8x1024xbf16, #tpu.memory_space<vmem>>, vector<8x1024xbf16>
    tpu.vector_store %arg4[%c0_6, %c0_7], %8 {strides = array<i32>} : memref<8x1024xbf16, #tpu.memory_space<vmem>>, vector<8x1024xbf16>,
    return
  }
  func.func @transform_0(%arg0: i32) -> (i32, i32) {
    %c0_i32 = arith.constant 0 : i32
    %c0_i32_0 = arith.constant 0 : i32
    %c0_i32_1 = arith.constant 0 : i32
    return %c0_i32, %c0_i32_0 : i32, i32
  }
  func.func @transform_1(%arg0: i32) -> (i32, i32) {
    %c0_i32 = arith.constant 0 : i32
    %c0_i32_0 = arith.constant 0 : i32
    return %c0_i32, %arg0 : i32, i32
  }
  func.func @transform_2(%arg0: i32) -> (i32, i32) {
    %c0_i32 = arith.constant 0 : i32
    %c0_i32_0 = arith.constant 0 : i32
    %c0_i32_1 = arith.constant 0 : i32
    return %c0_i32, %c0_i32_0 : i32, i32
  }
  func.func @transform_3(%arg0: i32) -> (i32, i32) {
    %c0_i32 = arith.constant 0 : i32
    %c0_i32_0 = arith.constant 0 : i32
    return %c0_i32, %arg0 : i32, i32
  }
}

module attributes {stable_mosaic.version = 11 : i64} {
  func.func @_matmul_bias_act_kernel(%arg0: i32, %arg1: memref<8x72xbf16, #tpu.memory_space<vmem>>, %arg2: memref<72x1024xbf16, #tpu.memory_space<vmem>>, %arg3: memref<8x1xf32, #tpu.memory_space<vmem>>, %arg4: memref<8x1024xbf16, #tpu.memory_space<vmem>>) attributes {dimension_semantics = [#tpu.dimension_semantics<parallel>], iteration_bounds = array<i64: 4>, scalar_prefetch = 0 : i64, scratch_operands = 0 : i64, tpu.core_type = #tpu.core_type<tc>, window_params = [{pipeline_mode = #tpu.pipeline_mode<synchronous>, transform_indices = @transform_0, window_bounds = array<i64: 8, 72>}, {transform_indices = @transform_1, window_bounds = array<i64: 72, 1024>}, {pipeline_mode = #tpu.pipeline_mode<synchronous>, transform_indices = @transform_2, window_bounds = array<i64: 8, 1>}, {transform_indices = @transform_3, window_bounds = array<i64: 8, 1024>}]} {
    %c0 = arith.constant 0 : index
    %c0_0 = arith.constant 0 : index
    %0 = vector.load %arg1[%c0, %c0_0] : memref<8x72xbf16, #tpu.memory_space<vmem>>, vector<8x72xbf16>
    %c0_1 = arith.constant 0 : index
    %c0_2 = arith.constant 0 : index
    %1 = vector.load %arg2[%c0_1, %c0_2] : memref<72x1024xbf16, #tpu.memory_space<vmem>>, vector<72x1024xbf16>
    %cst = arith.constant dense<0.000000e+00> : vector<8x1024xf32>
    %2 = tpu.matmul %0, %1, %cst {dimension_numbers = #tpu.dot_dimension_numbers<[1], [0], [0], [1], [0, 0, 1, 1], [], []>} : vector<8x72xbf16>, vector<72x1024xbf16>, vector<8x1024xf32> -> vector<8x1024xf32>
    %c0_3 = arith.constant 0 : index
    %c0_4 = arith.constant 0 : index
    %3 = vector.load %arg3[%c0_3, %c0_4] : memref<8x1xf32, #tpu.memory_space<vmem>>, vector<8x1xf32>
    %4 = vector.broadcast %3 : vector<8x1xf32> to vector<8x1024xf32>
    %5 = arith.addf %2, %4 : vector<8x1024xf32>
    %cst_5 = arith.constant 0.000000e+00 : f32
    %6 = vector.broadcast %cst_5 : f32 to vector<8x1024xf32>
    %7 = arith.maximumf %5, %6 : vector<8x1024xf32>
    %8 = arith.truncf %7 : vector<8x1024xf32> to vector<8x1024xbf16>
    %c0_6 = arith.constant 0 : index
    %c0_7 = arith.constant 0 : index
    %9 = vector.load %arg4[%c0_6, %c0_7] : memref<8x1024xbf16, #tpu.memory_space<vmem>>, vector<8x1024xbf16>
    tpu.vector_store %arg4[%c0_6, %c0_7], %8 {strides = array<i32>} : memref<8x1024xbf16, #tpu.memory_space<vmem>>, vector<8x1024xbf16>,
    return
  }
  func.func @transform_0(%arg0: i32) -> (i32, i32) {
    %c0_i32 = arith.constant 0 : i32
    %c0_i32_0 = arith.constant 0 : i32
    %c0_i32_1 = arith.constant 0 : i32
    return %c0_i32, %c0_i32_0 : i32, i32
  }
  func.func @transform_1(%arg0: i32) -> (i32, i32) {
    %c0_i32 = arith.constant 0 : i32
    %c0_i32_0 = arith.constant 0 : i32
    return %c0_i32, %arg0 : i32, i32
  }
  func.func @transform_2(%arg0: i32) -> (i32, i32) {
    %c0_i32 = arith.constant 0 : i32
    %c0_i32_0 = arith.constant 0 : i32
    %c0_i32_1 = arith.constant 0 : i32
    return %c0_i32, %c0_i32_0 : i32, i32
  }
  func.func @transform_3(%arg0: i32) -> (i32, i32) {
    %c0_i32 = arith.constant 0 : i32
    %c0_i32_0 = arith.constant 0 : i32
    return %c0_i32, %arg0 : i32, i32
  }
}

module attributes {stable_mosaic.version = 11 : i64} {
  func.func @_max4_kernel(%arg0: i32, %arg1: memref<8x800xbf16, #tpu.memory_space<vmem>>, %arg2: memref<8x800xbf16, #tpu.memory_space<vmem>>, %arg3: memref<8x800xbf16, #tpu.memory_space<vmem>>, %arg4: memref<8x800xbf16, #tpu.memory_space<vmem>>, %arg5: memref<8x800xbf16, #tpu.memory_space<vmem>>) attributes {dimension_semantics = [#tpu.dimension_semantics<parallel>], iteration_bounds = array<i64: 1>, scalar_prefetch = 0 : i64, scratch_operands = 0 : i64, tpu.core_type = #tpu.core_type<tc>, window_params = [{transform_indices = @transform_0, window_bounds = array<i64: 8, 800>}, {transform_indices = @transform_1, window_bounds = array<i64: 8, 800>}, {transform_indices = @transform_2, window_bounds = array<i64: 8, 800>}, {transform_indices = @transform_3, window_bounds = array<i64: 8, 800>}, {transform_indices = @transform_4, window_bounds = array<i64: 8, 800>}]} {
    %c0 = arith.constant 0 : index
    %c0_0 = arith.constant 0 : index
    %0 = vector.load %arg1[%c0, %c0_0] : memref<8x800xbf16, #tpu.memory_space<vmem>>, vector<8x800xbf16>
    %c0_1 = arith.constant 0 : index
    %c0_2 = arith.constant 0 : index
    %1 = vector.load %arg2[%c0_1, %c0_2] : memref<8x800xbf16, #tpu.memory_space<vmem>>, vector<8x800xbf16>
    %2 = arith.maximumf %0, %1 : vector<8x800xbf16>
    %c0_3 = arith.constant 0 : index
    %c0_4 = arith.constant 0 : index
    %3 = vector.load %arg3[%c0_3, %c0_4] : memref<8x800xbf16, #tpu.memory_space<vmem>>, vector<8x800xbf16>
    %c0_5 = arith.constant 0 : index
    %c0_6 = arith.constant 0 : index
    %4 = vector.load %arg4[%c0_5, %c0_6] : memref<8x800xbf16, #tpu.memory_space<vmem>>, vector<8x800xbf16>
    %5 = arith.maximumf %3, %4 : vector<8x800xbf16>
    %6 = arith.maximumf %2, %5 : vector<8x800xbf16>
    %c0_7 = arith.constant 0 : index
    %c0_8 = arith.constant 0 : index
    %7 = vector.load %arg5[%c0_7, %c0_8] : memref<8x800xbf16, #tpu.memory_space<vmem>>, vector<8x800xbf16>
    tpu.vector_store %arg5[%c0_7, %c0_8], %6 {strides = array<i32>} : memref<8x800xbf16, #tpu.memory_space<vmem>>, vector<8x800xbf16>,
    return
  }
  func.func @transform_0(%arg0: i32) -> (i32, i32) {
    %c0_i32 = arith.constant 0 : i32
    %c0_i32_0 = arith.constant 0 : i32
    return %c0_i32, %arg0 : i32, i32
  }
  func.func @transform_1(%arg0: i32) -> (i32, i32) {
    %c0_i32 = arith.constant 0 : i32
    %c0_i32_0 = arith.constant 0 : i32
    return %c0_i32, %arg0 : i32, i32
  }
  func.func @transform_2(%arg0: i32) -> (i32, i32) {
    %c0_i32 = arith.constant 0 : i32
    %c0_i32_0 = arith.constant 0 : i32
    return %c0_i32, %arg0 : i32, i32
  }
  func.func @transform_3(%arg0: i32) -> (i32, i32) {
    %c0_i32 = arith.constant 0 : i32
    %c0_i32_0 = arith.constant 0 : i32
    return %c0_i32, %arg0 : i32, i32
  }
  func.func @transform_4(%arg0: i32) -> (i32, i32) {
    %c0_i32 = arith.constant 0 : i32
    %c0_i32_0 = arith.constant 0 : i32
    return %c0_i32, %arg0 : i32, i32
  }
}

module attributes {stable_mosaic.version = 11 : i64} {
  func.func @_matmul_bias_act_kernel(%arg0: i32, %arg1: memref<16x72xbf16, #tpu.memory_space<vmem>>, %arg2: memref<72x648xbf16, #tpu.memory_space<vmem>>, %arg3: memref<16x1xf32, #tpu.memory_space<vmem>>, %arg4: memref<16x648xbf16, #tpu.memory_space<vmem>>) attributes {dimension_semantics = [#tpu.dimension_semantics<parallel>], iteration_bounds = array<i64: 1>, scalar_prefetch = 0 : i64, scratch_operands = 0 : i64, tpu.core_type = #tpu.core_type<tc>, window_params = [{pipeline_mode = #tpu.pipeline_mode<synchronous>, transform_indices = @transform_0, window_bounds = array<i64: 16, 72>}, {transform_indices = @transform_1, window_bounds = array<i64: 72, 648>}, {pipeline_mode = #tpu.pipeline_mode<synchronous>, transform_indices = @transform_2, window_bounds = array<i64: 16, 1>}, {transform_indices = @transform_3, window_bounds = array<i64: 16, 648>}]} {
    %c0 = arith.constant 0 : index
    %c0_0 = arith.constant 0 : index
    %0 = vector.load %arg1[%c0, %c0_0] : memref<16x72xbf16, #tpu.memory_space<vmem>>, vector<16x72xbf16>
    %c0_1 = arith.constant 0 : index
    %c0_2 = arith.constant 0 : index
    %1 = vector.load %arg2[%c0_1, %c0_2] : memref<72x648xbf16, #tpu.memory_space<vmem>>, vector<72x648xbf16>
    %cst = arith.constant dense<0.000000e+00> : vector<16x648xf32>
    %2 = tpu.matmul %0, %1, %cst {dimension_numbers = #tpu.dot_dimension_numbers<[1], [0], [0], [1], [0, 0, 1, 1], [], []>} : vector<16x72xbf16>, vector<72x648xbf16>, vector<16x648xf32> -> vector<16x648xf32>
    %c0_3 = arith.constant 0 : index
    %c0_4 = arith.constant 0 : index
    %3 = vector.load %arg3[%c0_3, %c0_4] : memref<16x1xf32, #tpu.memory_space<vmem>>, vector<16x1xf32>
    %4 = vector.broadcast %3 : vector<16x1xf32> to vector<16x648xf32>
    %5 = arith.addf %2, %4 : vector<16x648xf32>
    %cst_5 = arith.constant 0.000000e+00 : f32
    %6 = vector.broadcast %cst_5 : f32 to vector<16x648xf32>
    %7 = arith.maximumf %5, %6 : vector<16x648xf32>
    %8 = arith.truncf %7 : vector<16x648xf32> to vector<16x648xbf16>
    %c0_6 = arith.constant 0 : index
    %c0_7 = arith.constant 0 : index
    %9 = vector.load %arg4[%c0_6, %c0_7] : memref<16x648xbf16, #tpu.memory_space<vmem>>, vector<16x648xbf16>
    tpu.vector_store %arg4[%c0_6, %c0_7], %8 {strides = array<i32>} : memref<16x648xbf16, #tpu.memory_space<vmem>>, vector<16x648xbf16>,
    return
  }
  func.func @transform_0(%arg0: i32) -> (i32, i32) {
    %c0_i32 = arith.constant 0 : i32
    %c0_i32_0 = arith.constant 0 : i32
    %c0_i32_1 = arith.constant 0 : i32
    return %c0_i32, %c0_i32_0 : i32, i32
  }
  func.func @transform_1(%arg0: i32) -> (i32, i32) {
    %c0_i32 = arith.constant 0 : i32
    %c0_i32_0 = arith.constant 0 : i32
    return %c0_i32, %arg0 : i32, i32
  }
  func.func @transform_2(%arg0: i32) -> (i32, i32) {
    %c0_i32 = arith.constant 0 : i32
    %c0_i32_0 = arith.constant 0 : i32
    %c0_i32_1 = arith.constant 0 : i32
    return %c0_i32, %c0_i32_0 : i32, i32
  }
  func.func @transform_3(%arg0: i32) -> (i32, i32) {
    %c0_i32 = arith.constant 0 : i32
    %c0_i32_0 = arith.constant 0 : i32
    return %c0_i32, %arg0 : i32, i32
  }
}

module attributes {stable_mosaic.version = 11 : i64} {
  func.func @_matmul_bias_act_kernel(%arg0: i32, %arg1: memref<16x144xbf16, #tpu.memory_space<vmem>>, %arg2: memref<144x512xbf16, #tpu.memory_space<vmem>>, %arg3: memref<16x1xf32, #tpu.memory_space<vmem>>, %arg4: memref<16x512xbf16, #tpu.memory_space<vmem>>) attributes {dimension_semantics = [#tpu.dimension_semantics<parallel>], iteration_bounds = array<i64: 1>, scalar_prefetch = 0 : i64, scratch_operands = 0 : i64, tpu.core_type = #tpu.core_type<tc>, window_params = [{pipeline_mode = #tpu.pipeline_mode<synchronous>, transform_indices = @transform_0, window_bounds = array<i64: 16, 144>}, {transform_indices = @transform_1, window_bounds = array<i64: 144, 512>}, {pipeline_mode = #tpu.pipeline_mode<synchronous>, transform_indices = @transform_2, window_bounds = array<i64: 16, 1>}, {transform_indices = @transform_3, window_bounds = array<i64: 16, 512>}]} {
    %c0 = arith.constant 0 : index
    %c0_0 = arith.constant 0 : index
    %0 = vector.load %arg1[%c0, %c0_0] : memref<16x144xbf16, #tpu.memory_space<vmem>>, vector<16x144xbf16>
    %c0_1 = arith.constant 0 : index
    %c0_2 = arith.constant 0 : index
    %1 = vector.load %arg2[%c0_1, %c0_2] : memref<144x512xbf16, #tpu.memory_space<vmem>>, vector<144x512xbf16>
    %cst = arith.constant dense<0.000000e+00> : vector<16x512xf32>
    %2 = tpu.matmul %0, %1, %cst {dimension_numbers = #tpu.dot_dimension_numbers<[1], [0], [0], [1], [0, 0, 1, 1], [], []>} : vector<16x144xbf16>, vector<144x512xbf16>, vector<16x512xf32> -> vector<16x512xf32>
    %c0_3 = arith.constant 0 : index
    %c0_4 = arith.constant 0 : index
    %3 = vector.load %arg3[%c0_3, %c0_4] : memref<16x1xf32, #tpu.memory_space<vmem>>, vector<16x1xf32>
    %4 = vector.broadcast %3 : vector<16x1xf32> to vector<16x512xf32>
    %5 = arith.addf %2, %4 : vector<16x512xf32>
    %cst_5 = arith.constant 0.000000e+00 : f32
    %6 = vector.broadcast %cst_5 : f32 to vector<16x512xf32>
    %7 = arith.maximumf %5, %6 : vector<16x512xf32>
    %8 = arith.truncf %7 : vector<16x512xf32> to vector<16x512xbf16>
    %c0_6 = arith.constant 0 : index
    %c0_7 = arith.constant 0 : index
    %9 = vector.load %arg4[%c0_6, %c0_7] : memref<16x512xbf16, #tpu.memory_space<vmem>>, vector<16x512xbf16>
    tpu.vector_store %arg4[%c0_6, %c0_7], %8 {strides = array<i32>} : memref<16x512xbf16, #tpu.memory_space<vmem>>, vector<16x512xbf16>,
    return
  }
  func.func @transform_0(%arg0: i32) -> (i32, i32) {
    %c0_i32 = arith.constant 0 : i32
    %c0_i32_0 = arith.constant 0 : i32
    %c0_i32_1 = arith.constant 0 : i32
    return %c0_i32, %c0_i32_0 : i32, i32
  }
  func.func @transform_1(%arg0: i32) -> (i32, i32) {
    %c0_i32 = arith.constant 0 : i32
    %c0_i32_0 = arith.constant 0 : i32
    return %c0_i32, %arg0 : i32, i32
  }
  func.func @transform_2(%arg0: i32) -> (i32, i32) {
    %c0_i32 = arith.constant 0 : i32
    %c0_i32_0 = arith.constant 0 : i32
    %c0_i32_1 = arith.constant 0 : i32
    return %c0_i32, %c0_i32_0 : i32, i32
  }
  func.func @transform_3(%arg0: i32) -> (i32, i32) {
    %c0_i32 = arith.constant 0 : i32
    %c0_i32_0 = arith.constant 0 : i32
    return %c0_i32, %arg0 : i32, i32
  }
}

module attributes {stable_mosaic.version = 11 : i64} {
  func.func @_max4_kernel(%arg0: i32, %arg1: memref<16x128xbf16, #tpu.memory_space<vmem>>, %arg2: memref<16x128xbf16, #tpu.memory_space<vmem>>, %arg3: memref<16x128xbf16, #tpu.memory_space<vmem>>, %arg4: memref<16x128xbf16, #tpu.memory_space<vmem>>, %arg5: memref<16x128xbf16, #tpu.memory_space<vmem>>) attributes {dimension_semantics = [#tpu.dimension_semantics<parallel>], iteration_bounds = array<i64: 1>, scalar_prefetch = 0 : i64, scratch_operands = 0 : i64, tpu.core_type = #tpu.core_type<tc>, window_params = [{transform_indices = @transform_0, window_bounds = array<i64: 16, 128>}, {transform_indices = @transform_1, window_bounds = array<i64: 16, 128>}, {transform_indices = @transform_2, window_bounds = array<i64: 16, 128>}, {transform_indices = @transform_3, window_bounds = array<i64: 16, 128>}, {transform_indices = @transform_4, window_bounds = array<i64: 16, 128>}]} {
    %c0 = arith.constant 0 : index
    %c0_0 = arith.constant 0 : index
    %0 = vector.load %arg1[%c0, %c0_0] : memref<16x128xbf16, #tpu.memory_space<vmem>>, vector<16x128xbf16>
    %c0_1 = arith.constant 0 : index
    %c0_2 = arith.constant 0 : index
    %1 = vector.load %arg2[%c0_1, %c0_2] : memref<16x128xbf16, #tpu.memory_space<vmem>>, vector<16x128xbf16>
    %2 = arith.maximumf %0, %1 : vector<16x128xbf16>
    %c0_3 = arith.constant 0 : index
    %c0_4 = arith.constant 0 : index
    %3 = vector.load %arg3[%c0_3, %c0_4] : memref<16x128xbf16, #tpu.memory_space<vmem>>, vector<16x128xbf16>
    %c0_5 = arith.constant 0 : index
    %c0_6 = arith.constant 0 : index
    %4 = vector.load %arg4[%c0_5, %c0_6] : memref<16x128xbf16, #tpu.memory_space<vmem>>, vector<16x128xbf16>
    %5 = arith.maximumf %3, %4 : vector<16x128xbf16>
    %6 = arith.maximumf %2, %5 : vector<16x128xbf16>
    %c0_7 = arith.constant 0 : index
    %c0_8 = arith.constant 0 : index
    %7 = vector.load %arg5[%c0_7, %c0_8] : memref<16x128xbf16, #tpu.memory_space<vmem>>, vector<16x128xbf16>
    tpu.vector_store %arg5[%c0_7, %c0_8], %6 {strides = array<i32>} : memref<16x128xbf16, #tpu.memory_space<vmem>>, vector<16x128xbf16>,
    return
  }
  func.func @transform_0(%arg0: i32) -> (i32, i32) {
    %c0_i32 = arith.constant 0 : i32
    %c0_i32_0 = arith.constant 0 : i32
    return %c0_i32, %arg0 : i32, i32
  }
  func.func @transform_1(%arg0: i32) -> (i32, i32) {
    %c0_i32 = arith.constant 0 : i32
    %c0_i32_0 = arith.constant 0 : i32
    return %c0_i32, %arg0 : i32, i32
  }
  func.func @transform_2(%arg0: i32) -> (i32, i32) {
    %c0_i32 = arith.constant 0 : i32
    %c0_i32_0 = arith.constant 0 : i32
    return %c0_i32, %arg0 : i32, i32
  }
  func.func @transform_3(%arg0: i32) -> (i32, i32) {
    %c0_i32 = arith.constant 0 : i32
    %c0_i32_0 = arith.constant 0 : i32
    return %c0_i32, %arg0 : i32, i32
  }
  func.func @transform_4(%arg0: i32) -> (i32, i32) {
    %c0_i32 = arith.constant 0 : i32
    %c0_i32_0 = arith.constant 0 : i32
    return %c0_i32, %arg0 : i32, i32
  }
}

module attributes {stable_mosaic.version = 11 : i64} {
  func.func @_matmul_bias_act_kernel(%arg0: i32, %arg1: memref<32x144xbf16, #tpu.memory_space<vmem>>, %arg2: memref<144x72xbf16, #tpu.memory_space<vmem>>, %arg3: memref<32x1xf32, #tpu.memory_space<vmem>>, %arg4: memref<32x72xbf16, #tpu.memory_space<vmem>>) attributes {dimension_semantics = [#tpu.dimension_semantics<parallel>], iteration_bounds = array<i64: 1>, scalar_prefetch = 0 : i64, scratch_operands = 0 : i64, tpu.core_type = #tpu.core_type<tc>, window_params = [{pipeline_mode = #tpu.pipeline_mode<synchronous>, transform_indices = @transform_0, window_bounds = array<i64: 32, 144>}, {transform_indices = @transform_1, window_bounds = array<i64: 144, 72>}, {pipeline_mode = #tpu.pipeline_mode<synchronous>, transform_indices = @transform_2, window_bounds = array<i64: 32, 1>}, {transform_indices = @transform_3, window_bounds = array<i64: 32, 72>}]} {
    %c0 = arith.constant 0 : index
    %c0_0 = arith.constant 0 : index
    %0 = vector.load %arg1[%c0, %c0_0] : memref<32x144xbf16, #tpu.memory_space<vmem>>, vector<32x144xbf16>
    %c0_1 = arith.constant 0 : index
    %c0_2 = arith.constant 0 : index
    %1 = vector.load %arg2[%c0_1, %c0_2] : memref<144x72xbf16, #tpu.memory_space<vmem>>, vector<144x72xbf16>
    %cst = arith.constant dense<0.000000e+00> : vector<32x72xf32>
    %2 = tpu.matmul %0, %1, %cst {dimension_numbers = #tpu.dot_dimension_numbers<[1], [0], [0], [1], [0, 0, 1, 1], [], []>} : vector<32x144xbf16>, vector<144x72xbf16>, vector<32x72xf32> -> vector<32x72xf32>
    %c0_3 = arith.constant 0 : index
    %c0_4 = arith.constant 0 : index
    %3 = vector.load %arg3[%c0_3, %c0_4] : memref<32x1xf32, #tpu.memory_space<vmem>>, vector<32x1xf32>
    %4 = vector.broadcast %3 : vector<32x1xf32> to vector<32x72xf32>
    %5 = arith.addf %2, %4 : vector<32x72xf32>
    %cst_5 = arith.constant 0.000000e+00 : f32
    %6 = vector.broadcast %cst_5 : f32 to vector<32x72xf32>
    %7 = arith.maximumf %5, %6 : vector<32x72xf32>
    %8 = arith.truncf %7 : vector<32x72xf32> to vector<32x72xbf16>
    %c0_6 = arith.constant 0 : index
    %c0_7 = arith.constant 0 : index
    %9 = vector.load %arg4[%c0_6, %c0_7] : memref<32x72xbf16, #tpu.memory_space<vmem>>, vector<32x72xbf16>
    tpu.vector_store %arg4[%c0_6, %c0_7], %8 {strides = array<i32>} : memref<32x72xbf16, #tpu.memory_space<vmem>>, vector<32x72xbf16>,
    return
  }
  func.func @transform_0(%arg0: i32) -> (i32, i32) {
    %c0_i32 = arith.constant 0 : i32
    %c0_i32_0 = arith.constant 0 : i32
    %c0_i32_1 = arith.constant 0 : i32
    return %c0_i32, %c0_i32_0 : i32, i32
  }
  func.func @transform_1(%arg0: i32) -> (i32, i32) {
    %c0_i32 = arith.constant 0 : i32
    %c0_i32_0 = arith.constant 0 : i32
    return %c0_i32, %arg0 : i32, i32
  }
  func.func @transform_2(%arg0: i32) -> (i32, i32) {
    %c0_i32 = arith.constant 0 : i32
    %c0_i32_0 = arith.constant 0 : i32
    %c0_i32_1 = arith.constant 0 : i32
    return %c0_i32, %c0_i32_0 : i32, i32
  }
  func.func @transform_3(%arg0: i32) -> (i32, i32) {
    %c0_i32 = arith.constant 0 : i32
    %c0_i32_0 = arith.constant 0 : i32
    return %c0_i32, %arg0 : i32, i32
  }
}

module attributes {stable_mosaic.version = 11 : i64} {
  func.func @_matmul_bias_act_kernel(%arg0: i32, %arg1: memref<32x288xbf16, #tpu.memory_space<vmem>>, %arg2: memref<288x32xbf16, #tpu.memory_space<vmem>>, %arg3: memref<32x1xf32, #tpu.memory_space<vmem>>, %arg4: memref<32x32xbf16, #tpu.memory_space<vmem>>) attributes {dimension_semantics = [#tpu.dimension_semantics<parallel>], iteration_bounds = array<i64: 1>, scalar_prefetch = 0 : i64, scratch_operands = 0 : i64, tpu.core_type = #tpu.core_type<tc>, window_params = [{pipeline_mode = #tpu.pipeline_mode<synchronous>, transform_indices = @transform_0, window_bounds = array<i64: 32, 288>}, {transform_indices = @transform_1, window_bounds = array<i64: 288, 32>}, {pipeline_mode = #tpu.pipeline_mode<synchronous>, transform_indices = @transform_2, window_bounds = array<i64: 32, 1>}, {transform_indices = @transform_3, window_bounds = array<i64: 32, 32>}]} {
    %c0 = arith.constant 0 : index
    %c0_0 = arith.constant 0 : index
    %0 = vector.load %arg1[%c0, %c0_0] : memref<32x288xbf16, #tpu.memory_space<vmem>>, vector<32x288xbf16>
    %c0_1 = arith.constant 0 : index
    %c0_2 = arith.constant 0 : index
    %1 = vector.load %arg2[%c0_1, %c0_2] : memref<288x32xbf16, #tpu.memory_space<vmem>>, vector<288x32xbf16>
    %cst = arith.constant dense<0.000000e+00> : vector<32x32xf32>
    %2 = tpu.matmul %0, %1, %cst {dimension_numbers = #tpu.dot_dimension_numbers<[1], [0], [0], [1], [0, 0, 1, 1], [], []>} : vector<32x288xbf16>, vector<288x32xbf16>, vector<32x32xf32> -> vector<32x32xf32>
    %c0_3 = arith.constant 0 : index
    %c0_4 = arith.constant 0 : index
    %3 = vector.load %arg3[%c0_3, %c0_4] : memref<32x1xf32, #tpu.memory_space<vmem>>, vector<32x1xf32>
    %4 = vector.broadcast %3 : vector<32x1xf32> to vector<32x32xf32>
    %5 = arith.addf %2, %4 : vector<32x32xf32>
    %cst_5 = arith.constant 0.000000e+00 : f32
    %6 = vector.broadcast %cst_5 : f32 to vector<32x32xf32>
    %7 = arith.maximumf %5, %6 : vector<32x32xf32>
    %8 = arith.truncf %7 : vector<32x32xf32> to vector<32x32xbf16>
    %c0_6 = arith.constant 0 : index
    %c0_7 = arith.constant 0 : index
    %9 = vector.load %arg4[%c0_6, %c0_7] : memref<32x32xbf16, #tpu.memory_space<vmem>>, vector<32x32xbf16>
    tpu.vector_store %arg4[%c0_6, %c0_7], %8 {strides = array<i32>} : memref<32x32xbf16, #tpu.memory_space<vmem>>, vector<32x32xbf16>,
    return
  }
  func.func @transform_0(%arg0: i32) -> (i32, i32) {
    %c0_i32 = arith.constant 0 : i32
    %c0_i32_0 = arith.constant 0 : i32
    %c0_i32_1 = arith.constant 0 : i32
    return %c0_i32, %c0_i32_0 : i32, i32
  }
  func.func @transform_1(%arg0: i32) -> (i32, i32) {
    %c0_i32 = arith.constant 0 : i32
    %c0_i32_0 = arith.constant 0 : i32
    return %c0_i32, %arg0 : i32, i32
  }
  func.func @transform_2(%arg0: i32) -> (i32, i32) {
    %c0_i32 = arith.constant 0 : i32
    %c0_i32_0 = arith.constant 0 : i32
    %c0_i32_1 = arith.constant 0 : i32
    return %c0_i32, %c0_i32_0 : i32, i32
  }
  func.func @transform_3(%arg0: i32) -> (i32, i32) {
    %c0_i32 = arith.constant 0 : i32
    %c0_i32_0 = arith.constant 0 : i32
    return %c0_i32, %arg0 : i32, i32
  }
}

module attributes {stable_mosaic.version = 11 : i64} {
  func.func @_matmul_bias_act_kernel(%arg0: i32, %arg1: memref<64x32xbf16, #tpu.memory_space<vmem>>, %arg2: memref<32x32xbf16, #tpu.memory_space<vmem>>, %arg3: memref<64x1xf32, #tpu.memory_space<vmem>>, %arg4: memref<64x32xbf16, #tpu.memory_space<vmem>>) attributes {dimension_semantics = [#tpu.dimension_semantics<parallel>], iteration_bounds = array<i64: 1>, scalar_prefetch = 0 : i64, scratch_operands = 0 : i64, tpu.core_type = #tpu.core_type<tc>, window_params = [{pipeline_mode = #tpu.pipeline_mode<synchronous>, transform_indices = @transform_0, window_bounds = array<i64: 64, 32>}, {transform_indices = @transform_1, window_bounds = array<i64: 32, 32>}, {pipeline_mode = #tpu.pipeline_mode<synchronous>, transform_indices = @transform_2, window_bounds = array<i64: 64, 1>}, {transform_indices = @transform_3, window_bounds = array<i64: 64, 32>}]} {
    %c0 = arith.constant 0 : index
    %c0_0 = arith.constant 0 : index
    %0 = vector.load %arg1[%c0, %c0_0] : memref<64x32xbf16, #tpu.memory_space<vmem>>, vector<64x32xbf16>
    %c0_1 = arith.constant 0 : index
    %c0_2 = arith.constant 0 : index
    %1 = vector.load %arg2[%c0_1, %c0_2] : memref<32x32xbf16, #tpu.memory_space<vmem>>, vector<32x32xbf16>
    %cst = arith.constant dense<0.000000e+00> : vector<64x32xf32>
    %2 = tpu.matmul %0, %1, %cst {dimension_numbers = #tpu.dot_dimension_numbers<[1], [0], [0], [1], [0, 0, 1, 1], [], []>} : vector<64x32xbf16>, vector<32x32xbf16>, vector<64x32xf32> -> vector<64x32xf32>
    %c0_3 = arith.constant 0 : index
    %c0_4 = arith.constant 0 : index
    %3 = vector.load %arg3[%c0_3, %c0_4] : memref<64x1xf32, #tpu.memory_space<vmem>>, vector<64x1xf32>
    %4 = vector.broadcast %3 : vector<64x1xf32> to vector<64x32xf32>
    %5 = arith.addf %2, %4 : vector<64x32xf32>
    %6 = arith.truncf %5 : vector<64x32xf32> to vector<64x32xbf16>
    %c0_5 = arith.constant 0 : index
    %c0_6 = arith.constant 0 : index
    %7 = vector.load %arg4[%c0_5, %c0_6] : memref<64x32xbf16, #tpu.memory_space<vmem>>, vector<64x32xbf16>
    tpu.vector_store %arg4[%c0_5, %c0_6], %6 {strides = array<i32>} : memref<64x32xbf16, #tpu.memory_space<vmem>>, vector<64x32xbf16>,
    return
  }
  func.func @transform_0(%arg0: i32) -> (i32, i32) {
    %c0_i32 = arith.constant 0 : i32
    %c0_i32_0 = arith.constant 0 : i32
    %c0_i32_1 = arith.constant 0 : i32
    return %c0_i32, %c0_i32_0 : i32, i32
  }
  func.func @transform_1(%arg0: i32) -> (i32, i32) {
    %c0_i32 = arith.constant 0 : i32
    %c0_i32_0 = arith.constant 0 : i32
    return %c0_i32, %arg0 : i32, i32
  }
  func.func @transform_2(%arg0: i32) -> (i32, i32) {
    %c0_i32 = arith.constant 0 : i32
    %c0_i32_0 = arith.constant 0 : i32
    %c0_i32_1 = arith.constant 0 : i32
    return %c0_i32, %c0_i32_0 : i32, i32
  }
  func.func @transform_3(%arg0: i32) -> (i32, i32) {
    %c0_i32 = arith.constant 0 : i32
    %c0_i32_0 = arith.constant 0 : i32
    return %c0_i32, %arg0 : i32, i32
  }
}

module attributes {stable_mosaic.version = 11 : i64} {
  func.func @_matmul_bias_act_kernel(%arg0: i32, %arg1: memref<16x288xbf16, #tpu.memory_space<vmem>>, %arg2: memref<288x72xbf16, #tpu.memory_space<vmem>>, %arg3: memref<16x1xf32, #tpu.memory_space<vmem>>, %arg4: memref<16x72xbf16, #tpu.memory_space<vmem>>) attributes {dimension_semantics = [#tpu.dimension_semantics<parallel>], iteration_bounds = array<i64: 1>, scalar_prefetch = 0 : i64, scratch_operands = 0 : i64, tpu.core_type = #tpu.core_type<tc>, window_params = [{pipeline_mode = #tpu.pipeline_mode<synchronous>, transform_indices = @transform_0, window_bounds = array<i64: 16, 288>}, {transform_indices = @transform_1, window_bounds = array<i64: 288, 72>}, {pipeline_mode = #tpu.pipeline_mode<synchronous>, transform_indices = @transform_2, window_bounds = array<i64: 16, 1>}, {transform_indices = @transform_3, window_bounds = array<i64: 16, 72>}]} {
    %c0 = arith.constant 0 : index
    %c0_0 = arith.constant 0 : index
    %0 = vector.load %arg1[%c0, %c0_0] : memref<16x288xbf16, #tpu.memory_space<vmem>>, vector<16x288xbf16>
    %c0_1 = arith.constant 0 : index
    %c0_2 = arith.constant 0 : index
    %1 = vector.load %arg2[%c0_1, %c0_2] : memref<288x72xbf16, #tpu.memory_space<vmem>>, vector<288x72xbf16>
    %cst = arith.constant dense<0.000000e+00> : vector<16x72xf32>
    %2 = tpu.matmul %0, %1, %cst {dimension_numbers = #tpu.dot_dimension_numbers<[1], [0], [0], [1], [0, 0, 1, 1], [], []>} : vector<16x288xbf16>, vector<288x72xbf16>, vector<16x72xf32> -> vector<16x72xf32>
    %c0_3 = arith.constant 0 : index
    %c0_4 = arith.constant 0 : index
    %3 = vector.load %arg3[%c0_3, %c0_4] : memref<16x1xf32, #tpu.memory_space<vmem>>, vector<16x1xf32>
    %4 = vector.broadcast %3 : vector<16x1xf32> to vector<16x72xf32>
    %5 = arith.addf %2, %4 : vector<16x72xf32>
    %cst_5 = arith.constant 0.000000e+00 : f32
    %6 = vector.broadcast %cst_5 : f32 to vector<16x72xf32>
    %7 = arith.maximumf %5, %6 : vector<16x72xf32>
    %8 = arith.truncf %7 : vector<16x72xf32> to vector<16x72xbf16>
    %c0_6 = arith.constant 0 : index
    %c0_7 = arith.constant 0 : index
    %9 = vector.load %arg4[%c0_6, %c0_7] : memref<16x72xbf16, #tpu.memory_space<vmem>>, vector<16x72xbf16>
    tpu.vector_store %arg4[%c0_6, %c0_7], %8 {strides = array<i32>} : memref<16x72xbf16, #tpu.memory_space<vmem>>, vector<16x72xbf16>,
    return
  }
  func.func @transform_0(%arg0: i32) -> (i32, i32) {
    %c0_i32 = arith.constant 0 : i32
    %c0_i32_0 = arith.constant 0 : i32
    %c0_i32_1 = arith.constant 0 : i32
    return %c0_i32, %c0_i32_0 : i32, i32
  }
  func.func @transform_1(%arg0: i32) -> (i32, i32) {
    %c0_i32 = arith.constant 0 : i32
    %c0_i32_0 = arith.constant 0 : i32
    return %c0_i32, %arg0 : i32, i32
  }
  func.func @transform_2(%arg0: i32) -> (i32, i32) {
    %c0_i32 = arith.constant 0 : i32
    %c0_i32_0 = arith.constant 0 : i32
    %c0_i32_1 = arith.constant 0 : i32
    return %c0_i32, %c0_i32_0 : i32, i32
  }
  func.func @transform_3(%arg0: i32) -> (i32, i32) {
    %c0_i32 = arith.constant 0 : i32
    %c0_i32_0 = arith.constant 0 : i32
    return %c0_i32, %arg0 : i32, i32
  }
}

module attributes {stable_mosaic.version = 11 : i64} {
  func.func @_matmul_bias_act_kernel(%arg0: i32, %arg1: memref<16x144xbf16, #tpu.memory_space<vmem>>, %arg2: memref<144x32xbf16, #tpu.memory_space<vmem>>, %arg3: memref<16x1xf32, #tpu.memory_space<vmem>>, %arg4: memref<16x32xbf16, #tpu.memory_space<vmem>>) attributes {dimension_semantics = [#tpu.dimension_semantics<parallel>], iteration_bounds = array<i64: 1>, scalar_prefetch = 0 : i64, scratch_operands = 0 : i64, tpu.core_type = #tpu.core_type<tc>, window_params = [{pipeline_mode = #tpu.pipeline_mode<synchronous>, transform_indices = @transform_0, window_bounds = array<i64: 16, 144>}, {transform_indices = @transform_1, window_bounds = array<i64: 144, 32>}, {pipeline_mode = #tpu.pipeline_mode<synchronous>, transform_indices = @transform_2, window_bounds = array<i64: 16, 1>}, {transform_indices = @transform_3, window_bounds = array<i64: 16, 32>}]} {
    %c0 = arith.constant 0 : index
    %c0_0 = arith.constant 0 : index
    %0 = vector.load %arg1[%c0, %c0_0] : memref<16x144xbf16, #tpu.memory_space<vmem>>, vector<16x144xbf16>
    %c0_1 = arith.constant 0 : index
    %c0_2 = arith.constant 0 : index
    %1 = vector.load %arg2[%c0_1, %c0_2] : memref<144x32xbf16, #tpu.memory_space<vmem>>, vector<144x32xbf16>
    %cst = arith.constant dense<0.000000e+00> : vector<16x32xf32>
    %2 = tpu.matmul %0, %1, %cst {dimension_numbers = #tpu.dot_dimension_numbers<[1], [0], [0], [1], [0, 0, 1, 1], [], []>} : vector<16x144xbf16>, vector<144x32xbf16>, vector<16x32xf32> -> vector<16x32xf32>
    %c0_3 = arith.constant 0 : index
    %c0_4 = arith.constant 0 : index
    %3 = vector.load %arg3[%c0_3, %c0_4] : memref<16x1xf32, #tpu.memory_space<vmem>>, vector<16x1xf32>
    %4 = vector.broadcast %3 : vector<16x1xf32> to vector<16x32xf32>
    %5 = arith.addf %2, %4 : vector<16x32xf32>
    %cst_5 = arith.constant 0.000000e+00 : f32
    %6 = vector.broadcast %cst_5 : f32 to vector<16x32xf32>
    %7 = arith.maximumf %5, %6 : vector<16x32xf32>
    %8 = arith.truncf %7 : vector<16x32xf32> to vector<16x32xbf16>
    %c0_6 = arith.constant 0 : index
    %c0_7 = arith.constant 0 : index
    %9 = vector.load %arg4[%c0_6, %c0_7] : memref<16x32xbf16, #tpu.memory_space<vmem>>, vector<16x32xbf16>
    tpu.vector_store %arg4[%c0_6, %c0_7], %8 {strides = array<i32>} : memref<16x32xbf16, #tpu.memory_space<vmem>>, vector<16x32xbf16>,
    return
  }
  func.func @transform_0(%arg0: i32) -> (i32, i32) {
    %c0_i32 = arith.constant 0 : i32
    %c0_i32_0 = arith.constant 0 : i32
    %c0_i32_1 = arith.constant 0 : i32
    return %c0_i32, %c0_i32_0 : i32, i32
  }
  func.func @transform_1(%arg0: i32) -> (i32, i32) {
    %c0_i32 = arith.constant 0 : i32
    %c0_i32_0 = arith.constant 0 : i32
    return %c0_i32, %arg0 : i32, i32
  }
  func.func @transform_2(%arg0: i32) -> (i32, i32) {
    %c0_i32 = arith.constant 0 : i32
    %c0_i32_0 = arith.constant 0 : i32
    %c0_i32_1 = arith.constant 0 : i32
    return %c0_i32, %c0_i32_0 : i32, i32
  }
  func.func @transform_3(%arg0: i32) -> (i32, i32) {
    %c0_i32 = arith.constant 0 : i32
    %c0_i32_0 = arith.constant 0 : i32
    return %c0_i32, %arg0 : i32, i32
  }
}

module attributes {stable_mosaic.version = 11 : i64} {
  func.func @_matmul_bias_act_kernel(%arg0: i32, %arg1: memref<32x16xbf16, #tpu.memory_space<vmem>>, %arg2: memref<16x32xbf16, #tpu.memory_space<vmem>>, %arg3: memref<32x1xf32, #tpu.memory_space<vmem>>, %arg4: memref<32x32xbf16, #tpu.memory_space<vmem>>) attributes {dimension_semantics = [#tpu.dimension_semantics<parallel>], iteration_bounds = array<i64: 1>, scalar_prefetch = 0 : i64, scratch_operands = 0 : i64, tpu.core_type = #tpu.core_type<tc>, window_params = [{pipeline_mode = #tpu.pipeline_mode<synchronous>, transform_indices = @transform_0, window_bounds = array<i64: 32, 16>}, {transform_indices = @transform_1, window_bounds = array<i64: 16, 32>}, {pipeline_mode = #tpu.pipeline_mode<synchronous>, transform_indices = @transform_2, window_bounds = array<i64: 32, 1>}, {transform_indices = @transform_3, window_bounds = array<i64: 32, 32>}]} {
    %c0 = arith.constant 0 : index
    %c0_0 = arith.constant 0 : index
    %0 = vector.load %arg1[%c0, %c0_0] : memref<32x16xbf16, #tpu.memory_space<vmem>>, vector<32x16xbf16>
    %c0_1 = arith.constant 0 : index
    %c0_2 = arith.constant 0 : index
    %1 = vector.load %arg2[%c0_1, %c0_2] : memref<16x32xbf16, #tpu.memory_space<vmem>>, vector<16x32xbf16>
    %cst = arith.constant dense<0.000000e+00> : vector<32x32xf32>
    %2 = tpu.matmul %0, %1, %cst {dimension_numbers = #tpu.dot_dimension_numbers<[1], [0], [0], [1], [0, 0, 1, 1], [], []>} : vector<32x16xbf16>, vector<16x32xbf16>, vector<32x32xf32> -> vector<32x32xf32>
    %c0_3 = arith.constant 0 : index
    %c0_4 = arith.constant 0 : index
    %3 = vector.load %arg3[%c0_3, %c0_4] : memref<32x1xf32, #tpu.memory_space<vmem>>, vector<32x1xf32>
    %4 = vector.broadcast %3 : vector<32x1xf32> to vector<32x32xf32>
    %5 = arith.addf %2, %4 : vector<32x32xf32>
    %6 = arith.truncf %5 : vector<32x32xf32> to vector<32x32xbf16>
    %c0_5 = arith.constant 0 : index
    %c0_6 = arith.constant 0 : index
    %7 = vector.load %arg4[%c0_5, %c0_6] : memref<32x32xbf16, #tpu.memory_space<vmem>>, vector<32x32xbf16>
    tpu.vector_store %arg4[%c0_5, %c0_6], %6 {strides = array<i32>} : memref<32x32xbf16, #tpu.memory_space<vmem>>, vector<32x32xbf16>,
    return
  }
  func.func @transform_0(%arg0: i32) -> (i32, i32) {
    %c0_i32 = arith.constant 0 : i32
    %c0_i32_0 = arith.constant 0 : i32
    %c0_i32_1 = arith.constant 0 : i32
    return %c0_i32, %c0_i32_0 : i32, i32
  }
  func.func @transform_1(%arg0: i32) -> (i32, i32) {
    %c0_i32 = arith.constant 0 : i32
    %c0_i32_0 = arith.constant 0 : i32
    return %c0_i32, %arg0 : i32, i32
  }
  func.func @transform_2(%arg0: i32) -> (i32, i32) {
    %c0_i32 = arith.constant 0 : i32
    %c0_i32_0 = arith.constant 0 : i32
    %c0_i32_1 = arith.constant 0 : i32
    return %c0_i32, %c0_i32_0 : i32, i32
  }
  func.func @transform_3(%arg0: i32) -> (i32, i32) {
    %c0_i32 = arith.constant 0 : i32
    %c0_i32_0 = arith.constant 0 : i32
    return %c0_i32, %arg0 : i32, i32
  }
}

module attributes {stable_mosaic.version = 11 : i64} {
  func.func @_matmul_bias_act_kernel(%arg0: i32, %arg1: memref<8x144xbf16, #tpu.memory_space<vmem>>, %arg2: memref<144x72xbf16, #tpu.memory_space<vmem>>, %arg3: memref<8x1xf32, #tpu.memory_space<vmem>>, %arg4: memref<8x72xbf16, #tpu.memory_space<vmem>>) attributes {dimension_semantics = [#tpu.dimension_semantics<parallel>], iteration_bounds = array<i64: 1>, scalar_prefetch = 0 : i64, scratch_operands = 0 : i64, tpu.core_type = #tpu.core_type<tc>, window_params = [{pipeline_mode = #tpu.pipeline_mode<synchronous>, transform_indices = @transform_0, window_bounds = array<i64: 8, 144>}, {transform_indices = @transform_1, window_bounds = array<i64: 144, 72>}, {pipeline_mode = #tpu.pipeline_mode<synchronous>, transform_indices = @transform_2, window_bounds = array<i64: 8, 1>}, {transform_indices = @transform_3, window_bounds = array<i64: 8, 72>}]} {
    %c0 = arith.constant 0 : index
    %c0_0 = arith.constant 0 : index
    %0 = vector.load %arg1[%c0, %c0_0] : memref<8x144xbf16, #tpu.memory_space<vmem>>, vector<8x144xbf16>
    %c0_1 = arith.constant 0 : index
    %c0_2 = arith.constant 0 : index
    %1 = vector.load %arg2[%c0_1, %c0_2] : memref<144x72xbf16, #tpu.memory_space<vmem>>, vector<144x72xbf16>
    %cst = arith.constant dense<0.000000e+00> : vector<8x72xf32>
    %2 = tpu.matmul %0, %1, %cst {dimension_numbers = #tpu.dot_dimension_numbers<[1], [0], [0], [1], [0, 0, 1, 1], [], []>} : vector<8x144xbf16>, vector<144x72xbf16>, vector<8x72xf32> -> vector<8x72xf32>
    %c0_3 = arith.constant 0 : index
    %c0_4 = arith.constant 0 : index
    %3 = vector.load %arg3[%c0_3, %c0_4] : memref<8x1xf32, #tpu.memory_space<vmem>>, vector<8x1xf32>
    %4 = vector.broadcast %3 : vector<8x1xf32> to vector<8x72xf32>
    %5 = arith.addf %2, %4 : vector<8x72xf32>
    %cst_5 = arith.constant 0.000000e+00 : f32
    %6 = vector.broadcast %cst_5 : f32 to vector<8x72xf32>
    %7 = arith.maximumf %5, %6 : vector<8x72xf32>
    %8 = arith.truncf %7 : vector<8x72xf32> to vector<8x72xbf16>
    %c0_6 = arith.constant 0 : index
    %c0_7 = arith.constant 0 : index
    %9 = vector.load %arg4[%c0_6, %c0_7] : memref<8x72xbf16, #tpu.memory_space<vmem>>, vector<8x72xbf16>
    tpu.vector_store %arg4[%c0_6, %c0_7], %8 {strides = array<i32>} : memref<8x72xbf16, #tpu.memory_space<vmem>>, vector<8x72xbf16>,
    return
  }
  func.func @transform_0(%arg0: i32) -> (i32, i32) {
    %c0_i32 = arith.constant 0 : i32
    %c0_i32_0 = arith.constant 0 : i32
    %c0_i32_1 = arith.constant 0 : i32
    return %c0_i32, %c0_i32_0 : i32, i32
  }
  func.func @transform_1(%arg0: i32) -> (i32, i32) {
    %c0_i32 = arith.constant 0 : i32
    %c0_i32_0 = arith.constant 0 : i32
    return %c0_i32, %arg0 : i32, i32
  }
  func.func @transform_2(%arg0: i32) -> (i32, i32) {
    %c0_i32 = arith.constant 0 : i32
    %c0_i32_0 = arith.constant 0 : i32
    %c0_i32_1 = arith.constant 0 : i32
    return %c0_i32, %c0_i32_0 : i32, i32
  }
  func.func @transform_3(%arg0: i32) -> (i32, i32) {
    %c0_i32 = arith.constant 0 : i32
    %c0_i32_0 = arith.constant 0 : i32
    return %c0_i32, %arg0 : i32, i32
  }
}

module attributes {stable_mosaic.version = 11 : i64} {
  func.func @_matmul_bias_act_kernel(%arg0: i32, %arg1: memref<8x72xbf16, #tpu.memory_space<vmem>>, %arg2: memref<72x32xbf16, #tpu.memory_space<vmem>>, %arg3: memref<8x1xf32, #tpu.memory_space<vmem>>, %arg4: memref<8x32xbf16, #tpu.memory_space<vmem>>) attributes {dimension_semantics = [#tpu.dimension_semantics<parallel>], iteration_bounds = array<i64: 1>, scalar_prefetch = 0 : i64, scratch_operands = 0 : i64, tpu.core_type = #tpu.core_type<tc>, window_params = [{pipeline_mode = #tpu.pipeline_mode<synchronous>, transform_indices = @transform_0, window_bounds = array<i64: 8, 72>}, {transform_indices = @transform_1, window_bounds = array<i64: 72, 32>}, {pipeline_mode = #tpu.pipeline_mode<synchronous>, transform_indices = @transform_2, window_bounds = array<i64: 8, 1>}, {transform_indices = @transform_3, window_bounds = array<i64: 8, 32>}]} {
    %c0 = arith.constant 0 : index
    %c0_0 = arith.constant 0 : index
    %0 = vector.load %arg1[%c0, %c0_0] : memref<8x72xbf16, #tpu.memory_space<vmem>>, vector<8x72xbf16>
    %c0_1 = arith.constant 0 : index
    %c0_2 = arith.constant 0 : index
    %1 = vector.load %arg2[%c0_1, %c0_2] : memref<72x32xbf16, #tpu.memory_space<vmem>>, vector<72x32xbf16>
    %cst = arith.constant dense<0.000000e+00> : vector<8x32xf32>
    %2 = tpu.matmul %0, %1, %cst {dimension_numbers = #tpu.dot_dimension_numbers<[1], [0], [0], [1], [0, 0, 1, 1], [], []>} : vector<8x72xbf16>, vector<72x32xbf16>, vector<8x32xf32> -> vector<8x32xf32>
    %c0_3 = arith.constant 0 : index
    %c0_4 = arith.constant 0 : index
    %3 = vector.load %arg3[%c0_3, %c0_4] : memref<8x1xf32, #tpu.memory_space<vmem>>, vector<8x1xf32>
    %4 = vector.broadcast %3 : vector<8x1xf32> to vector<8x32xf32>
    %5 = arith.addf %2, %4 : vector<8x32xf32>
    %cst_5 = arith.constant 0.000000e+00 : f32
    %6 = vector.broadcast %cst_5 : f32 to vector<8x32xf32>
    %7 = arith.maximumf %5, %6 : vector<8x32xf32>
    %8 = arith.truncf %7 : vector<8x32xf32> to vector<8x32xbf16>
    %c0_6 = arith.constant 0 : index
    %c0_7 = arith.constant 0 : index
    %9 = vector.load %arg4[%c0_6, %c0_7] : memref<8x32xbf16, #tpu.memory_space<vmem>>, vector<8x32xbf16>
    tpu.vector_store %arg4[%c0_6, %c0_7], %8 {strides = array<i32>} : memref<8x32xbf16, #tpu.memory_space<vmem>>, vector<8x32xbf16>,
    return
  }
  func.func @transform_0(%arg0: i32) -> (i32, i32) {
    %c0_i32 = arith.constant 0 : i32
    %c0_i32_0 = arith.constant 0 : i32
    %c0_i32_1 = arith.constant 0 : i32
    return %c0_i32, %c0_i32_0 : i32, i32
  }
  func.func @transform_1(%arg0: i32) -> (i32, i32) {
    %c0_i32 = arith.constant 0 : i32
    %c0_i32_0 = arith.constant 0 : i32
    return %c0_i32, %arg0 : i32, i32
  }
  func.func @transform_2(%arg0: i32) -> (i32, i32) {
    %c0_i32 = arith.constant 0 : i32
    %c0_i32_0 = arith.constant 0 : i32
    %c0_i32_1 = arith.constant 0 : i32
    return %c0_i32, %c0_i32_0 : i32, i32
  }
  func.func @transform_3(%arg0: i32) -> (i32, i32) {
    %c0_i32 = arith.constant 0 : i32
    %c0_i32_0 = arith.constant 0 : i32
    return %c0_i32, %arg0 : i32, i32
  }
}

module attributes {stable_mosaic.version = 11 : i64} {
  func.func @_decoder_head_kernel(%arg0: i32, %arg1: memref<3x8xbf16, #tpu.memory_space<vmem>>, %arg2: memref<3x1xf32, #tpu.memory_space<vmem>>, %arg3: memref<27x3xbf16, #tpu.memory_space<vmem>>, %arg4: memref<27x1xf32, #tpu.memory_space<vmem>>, %arg5: memref<8x32xbf16, #tpu.memory_space<vmem>>, %arg6: memref<27x32xbf16, #tpu.memory_space<vmem>>) attributes {dimension_semantics = [#tpu.dimension_semantics<parallel>], iteration_bounds = array<i64: 1>, scalar_prefetch = 0 : i64, scratch_operands = 0 : i64, tpu.core_type = #tpu.core_type<tc>, window_params = [{pipeline_mode = #tpu.pipeline_mode<synchronous>, transform_indices = @transform_0, window_bounds = array<i64: 3, 8>}, {pipeline_mode = #tpu.pipeline_mode<synchronous>, transform_indices = @transform_1, window_bounds = array<i64: 3, 1>}, {pipeline_mode = #tpu.pipeline_mode<synchronous>, transform_indices = @transform_2, window_bounds = array<i64: 27, 3>}, {pipeline_mode = #tpu.pipeline_mode<synchronous>, transform_indices = @transform_3, window_bounds = array<i64: 27, 1>}, {transform_indices = @transform_4, window_bounds = array<i64: 8, 32>}, {transform_indices = @transform_5, window_bounds = array<i64: 27, 32>}]} {
    %c0 = arith.constant 0 : index
    %c0_0 = arith.constant 0 : index
    %0 = vector.load %arg1[%c0, %c0_0] : memref<3x8xbf16, #tpu.memory_space<vmem>>, vector<3x8xbf16>
    %c0_1 = arith.constant 0 : index
    %c0_2 = arith.constant 0 : index
    %1 = vector.load %arg5[%c0_1, %c0_2] : memref<8x32xbf16, #tpu.memory_space<vmem>>, vector<8x32xbf16>
    %cst = arith.constant dense<0.000000e+00> : vector<3x32xf32>
    %2 = tpu.matmul %0, %1, %cst {dimension_numbers = #tpu.dot_dimension_numbers<[1], [0], [0], [1], [0, 0, 1, 1], [], []>} : vector<3x8xbf16>, vector<8x32xbf16>, vector<3x32xf32> -> vector<3x32xf32>
    %c0_3 = arith.constant 0 : index
    %c0_4 = arith.constant 0 : index
    %3 = vector.load %arg2[%c0_3, %c0_4] : memref<3x1xf32, #tpu.memory_space<vmem>>, vector<3x1xf32>
    %4 = vector.broadcast %3 : vector<3x1xf32> to vector<3x32xf32>
    %5 = arith.addf %2, %4 : vector<3x32xf32>
    %6 = arith.truncf %5 : vector<3x32xf32> to vector<3x32xbf16>
    %c0_5 = arith.constant 0 : index
    %c0_6 = arith.constant 0 : index
    %7 = vector.load %arg3[%c0_5, %c0_6] : memref<27x3xbf16, #tpu.memory_space<vmem>>, vector<27x3xbf16>
    %cst_7 = arith.constant dense<0.000000e+00> : vector<27x32xf32>
    %8 = tpu.matmul %7, %6, %cst_7 {dimension_numbers = #tpu.dot_dimension_numbers<[1], [0], [0], [1], [0, 0, 1, 1], [], []>} : vector<27x3xbf16>, vector<3x32xbf16>, vector<27x32xf32> -> vector<27x32xf32>
    %c0_8 = arith.constant 0 : index
    %c0_9 = arith.constant 0 : index
    %9 = vector.load %arg4[%c0_8, %c0_9] : memref<27x1xf32, #tpu.memory_space<vmem>>, vector<27x1xf32>
    %10 = vector.broadcast %9 : vector<27x1xf32> to vector<27x32xf32>
    %11 = arith.addf %8, %10 : vector<27x32xf32>
    %12 = math.tanh %11 : vector<27x32xf32>
    %cst_10 = arith.constant 1.000000e+00 : f32
    %13 = vector.broadcast %cst_10 : f32 to vector<27x32xf32>
    %14 = arith.addf %12, %13 : vector<27x32xf32>
    %cst_11 = arith.constant 5.000000e-01 : f32
    %15 = vector.broadcast %cst_11 : f32 to vector<27x32xf32>
    %16 = arith.mulf %15, %14 : vector<27x32xf32>
    %17 = arith.truncf %16 : vector<27x32xf32> to vector<27x32xbf16>
    %c0_12 = arith.constant 0 : index
    %c0_13 = arith.constant 0 : index
    %18 = vector.load %arg6[%c0_12, %c0_13] : memref<27x32xbf16, #tpu.memory_space<vmem>>, vector<27x32xbf16>
    tpu.vector_store %arg6[%c0_12, %c0_13], %17 {strides = array<i32>} : memref<27x32xbf16, #tpu.memory_space<vmem>>, vector<27x32xbf16>,
    return
  }
  func.func @transform_0(%arg0: i32) -> (i32, i32) {
    %c0_i32 = arith.constant 0 : i32
    %c0_i32_0 = arith.constant 0 : i32
    %c0_i32_1 = arith.constant 0 : i32
    return %c0_i32, %c0_i32_0 : i32, i32
  }
  func.func @transform_1(%arg0: i32) -> (i32, i32) {
    %c0_i32 = arith.constant 0 : i32
    %c0_i32_0 = arith.constant 0 : i32
    %c0_i32_1 = arith.constant 0 : i32
    return %c0_i32, %c0_i32_0 : i32, i32
  }
  func.func @transform_2(%arg0: i32) -> (i32, i32) {
    %c0_i32 = arith.constant 0 : i32
    %c0_i32_0 = arith.constant 0 : i32
    %c0_i32_1 = arith.constant 0 : i32
    return %c0_i32, %c0_i32_0 : i32, i32
  }
  func.func @transform_3(%arg0: i32) -> (i32, i32) {
    %c0_i32 = arith.constant 0 : i32
    %c0_i32_0 = arith.constant 0 : i32
    %c0_i32_1 = arith.constant 0 : i32
    return %c0_i32, %c0_i32_0 : i32, i32
  }
  func.func @transform_4(%arg0: i32) -> (i32, i32) {
    %c0_i32 = arith.constant 0 : i32
    %c0_i32_0 = arith.constant 0 : i32
    return %c0_i32, %arg0 : i32, i32
  }
  func.func @transform_5(%arg0: i32) -> (i32, i32) {
    %c0_i32 = arith.constant 0 : i32
    %c0_i32_0 = arith.constant 0 : i32
    return %c0_i32, %arg0 : i32, i32
  }
}

</mosaic_0001>

<llo_original>
// kernel: unet_forward.15
$region0: #{unet_forward.15}
  #allocation0 [shape = 'u32[]', space=smem, size = 0x4, offset = 0x4, fixed_abs, tag = 'smem constant byte address 0x4 - core index']
  #allocation1 [shape = 'u32[72,128]{1,0:T(1,128)}', space=vmem, size = 0x9000, scoped, tag = 'internal scratch']
  %s0 = inlined_call_operand.vmem [shape: bf16[8,27], index: 0, kind: input, shape index: {}]
  %s1 = inlined_call_operand.vmem [shape: bf16[27,3528], index: 1, kind: input, shape index: {}]
  %s2 = inlined_call_operand.vmem [shape: f32[8,1], index: 2, kind: input, shape index: {}]
  %s3 = inlined_call_operand.vmem [shape: bf16[8,3528], index: 3, kind: output, shape index: {}]
  %s4 = sld [smem:[#allocation0]]
  $region173: #{unet_forward.15} parent=0
    _
  %s6 = ssub.s32 1, %s4
  %s7 = scalar_select 0, %s6, %s4
  $region1: #{unet_forward.15} parent=0
    #allocation2 [shape = 'u8[131072]{0}', space=vmem, size = 0x20000, scoped, tag = 'input window, operand 1']
    #allocation3 [shape = 'u8[32768]{0}', space=vmem, size = 0x8000, scoped, tag = 'output window, operand 0']
    loop: start=0, step=1, limit=6
    $region2: #{unet_forward.15} parent=1 // loop_pre_header
      _
    $region3: #{unet_forward.15} parent=1 // loop_header
      %s9 = sphi 0, %s13
      %p10 = scmp.ge.s32.totalorder %s9, 6
      %s17 = sphi 0, %s17
      %s19 = sphi 0, %s17
      %s20 = sphi 0, %s19
      %s34 = sphi 0, %s20
      %s40 = sphi 0, %s42
      %s43 = sphi 0, %s40
      %s44 = sphi 0, %s43
      %s60 = sphi 0, %s44
      %s64 = sphi 0, %s64
      %s66 = sphi 0, %s64
      %s67 = sphi 0, %s66
      %s81 = sphi 0, %s67
      %s87 = sphi 0, %s89
      %s90 = sphi 0, %s87
      %s91 = sphi 0, %s90
      %s107 = sphi 0, %s91
    $region4: #{unet_forward.15} parent=1 // loop_header_branch
      %12 = sbr.rel (%p10) target = $region8
    $region5: #{unet_forward.15} parent=1 // loop_body
      %s14 = ssub.s32 %s9, 1
      %s15 = ssub.s32 %s9, 2
      %s16 = sadd.s32 %s9, 1
      %s18 = sadd.s32 %s17, 1
      %p21 = scmp.eq.s32.totalorder %s9, 3
      %p22 = scmp.ne.s32.totalorder %s17, %s19
      %p23 = scmp.eq.s32.totalorder %s9, 0
      %p24 = por %p22, %p23
      %p25 = scmp.ne.s32.totalorder %s17, %s19
      %p26 = scmp.eq.s32.totalorder %s14, 3
      %p27 = por %p25, %p26
      %p28 = scmp.ne.s32.totalorder %s19, %s20
      %p29 = scmp.eq.s32.totalorder %s14, 0
      %p30 = por %p28, %p29
      %p31 = scmp.ne.s32.totalorder %s19, %s20
      %p32 = scmp.eq.s32.totalorder %s15, 3
      %p33 = por %p31, %p32
      %p35 = scmp.ne.s32.totalorder %s20, %s34
      %p36 = scmp.eq.s32.totalorder %s15, 0
      %p37 = por %p35, %p36
      %s38 = ssub.s32 %s9, %s16
      %p39 = scmp.eq.s32.totalorder %s38, 0
      %s41 = sadd.s32 %s40, 1
      %s42 = scalar_select %p39, %s40, %s41
      %p45 = pneg %p39
      %p46 = scmp.eq.s32.totalorder %s9, 3
      %p47 = por %p45, %p46
      %p48 = scmp.ne.s32.totalorder %s40, %s43
      %p49 = scmp.eq.s32.totalorder %s9, 0
      %p50 = por %p48, %p49
      %p51 = scmp.ne.s32.totalorder %s40, %s43
      %p52 = scmp.eq.s32.totalorder %s14, 3
      %p53 = por %p51, %p52
      %p54 = scmp.ne.s32.totalorder %s43, %s44
      %p55 = scmp.eq.s32.totalorder %s14, 0
      %p56 = por %p54, %p55
      %p57 = scmp.ne.s32.totalorder %s43, %s44
      %p58 = scmp.eq.s32.totalorder %s15, 3
      %p59 = por %p57, %p58
      %p61 = scmp.ne.s32.totalorder %s44, %s60
      %p62 = scmp.eq.s32.totalorder %s15, 0
      %p63 = por %p61, %p62
      %s65 = sadd.s32 %s64, 1
      %p68 = scmp.eq.s32.totalorder %s9, 3
      %p69 = scmp.ne.s32.totalorder %s64, %s66
      %p70 = scmp.eq.s32.totalorder %s9, 0
      %p71 = por %p69, %p70
      %p72 = scmp.ne.s32.totalorder %s64, %s66
      %p73 = scmp.eq.s32.totalorder %s14, 3
      %p74 = por %p72, %p73
      %p75 = scmp.ne.s32.totalorder %s66, %s67
      %p76 = scmp.eq.s32.totalorder %s14, 0
      %p77 = por %p75, %p76
      %p78 = scmp.ne.s32.totalorder %s66, %s67
      %p79 = scmp.eq.s32.totalorder %s15, 3
      %p80 = por %p78, %p79
      %p82 = scmp.ne.s32.totalorder %s67, %s81
      %p83 = scmp.eq.s32.totalorder %s15, 0
      %p84 = por %p82, %p83
      %s85 = ssub.s32 %s9, %s16
      %p86 = scmp.eq.s32.totalorder %s85, 0
      %s88 = sadd.s32 %s87, 1
      %s89 = scalar_select %p86, %s87, %s88
      %p92 = pneg %p86
      %p93 = scmp.eq.s32.totalorder %s9, 3
      %p94 = por %p92, %p93
      %p95 = scmp.ne.s32.totalorder %s87, %s90
      %p96 = scmp.eq.s32.totalorder %s9, 0
      %p97 = por %p95, %p96
      %p98 = scmp.ne.s32.totalorder %s87, %s90
      %p99 = scmp.eq.s32.totalorder %s14, 3
      %p100 = por %p98, %p99
      %p101 = scmp.ne.s32.totalorder %s90, %s91
      %p102 = scmp.eq.s32.totalorder %s14, 0
      %p103 = por %p101, %p102
      %p104 = scmp.ne.s32.totalorder %s90, %s91
      %p105 = scmp.eq.s32.totalorder %s15, 3
      %p106 = por %p104, %p105
      %p108 = scmp.ne.s32.totalorder %s91, %s107
      %p109 = scmp.eq.s32.totalorder %s15, 0
      %p110 = por %p108, %p109
      %p111 = scmp.le.s32.totalorder 1, %s9
      %p112 = scmp.lt.s32.totalorder %s9, 5
      %p113 = pnand %p111, %p112
      %p114 = pneg %p113
      // Predicated region
      $region9: #{unet_forward.15} parent=5 // pred_check
        _
      $region10: #{unet_forward.15} parent=5 // pred_check_branch
        %116 = sbr.rel (%p113) target = $region12
      $region11: #{unet_forward.15} parent=5 // pred_region
        %s117 = ssub.s32 %s9, 1
        // Predicated region
        $region13: #{unet_forward.15} parent=11 // pred_check
          %p118 = pneg %p30
        $region14: #{unet_forward.15} parent=11 // pred_check_branch
          %120 = sbr.rel (%p118) target = $region16
        $region15: #{unet_forward.15} parent=11 // pred_region
          _
        $region16: #{unet_forward.15} parent=11 // pred_fallthru
          _
        // Predicated region
        $region17: #{unet_forward.15} parent=11 // pred_check
          %p121 = pneg %p77
        $region18: #{unet_forward.15} parent=11 // pred_check_branch
          %123 = sbr.rel (%p121) target = $region20
        $region19: #{unet_forward.15} parent=11 // pred_region
          _
        $region20: #{unet_forward.15} parent=11 // pred_fallthru
          _
      $region12: #{unet_forward.15} parent=5 // pred_fallthru
        _
      %p124 = scmp.lt.s32.totalorder %s9, 4
      // Predicated region
      $region21: #{unet_forward.15} parent=5 // pred_check
        %p125 = pneg %p124
      $region22: #{unet_forward.15} parent=5 // pred_check_branch
        %127 = sbr.rel (%p125) target = $region24
      $region23: #{unet_forward.15} parent=5 // pred_region
        // Predicated region
        $region25: #{unet_forward.15} parent=23 // pred_check
          %p128 = pneg %p50
        $region26: #{unet_forward.15} parent=23 // pred_check_branch
          %130 = sbr.rel (%p128) target = $region28
        $region27: #{unet_forward.15} parent=23 // pred_region
          %s131 = sand.u32 %s40, 1
          %s132 = sand.u32 %s40, 1
          %s133 = smul.addr %s132, 128
          %s134 = scalar_lea.vmem [#allocation2], %s133
          %s135 = smul.u32 8, %s9
          %s136 = ssub.s32 28, %s135
          %p137 = scmp.lt.s32.totalorder %s136, 8
          %s138 = scalar_select %p137, %s136, 8
          %s139 = smul.u32 16, %s138
          %p140 = scmp.ne.s32.totalorder 0, %s139
          %s141 = smul.addr %s135, 4
          %s142 = scalar_lea.vmem %s1, %s141
          %s143 = smul.u32 %s138, 4
          // Predicated region
          $region29: #{unet_forward.15} parent=27 // pred_check
            %p144 = pneg %p140
          $region30: #{unet_forward.15} parent=27 // pred_check_branch
            %146 = sbr.rel (%p144) target = $region32
          $region31: #{unet_forward.15} parent=27 // pred_region
            %p147 = scmp.lt.u32.totalorder %s143, 8
            %p148 = pneg %p147
            // Predicated region
            $region33: #{unet_forward.15} parent=31 // pred_check
              _
            $region34: #{unet_forward.15} parent=31 // pred_check_branch
              %150 = sbr.rel (%p147) target = $region36
            $region35: #{unet_forward.15} parent=31 // pred_region
              %s172 = sand.u32 %s143, 7
              %p173 = scmp.eq.s32.totalorder %s172, 0
              // Predicated region
              $region48: #{unet_forward.15} parent=35 // pred_check
                %p174 = pneg %p173
              $region49: #{unet_forward.15} parent=35 // pred_check_branch
                %176 = sbr.rel (%p174) target = $region51
              $region50: #{unet_forward.15} parent=35 // pred_region
                %s177 = sshrl.u32 %s143, 3
                %s178 = sshrl.u32 %s177, 3
                // While loop
                $region52: #{unet_forward.15} parent=50 // loop_pre_header
                  _
                $region53: #{unet_forward.15} parent=50 // loop_header
                  %s180 = sphi 0, %s182
                  %p181 = scmp.ge.s32.totalorder %s180, %s178
                  %s185 = sphi 0, %s254
                  %s186 = sphi %s142, %s257
                  %s187 = sphi %s134, %s258
                $region54: #{unet_forward.15} parent=50 // loop_header_branch
                  %184 = sbr.rel (%p181) target = $region58
                $region55: #{unet_forward.15} parent=50 // loop_body
                  %v188 = vld [vmem:[%s186] sm:$0xff]
                  %189 = vst [vmem:[%s187] sm:$0xff] %v188
                  %v190 = vld [vmem:[%s186 + $0x8] sm:$0xff]
                  %191 = vst [vmem:[%s187 + $0x8] sm:$0xff] %v190
                  %v192 = vld [vmem:[%s186 + $0x10] sm:$0xff]
                  %193 = vst [vmem:[%s187 + $0x10] sm:$0xff] %v192
                  %v194 = vld [vmem:[%s186 + $0x18] sm:$0xff]
                  %195 = vst [vmem:[%s187 + $0x18] sm:$0xff] %v194
                  %v196 = vld [vmem:[%s186 + $0x20] sm:$0xff]
                  %197 = vst [vmem:[%s187 + $0x20] sm:$0xff] %v196
                  %v198 = vld [vmem:[%s186 + $0x28] sm:$0xff]
                  %199 = vst [vmem:[%s187 + $0x28] sm:$0xff] %v198
                  %v200 = vld [vmem:[%s186 + $0x30] sm:$0xff]
                  %201 = vst [vmem:[%s187 + $0x30] sm:$0xff] %v200
                  %v202 = vld [vmem:[%s186 + $0x38] sm:$0xff]
                  %203 = vst [vmem:[%s187 + $0x38] sm:$0xff] %v202
                  %v204 = vld [vmem:[%s186 + $0x70] sm:$0xff]
                  %205 = vst [vmem:[%s187 + $0x20] sm:$0xff] %v204
                  %v206 = vld [vmem:[%s186 + $0x78] sm:$0xff]
                  %207 = vst [vmem:[%s187 + $0x28] sm:$0xff] %v206
                  %v208 = vld [vmem:[%s186 + $0x80] sm:$0xff]
                  %209 = vst [vmem:[%s187 + $0x30] sm:$0xff] %v208
                  %v210 = vld [vmem:[%s186 + $0x88] sm:$0xff]
                  %211 = vst [vmem:[%s187 + $0x38] sm:$0xff] %v210
                  %v212 = vld [vmem:[%s186 + $0x90] sm:$0xff]
                  %213 = vst [vmem:[%s187 + $0x40] sm:$0xff] %v212
                  %v214 = vld [vmem:[%s186 + $0x98] sm:$0xff]
                  %215 = vst [vmem:[%s187 + $0x48] sm:$0xff] %v214
                  %v216 = vld [vmem:[%s186 + $0xa0] sm:$0xff]
                  %217 = vst [vmem:[%s187 + $0x50] sm:$0xff] %v216
                  %v218 = vld [vmem:[%s186 + $0xa8] sm:$0xff]
                  %219 = vst [vmem:[%s187 + $0x58] sm:$0xff] %v218
                  %v220 = vld [vmem:[%s186 + $0xe0] sm:$0xff]
                  %221 = vst [vmem:[%s187 + $0x40] sm:$0xff] %v220
                  %v222 = vld [vmem:[%s186 + $0xe8] sm:$0xff]
                  %223 = vst [vmem:[%s187 + $0x48] sm:$0xff] %v222
                  %v224 = vld [vmem:[%s186 + $0xf0] sm:$0xff]
                  %225 = vst [vmem:[%s187 + $0x50] sm:$0xff] %v224
                  %v226 = vld [vmem:[%s186 + $0xf8] sm:$0xff]
                  %227 = vst [vmem:[%s187 + $0x58] sm:$0xff] %v226
                  %v228 = vld [vmem:[%s186 + $0x100] sm:$0xff]
                  %229 = vst [vmem:[%s187 + $0x60] sm:$0xff] %v228
                  %v230 = vld [vmem:[%s186 + $0x108] sm:$0xff]
                  %231 = vst [vmem:[%s187 + $0x68] sm:$0xff] %v230
                  %v232 = vld [vmem:[%s186 + $0x110] sm:$0xff]
                  %233 = vst [vmem:[%s187 + $0x70] sm:$0xff] %v232
                  %v234 = vld [vmem:[%s186 + $0x118] sm:$0xff]
                  %235 = vst [vmem:[%s187 + $0x78] sm:$0xff] %v234
                  %v236 = vld [vmem:[%s186 + $0x150] sm:$0xff]
                  %237 = vst [vmem:[%s187 + $0x60] sm:$0xff] %v236
                  %v238 = vld [vmem:[%s186 + $0x158] sm:$0xff]
                  %239 = vst [vmem:[%s187 + $0x68] sm:$0xff] %v238
                  %v240 = vld [vmem:[%s186 + $0x160] sm:$0xff]
                  %241 = vst [vmem:[%s187 + $0x70] sm:$0xff] %v240
                  %v242 = vld [vmem:[%s186 + $0x168] sm:$0xff]
                  %243 = vst [vmem:[%s187 + $0x78] sm:$0xff] %v242
                  %v244 = vld [vmem:[%s186 + $0x170] sm:$0xff]
                  %245 = vst [vmem:[%s187 + $0x80] sm:$0xff] %v244
                  %v246 = vld [vmem:[%s186 + $0x178] sm:$0xff]
                  %247 = vst [vmem:[%s187 + $0x88] sm:$0xff] %v246
                  %v248 = vld [vmem:[%s186 + $0x180] sm:$0xff]
                  %249 = vst [vmem:[%s187 + $0x90] sm:$0xff] %v248
                  %v250 = vld [vmem:[%s186 + $0x188] sm:$0xff]
                  %251 = vst [vmem:[%s187 + $0x98] sm:$0xff] %v250
                  %s252 = sadd.s32 1, %s185
                  %p253 = scmp.ge.s32.totalorder %s252, %s178
                  %s254 = scalar_select %p253, 0, %s252
                  %s255 = smul.u32 %s254, 64
                  %s256 = smul.u32 %s254, 64
                  %s257 = scalar_lea.vmem %s142, %s255
                  %s258 = scalar_lea.vmem %s134, %s256 [#allocation2]
                $region56: #{unet_forward.15} parent=50 // loop_footer
                  %s182 = sadd.s32 %s180, 1
                $region57: #{unet_forward.15} parent=50 // loop_footer_branch
                  %179 = sbr.rel target = $region53
                $region58: #{unet_forward.15} parent=50 // loop_exit
                  _
                %s259 = sshrl.u32 %s177, 3
                %s260 = sand.u32 %s177, 7
                %s261 = smul.u32 %s259, 8
                %s262 = smul.u32 8, %s261
                %s263 = scalar_lea.vmem %s142, %s262
                %s264 = smul.u32 8, %s261
                %s265 = scalar_lea.vmem %s134, %s264 [#allocation2]
                // While loop
                $region59: #{unet_forward.15} parent=50 // loop_pre_header
                  _
                $region60: #{unet_forward.15} parent=50 // loop_header
                  %s267 = sphi 0, %s269
                  %p268 = scmp.ge.s32.totalorder %s267, %s260
                  %s272 = sphi 0, %s285
                  %s273 = sphi %s263, %s288
                  %s274 = sphi %s265, %s289
                $region61: #{unet_forward.15} parent=50 // loop_header_branch
                  %271 = sbr.rel (%p268) target = $region65
                $region62: #{unet_forward.15} parent=50 // loop_body
                  %v275 = vld [vmem:[%s273] sm:$0xff]
                  %276 = vst [vmem:[%s274] sm:$0xff] %v275
                  %v277 = vld [vmem:[%s273 + $0x70] sm:$0xff]
                  %278 = vst [vmem:[%s274 + $0x20] sm:$0xff] %v277
                  %v279 = vld [vmem:[%s273 + $0xe0] sm:$0xff]
                  %280 = vst [vmem:[%s274 + $0x40] sm:$0xff] %v279
                  %v281 = vld [vmem:[%s273 + $0x150] sm:$0xff]
                  %282 = vst [vmem:[%s274 + $0x60] sm:$0xff] %v281
                  %s283 = sadd.s32 1, %s272
                  %p284 = scmp.ge.s32.totalorder %s283, %s260
                  %s285 = scalar_select %p284, 0, %s283
                  %s286 = smul.u32 %s285, 8
                  %s287 = smul.u32 %s285, 8
                  %s288 = scalar_lea.vmem %s263, %s286
                  %s289 = scalar_lea.vmem %s265, %s287 [#allocation2]
                $region63: #{unet_forward.15} parent=50 // loop_footer
                  %s269 = sadd.s32 %s267, 1
                $region64: #{unet_forward.15} parent=50 // loop_footer_branch
                  %266 = sbr.rel target = $region60
                $region65: #{unet_forward.15} parent=50 // loop_exit
                  _
              $region51: #{unet_forward.15} parent=35 // pred_fallthru
                _
              %p290 = pneg %p173
              // Predicated region
              $region66: #{unet_forward.15} parent=35 // pred_check
                _
              $region67: #{unet_forward.15} parent=35 // pred_check_branch
                %292 = sbr.rel (%p173) target = $region69
              $region68: #{unet_forward.15} parent=35 // pred_region
                %s293 = sand.u32 %s143, 7
                %s294 = ssub.s32 %s143, %s293
                %s295 = scalar_lea.vmem %s142, %s294
                %s296 = ssub.s32 %s143, %s293
                %s297 = scalar_lea.vmem %s134, %s296 [#allocation2]
                %s298 = sshrl.u32 %s143, 3
                %s299 = sshrl.u32 %s298, 3
                // While loop
                $region70: #{unet_forward.15} parent=68 // loop_pre_header
                  _
                $region71: #{unet_forward.15} parent=68 // loop_header
                  %s301 = sphi 0, %s303
                  %p302 = scmp.ge.s32.totalorder %s301, %s299
                  %s306 = sphi 0, %s375
                  %s307 = sphi %s142, %s378
                  %s308 = sphi %s134, %s379
                $region72: #{unet_forward.15} parent=68 // loop_header_branch
                  %305 = sbr.rel (%p302) target = $region76
                $region73: #{unet_forward.15} parent=68 // loop_body
                  %v309 = vld [vmem:[%s307] sm:$0xff]
                  %310 = vst [vmem:[%s308] sm:$0xff] %v309
                  %v311 = vld [vmem:[%s307 + $0x8] sm:$0xff]
                  %312 = vst [vmem:[%s308 + $0x8] sm:$0xff] %v311
                  %v313 = vld [vmem:[%s307 + $0x10] sm:$0xff]
                  %314 = vst [vmem:[%s308 + $0x10] sm:$0xff] %v313
                  %v315 = vld [vmem:[%s307 + $0x18] sm:$0xff]
                  %316 = vst [vmem:[%s308 + $0x18] sm:$0xff] %v315
                  %v317 = vld [vmem:[%s307 + $0x20] sm:$0xff]
                  %318 = vst [vmem:[%s308 + $0x20] sm:$0xff] %v317
                  %v319 = vld [vmem:[%s307 + $0x28] sm:$0xff]
                  %320 = vst [vmem:[%s308 + $0x28] sm:$0xff] %v319
                  %v321 = vld [vmem:[%s307 + $0x30] sm:$0xff]
                  %322 = vst [vmem:[%s308 + $0x30] sm:$0xff] %v321
                  %v323 = vld [vmem:[%s307 + $0x38] sm:$0xff]
                  %324 = vst [vmem:[%s308 + $0x38] sm:$0xff] %v323
                  %v325 = vld [vmem:[%s307 + $0x70] sm:$0xff]
                  %326 = vst [vmem:[%s308 + $0x20] sm:$0xff] %v325
                  %v327 = vld [vmem:[%s307 + $0x78] sm:$0xff]
                  %328 = vst [vmem:[%s308 + $0x28] sm:$0xff] %v327
                  %v329 = vld [vmem:[%s307 + $0x80] sm:$0xff]
                  %330 = vst [vmem:[%s308 + $0x30] sm:$0xff] %v329
                  %v331 = vld [vmem:[%s307 + $0x88] sm:$0xff]
                  %332 = vst [vmem:[%s308 + $0x38] sm:$0xff] %v331
                  %v333 = vld [vmem:[%s307 + $0x90] sm:$0xff]
                  %334 = vst [vmem:[%s308 + $0x40] sm:$0xff] %v333
                  %v335 = vld [vmem:[%s307 + $0x98] sm:$0xff]
                  %336 = vst [vmem:[%s308 + $0x48] sm:$0xff] %v335
                  %v337 = vld [vmem:[%s307 + $0xa0] sm:$0xff]
                  %338 = vst [vmem:[%s308 + $0x50] sm:$0xff] %v337
                  %v339 = vld [vmem:[%s307 + $0xa8] sm:$0xff]
                  %340 = vst [vmem:[%s308 + $0x58] sm:$0xff] %v339
                  %v341 = vld [vmem:[%s307 + $0xe0] sm:$0xff]
                  %342 = vst [vmem:[%s308 + $0x40] sm:$0xff] %v341
                  %v343 = vld [vmem:[%s307 + $0xe8] sm:$0xff]
                  %344 = vst [vmem:[%s308 + $0x48] sm:$0xff] %v343
                  %v345 = vld [vmem:[%s307 + $0xf0] sm:$0xff]
                  %346 = vst [vmem:[%s308 + $0x50] sm:$0xff] %v345
                  %v347 = vld [vmem:[%s307 + $0xf8] sm:$0xff]
                  %348 = vst [vmem:[%s308 + $0x58] sm:$0xff] %v347
                  %v349 = vld [vmem:[%s307 + $0x100] sm:$0xff]
                  %350 = vst [vmem:[%s308 + $0x60] sm:$0xff] %v349
                  %v351 = vld [vmem:[%s307 + $0x108] sm:$0xff]
                  %352 = vst [vmem:[%s308 + $0x68] sm:$0xff] %v351
                  %v353 = vld [vmem:[%s307 + $0x110] sm:$0xff]
                  %354 = vst [vmem:[%s308 + $0x70] sm:$0xff] %v353
                  %v355 = vld [vmem:[%s307 + $0x118] sm:$0xff]
                  %356 = vst [vmem:[%s308 + $0x78] sm:$0xff] %v355
                  %v357 = vld [vmem:[%s307 + $0x150] sm:$0xff]
                  %358 = vst [vmem:[%s308 + $0x60] sm:$0xff] %v357
                  %v359 = vld [vmem:[%s307 + $0x158] sm:$0xff]
                  %360 = vst [vmem:[%s308 + $0x68] sm:$0xff] %v359
                  %v361 = vld [vmem:[%s307 + $0x160] sm:$0xff]
                  %362 = vst [vmem:[%s308 + $0x70] sm:$0xff] %v361
                  %v363 = vld [vmem:[%s307 + $0x168] sm:$0xff]
                  %364 = vst [vmem:[%s308 + $0x78] sm:$0xff] %v363
                  %v365 = vld [vmem:[%s307 + $0x170] sm:$0xff]
                  %366 = vst [vmem:[%s308 + $0x80] sm:$0xff] %v365
                  %v367 = vld [vmem:[%s307 + $0x178] sm:$0xff]
                  %368 = vst [vmem:[%s308 + $0x88] sm:$0xff] %v367
                  %v369 = vld [vmem:[%s307 + $0x180] sm:$0xff]
                  %370 = vst [vmem:[%s308 + $0x90] sm:$0xff] %v369
                  %v371 = vld [vmem:[%s307 + $0x188] sm:$0xff]
                  %372 = vst [vmem:[%s308 + $0x98] sm:$0xff] %v371
                  %s373 = sadd.s32 1, %s306
                  %p374 = scmp.ge.s32.totalorder %s373, %s299
                  %s375 = scalar_select %p374, 0, %s373
                  %s376 = smul.u32 %s375, 64
                  %s377 = smul.u32 %s375, 64
                  %s378 = scalar_lea.vmem %s142, %s376
                  %s379 = scalar_lea.vmem %s134, %s377 [#allocation2]
                $region74: #{unet_forward.15} parent=68 // loop_footer
                  %s303 = sadd.s32 %s301, 1
                $region75: #{unet_forward.15} parent=68 // loop_footer_branch
                  %300 = sbr.rel target = $region71
                $region76: #{unet_forward.15} parent=68 // loop_exit
                  _
                %s380 = sshrl.u32 %s298, 3
                %s381 = sand.u32 %s298, 7
                %s382 = smul.u32 %s380, 8
                %s383 = smul.u32 8, %s382
                %s384 = scalar_lea.vmem %s142, %s383
                %s385 = smul.u32 8, %s382
                %s386 = scalar_lea.vmem %s134, %s385 [#allocation2]
                // While loop
                $region77: #{unet_forward.15} parent=68 // loop_pre_header
                  _
                $region78: #{unet_forward.15} parent=68 // loop_header
                  %s388 = sphi 0, %s390
                  %p389 = scmp.ge.s32.totalorder %s388, %s381
                  %s393 = sphi 0, %s406
                  %s394 = sphi %s384, %s409
                  %s395 = sphi %s386, %s410
                $region79: #{unet_forward.15} parent=68 // loop_header_branch
                  %392 = sbr.rel (%p389) target = $region83
                $region80: #{unet_forward.15} parent=68 // loop_body
                  %v396 = vld [vmem:[%s394] sm:$0xff]
                  %397 = vst [vmem:[%s395] sm:$0xff] %v396
                  %v398 = vld [vmem:[%s394 + $0x70] sm:$0xff]
                  %399 = vst [vmem:[%s395 + $0x20] sm:$0xff] %v398
                  %v400 = vld [vmem:[%s394 + $0xe0] sm:$0xff]
                  %401 = vst [vmem:[%s395 + $0x40] sm:$0xff] %v400
                  %v402 = vld [vmem:[%s394 + $0x150] sm:$0xff]
                  %403 = vst [vmem:[%s395 + $0x60] sm:$0xff] %v402
                  %s404 = sadd.s32 1, %s393
                  %p405 = scmp.ge.s32.totalorder %s404, %s381
                  %s406 = scalar_select %p405, 0, %s404
                  %s407 = smul.u32 %s406, 8
                  %s408 = smul.u32 %s406, 8
                  %s409 = scalar_lea.vmem %s384, %s407
                  %s410 = scalar_lea.vmem %s386, %s408 [#allocation2]
                $region81: #{unet_forward.15} parent=68 // loop_footer
                  %s390 = sadd.s32 %s388, 1
                $region82: #{unet_forward.15} parent=68 // loop_footer_branch
                  %387 = sbr.rel target = $region78
                $region83: #{unet_forward.15} parent=68 // loop_exit
                  _
                %s411 = sshll.u32 1, %s293
                %s412 = ssub.s32 %s411, 1
                loop: start=0, step=1, limit=1
                $region84: #{unet_forward.15} parent=68 // loop_pre_header
                  _
                $region85: #{unet_forward.15} parent=68 // loop_header
                  %s414 = sphi 0, %s418
                  %p415 = scmp.ge.s32.totalorder %s414, 1
                  %s419 = sphi %s295, %s295
                  %s420 = sphi %s297, %s297
                $region86: #{unet_forward.15} parent=68 // loop_header_branch
                  %417 = sbr.rel (%p415) target = $region90
                $region87: #{unet_forward.15} parent=68 // loop_body
                  %v421 = vld [vmem:[%s419] sm:%s412]
                  %422 = vst [vmem:[%s420] sm:%s412] %v421
                  %v423 = vld [vmem:[%s419 + $0x70] sm:%s412]
                  %424 = vst [vmem:[%s420 + $0x20] sm:%s412] %v423
                  %v425 = vld [vmem:[%s419 + $0xe0] sm:%s412]
                  %426 = vst [vmem:[%s420 + $0x40] sm:%s412] %v425
                  %v427 = vld [vmem:[%s419 + $0x150] sm:%s412]
                  %428 = vst [vmem:[%s420 + $0x60] sm:%s412] %v427
                $region88: #{unet_forward.15} parent=68 // loop_footer
                  %s418 = sadd.s32 1, %s414
                $region89: #{unet_forward.15} parent=68 // loop_footer_branch
                  %413 = sbr.rel target = $region85
                $region90: #{unet_forward.15} parent=68 // loop_exit
                  _
              $region69: #{unet_forward.15} parent=35 // pred_fallthru
                _
            $region36: #{unet_forward.15} parent=31 // pred_fallthru
              _
            // Predicated region
            $region37: #{unet_forward.15} parent=31 // pred_check
              %p151 = pneg %p147
            $region38: #{unet_forward.15} parent=31 // pred_check_branch
              %153 = sbr.rel (%p151) target = $region40
            $region39: #{unet_forward.15} parent=31 // pred_region
              %s154 = sshll.u32 1, %s143
              %s155 = ssub.s32 %s154, 1
              loop: start=0, step=1, limit=1
              $region41: #{unet_forward.15} parent=39 // loop_pre_header
                _
              $region42: #{unet_forward.15} parent=39 // loop_header
                %s157 = sphi 0, %s161
                %p158 = scmp.ge.s32.totalorder %s157, 1
                %s162 = sphi %s142, %s142
                %s163 = sphi %s134, %s134
              $region43: #{unet_forward.15} parent=39 // loop_header_branch
                %160 = sbr.rel (%p158) target = $region47
              $region44: #{unet_forward.15} parent=39 // loop_body
                %v164 = vld [vmem:[%s162] sm:%s155]
                %165 = vst [vmem:[%s163] sm:%s155] %v164
                %v166 = vld [vmem:[%s162 + $0x70] sm:%s155]
                %167 = vst [vmem:[%s163 + $0x20] sm:%s155] %v166
                %v168 = vld [vmem:[%s162 + $0xe0] sm:%s155]
                %169 = vst [vmem:[%s163 + $0x40] sm:%s155] %v168
                %v170 = vld [vmem:[%s162 + $0x150] sm:%s155]
                %171 = vst [vmem:[%s163 + $0x60] sm:%s155] %v170
              $region45: #{unet_forward.15} parent=39 // loop_footer
                %s161 = sadd.s32 1, %s157
              $region46: #{unet_forward.15} parent=39 // loop_footer_branch
                %156 = sbr.rel target = $region42
              $region47: #{unet_forward.15} parent=39 // loop_exit
                _
            $region40: #{unet_forward.15} parent=31 // pred_fallthru
              _
          $region32: #{unet_forward.15} parent=27 // pred_fallthru
            _
          %429 = vnop
        $region28: #{unet_forward.15} parent=23 // pred_fallthru
          _
      $region24: #{unet_forward.15} parent=5 // pred_fallthru
        _
      %p430 = scmp.le.s32.totalorder 1, %s9
      %p431 = scmp.lt.s32.totalorder %s9, 5
      %p432 = pnand %p430, %p431
      %p433 = pneg %p432
      // Predicated region
      $region91: #{unet_forward.15} parent=5 // pred_check
        _
      $region92: #{unet_forward.15} parent=5 // pred_check_branch
        %435 = sbr.rel (%p432) target = $region94
      $region93: #{unet_forward.15} parent=5 // pred_region
        %s436 = ssub.s32 %s9, 1
        %s437 = sand.u32 %s43, 1
        %s438 = sand.u32 %s43, 1
        %s439 = smul.addr %s438, 128
        %s440 = scalar_lea.vmem [#allocation2], %s439
        // Predicated region
        $region95: #{unet_forward.15} parent=93 // pred_check
          %p441 = pneg %p56
        $region96: #{unet_forward.15} parent=93 // pred_check_branch
          %443 = sbr.rel (%p441) target = $region98
        $region97: #{unet_forward.15} parent=93 // pred_region
          _
        $region98: #{unet_forward.15} parent=93 // pred_fallthru
          _
        %p444 = pneg %p30
        %p445 = pneg %p27
        %s446 = sand.u32 %s43, 1
        %s447 = sand.u32 %s43, 1
        %s448 = smul.addr %s447, 128
        %s449 = scalar_lea.vmem [#allocation2], %s448
        %p450 = pneg %p56
        %p451 = pneg %p53
        %p452 = pneg %p77
        %p453 = pneg %p74
        %p454 = pneg %p103
        %p455 = pneg %p100
        %s456 = sand.u32 %s90, 1
        %s457 = sand.u32 %s90, 1
        %s458 = smul.addr %s457, 32
        %s459 = scalar_lea.vmem [#allocation3], %s458
        %s460 = smul.u32 8, %s14
        %s461 = ssub.s32 28, %s460
        %p462 = scmp.lt.s32.totalorder %s461, 8
        %s463 = scalar_select %p462, %s461, 8
        %s464 = smul.u32 16, %s463
        %s465 = smul.u32 8, %s14
        %s466 = ssub.s32 28, %s465
        %p467 = scmp.lt.s32.totalorder %s466, 8
        %s468 = scalar_select %p467, %s466, 8
        %s469 = smul.u32 4, %s468
        %v471 = vld [vmem:[%s0] sm:$0xf]
        %v472 = vld [vmem:[%s440] sm:$0xff]
        %v473 = vld [vmem:[%s440 + $0x8] sm:$0xff]
        %v474 = vld [vmem:[%s440 + $0x10] sm:$0xff]
        %v475 = vld [vmem:[%s440 + $0x18] sm:$0xff]
        %v476 = vld [vmem:[%s440 + $0x20] sm:$0xff]
        %v477 = vld [vmem:[%s440 + $0x28] sm:$0xff]
        %v478 = vld [vmem:[%s440 + $0x30] sm:$0xff]
        %v479 = vld [vmem:[%s440 + $0x38] sm:$0xff]
        %v480 = vld [vmem:[%s440 + $0x40] sm:$0xff]
        %v481 = vld [vmem:[%s440 + $0x48] sm:$0xff]
        %v482 = vld [vmem:[%s440 + $0x50] sm:$0xff]
        %v483 = vld [vmem:[%s440 + $0x58] sm:$0xff]
        %v484 = vld [vmem:[%s440 + $0x60] sm:$0x33]
        %v485 = vld [vmem:[%s440 + $0x68] sm:$0x33]
        %v486 = vld [vmem:[%s440 + $0x70] sm:$0x33]
        %v487 = vld [vmem:[%s440 + $0x78] sm:$0x33]
        %v488 = vld [vmem:[%s2] sm:$0xff]
        %490 = vset.pattern.permute.xlu0 0
        %491 = vperm.xlu0 %490, %v488
        %v492 = vpop.permute.xlu0 %491
        %v510 = vunpack.c.l.b16 %v472
        %v511 = vunpack.c.h.b16 %v472
        %v512 = vunpack.c.l.b16 %v473
        %v513 = vunpack.c.h.b16 %v473
        %v514 = vunpack.c.l.b16 %v474
        %v515 = vunpack.c.h.b16 %v474
        %v516 = vunpack.c.l.b16 %v475
        %v517 = vunpack.c.h.b16 %v475
        %v518 = vunpack.c.l.b16 %v476
        %v519 = vunpack.c.h.b16 %v476
        %v520 = vunpack.c.l.b16 %v477
        %v521 = vunpack.c.h.b16 %v477
        %v522 = vunpack.c.l.b16 %v478
        %v523 = vunpack.c.h.b16 %v478
        %v524 = vunpack.c.l.b16 %v479
        %v525 = vunpack.c.h.b16 %v479
        %v526 = vunpack.c.l.b16 %v480
        %v527 = vunpack.c.h.b16 %v480
        %v528 = vunpack.c.l.b16 %v481
        %v529 = vunpack.c.h.b16 %v481
        %v530 = vunpack.c.l.b16 %v482
        %v531 = vunpack.c.h.b16 %v482
        %v532 = vunpack.c.l.b16 %v483
        %v533 = vunpack.c.h.b16 %v483
        %v534 = vunpack.c.l.b16 %v484
        %v535 = vunpack.c.h.b16 %v484
        %v536 = vunpack.c.l.b16 %v485
        %v537 = vunpack.c.h.b16 %v485
        %v538 = vunpack.c.l.b16 %v486
        %v539 = vunpack.c.h.b16 %v486
        %v540 = vunpack.c.l.b16 %v487
        %v541 = vunpack.c.h.b16 %v487
        %v542 = vpack.c.b16 %v518, %v510
        %v543 = vpack.c.b16 %v519, %v511
        %v544 = vpack.c.b16 %v520, %v512
        %v545 = vpack.c.b16 %v521, %v513
        %v546 = vpack.c.b16 %v522, %v514
        %v547 = vpack.c.b16 %v523, %v515
        %v548 = vpack.c.b16 %v524, %v516
        %v549 = vpack.c.b16 %v525, %v517
        %v550 = vpack.c.b16 %v534, %v526
        %v551 = vpack.c.b16 %v535, %v527
        %v552 = vpack.c.b16 %v536, %v528
        %v553 = vpack.c.b16 %v537, %v529
        %v554 = vpack.c.b16 %v538, %v530
        %v555 = vpack.c.b16 %v539, %v531
        %v556 = vpack.c.b16 %v540, %v532
        %v557 = vpack.c.b16 %v541, %v533
        %vm566 = vcmask 220160
        %v568 = vsel %vm566, %v471, 0
        %vm570 = vcmask 1044480
        %vm571 = vcmask 1045504
        %v572 = vsel %vm570, 4294967295, 65535
        %v573 = vsel %vm571, %v572, 0
        %v575 = vand.u32 %v550, %v573
        %v578 = vand.u32 %v551, %v573
        %v581 = vand.u32 %v552, %v573
        %v584 = vand.u32 %v553, %v573
        %v587 = vand.u32 %v554, %v573
        %v590 = vand.u32 %v555, %v573
        %v593 = vand.u32 %v556, %v573
        %v596 = vand.u32 %v557, %v573
        %598 = vmatpush.bf16.msra.mxu0 0
        %599 = vmatpush.bf16.msra.mxu0 0
        %600 = vmatpush.bf16.msra.mxu0 0
        %601 = vmatpush.bf16.msra.mxu0 0
        %602 = vmatpush.bf16.msra.mxu0 0
        %603 = vmatpush.bf16.msra.mxu0 0
        %604 = vmatpush.bf16.msra.mxu0 %v575
        %605 = vmatpush.bf16.msra.mxu0 %v542
        %606 = vmatmul.bf16.gmra.mxu0 %v568
        %v607 = vpop.f32.mrf.mxu0
        %v608 = vadd.f32 %v492, %v607
        %v609 = vpop.f32.mrf.mxu0
        %610 = vdwg.mxu0
        %611 = vmatpush.bf16.msra.mxu0 0
        %612 = vmatpush.bf16.msra.mxu0 0
        %613 = vmatpush.bf16.msra.mxu0 0
        %614 = vmatpush.bf16.msra.mxu0 0
        %615 = vmatpush.bf16.msra.mxu0 0
        %616 = vmatpush.bf16.msra.mxu0 0
        %617 = vmatpush.bf16.msra.mxu0 %v578
        %618 = vmatpush.bf16.msra.mxu0 %v543
        %619 = vmatmul.bf16.gmra.mxu0 %v568
        %v620 = vpop.f32.mrf.mxu0
        %v621 = vadd.f32 %v492, %v620
        %v622 = vpop.f32.mrf.mxu0
        %623 = vdwg.mxu0
        %624 = vmatpush.bf16.msra.mxu0 0
        %625 = vmatpush.bf16.msra.mxu0 0
        %626 = vmatpush.bf16.msra.mxu0 0
        %627 = vmatpush.bf16.msra.mxu0 0
        %628 = vmatpush.bf16.msra.mxu0 0
        %629 = vmatpush.bf16.msra.mxu0 0
        %630 = vmatpush.bf16.msra.mxu0 %v581
        %631 = vmatpush.bf16.msra.mxu0 %v544
        %632 = vmatmul.bf16.gmra.mxu0 %v568
        %v633 = vpop.f32.mrf.mxu0
        %v634 = vadd.f32 %v492, %v633
        %v635 = vpop.f32.mrf.mxu0
        %636 = vdwg.mxu0
        %637 = vmatpush.bf16.msra.mxu0 0
        %638 = vmatpush.bf16.msra.mxu0 0
        %639 = vmatpush.bf16.msra.mxu0 0
        %640 = vmatpush.bf16.msra.mxu0 0
        %641 = vmatpush.bf16.msra.mxu0 0
        %642 = vmatpush.bf16.msra.mxu0 0
        %643 = vmatpush.bf16.msra.mxu0 %v584
        %644 = vmatpush.bf16.msra.mxu0 %v545
        %645 = vmatmul.bf16.gmra.mxu0 %v568
        %v646 = vpop.f32.mrf.mxu0
        %v647 = vadd.f32 %v492, %v646
        %v648 = vpop.f32.mrf.mxu0
        %649 = vdwg.mxu0
        %650 = vmatpush.bf16.msra.mxu0 0
        %651 = vmatpush.bf16.msra.mxu0 0
        %652 = vmatpush.bf16.msra.mxu0 0
        %653 = vmatpush.bf16.msra.mxu0 0
        %654 = vmatpush.bf16.msra.mxu0 0
        %655 = vmatpush.bf16.msra.mxu0 0
        %656 = vmatpush.bf16.msra.mxu0 %v587
        %657 = vmatpush.bf16.msra.mxu0 %v546
        %658 = vmatmul.bf16.gmra.mxu0 %v568
        %v659 = vpop.f32.mrf.mxu0
        %v660 = vadd.f32 %v492, %v659
        %v661 = vpop.f32.mrf.mxu0
        %662 = vdwg.mxu0
        %663 = vmatpush.bf16.msra.mxu0 0
        %664 = vmatpush.bf16.msra.mxu0 0
        %665 = vmatpush.bf16.msra.mxu0 0
        %666 = vmatpush.bf16.msra.mxu0 0
        %667 = vmatpush.bf16.msra.mxu0 0
        %668 = vmatpush.bf16.msra.mxu0 0
        %669 = vmatpush.bf16.msra.mxu0 %v590
        %670 = vmatpush.bf16.msra.mxu0 %v547
        %671 = vmatmul.bf16.gmra.mxu0 %v568
        %v672 = vpop.f32.mrf.mxu0
        %v673 = vadd.f32 %v492, %v672
        %v674 = vpop.f32.mrf.mxu0
        %675 = vdwg.mxu0
        %676 = vmatpush.bf16.msra.mxu0 0
        %677 = vmatpush.bf16.msra.mxu0 0
        %678 = vmatpush.bf16.msra.mxu0 0
        %679 = vmatpush.bf16.msra.mxu0 0
        %680 = vmatpush.bf16.msra.mxu0 0
        %681 = vmatpush.bf16.msra.mxu0 0
        %682 = vmatpush.bf16.msra.mxu0 %v593
        %683 = vmatpush.bf16.msra.mxu0 %v548
        %684 = vmatmul.bf16.gmra.mxu0 %v568
        %v685 = vpop.f32.mrf.mxu0
        %v686 = vadd.f32 %v492, %v685
        %v687 = vpop.f32.mrf.mxu0
        %688 = vdwg.mxu0
        %689 = vmatpush.bf16.msra.mxu0 0
        %690 = vmatpush.bf16.msra.mxu0 0
        %691 = vmatpush.bf16.msra.mxu0 0
        %692 = vmatpush.bf16.msra.mxu0 0
        %693 = vmatpush.bf16.msra.mxu0 0
        %694 = vmatpush.bf16.msra.mxu0 0
        %695 = vmatpush.bf16.msra.mxu0 %v596
        %696 = vmatpush.bf16.msra.mxu0 %v549
        %697 = vmatmul.bf16.gmra.mxu0 %v568
        %v698 = vpop.f32.mrf.mxu0
        %v699 = vadd.f32 %v492, %v698
        %v700 = vpop.f32.mrf.mxu0
        %701 = vdwg.mxu0
        %v702 = vmax.f32 %v608, 0.0
        %v703 = vmax.f32 %v621, 0.0
        %v704 = vmax.f32 %v634, 0.0
        %v705 = vmax.f32 %v647, 0.0
        %v706 = vmax.f32 %v660, 0.0
        %v707 = vmax.f32 %v673, 0.0
        %v708 = vmax.f32 %v686, 0.0
        %v709 = vmax.f32 %v699, 0.0
        %v710 = vpack.c.bf16 %v703, %v702
        %v711 = vpack.c.bf16 %v705, %v704
        %v712 = vpack.c.bf16 %v707, %v706
        %v713 = vpack.c.bf16 %v709, %v708
        %714 = vst [vmem:[%s459] sm:$0xff] %v710
        %715 = vst [vmem:[%s459 + $0x8] sm:$0xff] %v711
        %716 = vst [vmem:[%s459 + $0x10] sm:$0xff] %v712
        %717 = vst [vmem:[%s459 + $0x18] sm:$0xff] %v713
        %s718 = sand.u32 %s90, 1
        %s719 = sand.u32 %s90, 1
        %s720 = smul.addr %s719, 32
        %s721 = scalar_lea.vmem [#allocation3], %s720
        // Predicated region
        $region99: #{unet_forward.15} parent=93 // pred_check
          %p722 = pneg %p100
        $region100: #{unet_forward.15} parent=93 // pred_check_branch
          %724 = sbr.rel (%p722) target = $region102
        $region101: #{unet_forward.15} parent=93 // pred_region
          %s725 = smul.u32 8, %s14
          %s726 = ssub.s32 28, %s725
          %p727 = scmp.lt.s32.totalorder %s726, 8
          %s728 = scalar_select %p727, %s726, 8
          %s729 = smul.u32 4, %s728
          %p730 = scmp.ne.s32.totalorder 0, %s729
          %s731 = smul.addr %s725, 4
          %s732 = scalar_lea.vmem %s3, %s731
          %s733 = smul.u32 %s728, 4
          // Predicated region
          $region103: #{unet_forward.15} parent=101 // pred_check
            %p734 = pneg %p730
          $region104: #{unet_forward.15} parent=101 // pred_check_branch
            %736 = sbr.rel (%p734) target = $region106
          $region105: #{unet_forward.15} parent=101 // pred_region
            %p737 = scmp.lt.u32.totalorder %s733, 8
            %p738 = pneg %p737
            // Predicated region
            $region107: #{unet_forward.15} parent=105 // pred_check
              _
            $region108: #{unet_forward.15} parent=105 // pred_check_branch
              %740 = sbr.rel (%p737) target = $region110
            $region109: #{unet_forward.15} parent=105 // pred_region
              %s756 = sand.u32 %s733, 7
              %p757 = scmp.eq.s32.totalorder %s756, 0
              // Predicated region
              $region122: #{unet_forward.15} parent=109 // pred_check
                %p758 = pneg %p757
              $region123: #{unet_forward.15} parent=109 // pred_check_branch
                %760 = sbr.rel (%p758) target = $region125
              $region124: #{unet_forward.15} parent=109 // pred_region
                %s761 = sshrl.u32 %s733, 3
                %s762 = sshrl.u32 %s761, 5
                // While loop
                $region126: #{unet_forward.15} parent=124 // loop_pre_header
                  _
                $region127: #{unet_forward.15} parent=124 // loop_header
                  %s764 = sphi 0, %s766
                  %p765 = scmp.ge.s32.totalorder %s764, %s762
                  %s769 = sphi 0, %s838
                  %s770 = sphi %s721, %s841
                  %s771 = sphi %s732, %s842
                $region128: #{unet_forward.15} parent=124 // loop_header_branch
                  %768 = sbr.rel (%p765) target = $region132
                $region129: #{unet_forward.15} parent=124 // loop_body
                  %v772 = vld [vmem:[%s770] sm:$0xff]
                  %773 = vst [vmem:[%s771] sm:$0xff] %v772
                  %v774 = vld [vmem:[%s770 + $0x8] sm:$0xff]
                  %775 = vst [vmem:[%s771 + $0x8] sm:$0xff] %v774
                  %v776 = vld [vmem:[%s770 + $0x10] sm:$0xff]
                  %777 = vst [vmem:[%s771 + $0x10] sm:$0xff] %v776
                  %v778 = vld [vmem:[%s770 + $0x18] sm:$0xff]
                  %779 = vst [vmem:[%s771 + $0x18] sm:$0xff] %v778
                  %v780 = vld [vmem:[%s770 + $0x20] sm:$0xff]
                  %781 = vst [vmem:[%s771 + $0x20] sm:$0xff] %v780
                  %v782 = vld [vmem:[%s770 + $0x28] sm:$0xff]
                  %783 = vst [vmem:[%s771 + $0x28] sm:$0xff] %v782
                  %v784 = vld [vmem:[%s770 + $0x30] sm:$0xff]
                  %785 = vst [vmem:[%s771 + $0x30] sm:$0xff] %v784
                  %v786 = vld [vmem:[%s770 + $0x38] sm:$0xff]
                  %787 = vst [vmem:[%s771 + $0x38] sm:$0xff] %v786
                  %v788 = vld [vmem:[%s770 + $0x40] sm:$0xff]
                  %789 = vst [vmem:[%s771 + $0x40] sm:$0xff] %v788
                  %v790 = vld [vmem:[%s770 + $0x48] sm:$0xff]
                  %791 = vst [vmem:[%s771 + $0x48] sm:$0xff] %v790
                  %v792 = vld [vmem:[%s770 + $0x50] sm:$0xff]
                  %793 = vst [vmem:[%s771 + $0x50] sm:$0xff] %v792
                  %v794 = vld [vmem:[%s770 + $0x58] sm:$0xff]
                  %795 = vst [vmem:[%s771 + $0x58] sm:$0xff] %v794
                  %v796 = vld [vmem:[%s770 + $0x60] sm:$0xff]
                  %797 = vst [vmem:[%s771 + $0x60] sm:$0xff] %v796
                  %v798 = vld [vmem:[%s770 + $0x68] sm:$0xff]
                  %799 = vst [vmem:[%s771 + $0x68] sm:$0xff] %v798
                  %v800 = vld [vmem:[%s770 + $0x70] sm:$0xff]
                  %801 = vst [vmem:[%s771 + $0x70] sm:$0xff] %v800
                  %v802 = vld [vmem:[%s770 + $0x78] sm:$0xff]
                  %803 = vst [vmem:[%s771 + $0x78] sm:$0xff] %v802
                  %v804 = vld [vmem:[%s770 + $0x80] sm:$0xff]
                  %805 = vst [vmem:[%s771 + $0x80] sm:$0xff] %v804
                  %v806 = vld [vmem:[%s770 + $0x88] sm:$0xff]
                  %807 = vst [vmem:[%s771 + $0x88] sm:$0xff] %v806
                  %v808 = vld [vmem:[%s770 + $0x90] sm:$0xff]
                  %809 = vst [vmem:[%s771 + $0x90] sm:$0xff] %v808
                  %v810 = vld [vmem:[%s770 + $0x98] sm:$0xff]
                  %811 = vst [vmem:[%s771 + $0x98] sm:$0xff] %v810
                  %v812 = vld [vmem:[%s770 + $0xa0] sm:$0xff]
                  %813 = vst [vmem:[%s771 + $0xa0] sm:$0xff] %v812
                  %v814 = vld [vmem:[%s770 + $0xa8] sm:$0xff]
                  %815 = vst [vmem:[%s771 + $0xa8] sm:$0xff] %v814
                  %v816 = vld [vmem:[%s770 + $0xb0] sm:$0xff]
                  %817 = vst [vmem:[%s771 + $0xb0] sm:$0xff] %v816
                  %v818 = vld [vmem:[%s770 + $0xb8] sm:$0xff]
                  %819 = vst [vmem:[%s771 + $0xb8] sm:$0xff] %v818
                  %v820 = vld [vmem:[%s770 + $0xc0] sm:$0xff]
                  %821 = vst [vmem:[%s771 + $0xc0] sm:$0xff] %v820
                  %v822 = vld [vmem:[%s770 + $0xc8] sm:$0xff]
                  %823 = vst [vmem:[%s771 + $0xc8] sm:$0xff] %v822
                  %v824 = vld [vmem:[%s770 + $0xd0] sm:$0xff]
                  %825 = vst [vmem:[%s771 + $0xd0] sm:$0xff] %v824
                  %v826 = vld [vmem:[%s770 + $0xd8] sm:$0xff]
                  %827 = vst [vmem:[%s771 + $0xd8] sm:$0xff] %v826
                  %v828 = vld [vmem:[%s770 + $0xe0] sm:$0xff]
                  %829 = vst [vmem:[%s771 + $0xe0] sm:$0xff] %v828
                  %v830 = vld [vmem:[%s770 + $0xe8] sm:$0xff]
                  %831 = vst [vmem:[%s771 + $0xe8] sm:$0xff] %v830
                  %v832 = vld [vmem:[%s770 + $0xf0] sm:$0xff]
                  %833 = vst [vmem:[%s771 + $0xf0] sm:$0xff] %v832
                  %v834 = vld [vmem:[%s770 + $0xf8] sm:$0xff]
                  %835 = vst [vmem:[%s771 + $0xf8] sm:$0xff] %v834
                  %s836 = sadd.s32 1, %s769
                  %p837 = scmp.ge.s32.totalorder %s836, %s762
                  %s838 = scalar_select %p837, 0, %s836
                  %s839 = smul.u32 %s838, 256
                  %s840 = smul.u32 %s838, 256
                  %s841 = scalar_lea.vmem %s721, %s839 [#allocation3]
                  %s842 = scalar_lea.vmem %s732, %s840
                $region130: #{unet_forward.15} parent=124 // loop_footer
                  %s766 = sadd.s32 %s764, 1
                $region131: #{unet_forward.15} parent=124 // loop_footer_branch
                  %763 = sbr.rel target = $region127
                $region132: #{unet_forward.15} parent=124 // loop_exit
                  _
                %s843 = sshrl.u32 %s761, 5
                %s844 = sand.u32 %s761, 31
                %s845 = smul.u32 %s843, 32
                %s846 = smul.u32 8, %s845
                %s847 = scalar_lea.vmem %s721, %s846 [#allocation3]
                %s848 = smul.u32 8, %s845
                %s849 = scalar_lea.vmem %s732, %s848
                // While loop
                $region133: #{unet_forward.15} parent=124 // loop_pre_header
                  _
                $region134: #{unet_forward.15} parent=124 // loop_header
                  %s851 = sphi 0, %s853
                  %p852 = scmp.ge.s32.totalorder %s851, %s844
                  %s856 = sphi 0, %s863
                  %s857 = sphi %s847, %s866
                  %s858 = sphi %s849, %s867
                $region135: #{unet_forward.15} parent=124 // loop_header_branch
                  %855 = sbr.rel (%p852) target = $region139
                $region136: #{unet_forward.15} parent=124 // loop_body
                  %v859 = vld [vmem:[%s857] sm:$0xff]
                  %860 = vst [vmem:[%s858] sm:$0xff] %v859
                  %s861 = sadd.s32 1, %s856
                  %p862 = scmp.ge.s32.totalorder %s861, %s844
                  %s863 = scalar_select %p862, 0, %s861
                  %s864 = smul.u32 %s863, 8
                  %s865 = smul.u32 %s863, 8
                  %s866 = scalar_lea.vmem %s847, %s864 [#allocation3]
                  %s867 = scalar_lea.vmem %s849, %s865
                $region137: #{unet_forward.15} parent=124 // loop_footer
                  %s853 = sadd.s32 %s851, 1
                $region138: #{unet_forward.15} parent=124 // loop_footer_branch
                  %850 = sbr.rel target = $region134
                $region139: #{unet_forward.15} parent=124 // loop_exit
                  _
              $region125: #{unet_forward.15} parent=109 // pred_fallthru
                _
              %p868 = pneg %p757
              // Predicated region
              $region140: #{unet_forward.15} parent=109 // pred_check
                _
              $region141: #{unet_forward.15} parent=109 // pred_check_branch
                %870 = sbr.rel (%p757) target = $region143
              $region142: #{unet_forward.15} parent=109 // pred_region
                %s871 = sand.u32 %s733, 7
                %s872 = ssub.s32 %s733, %s871
                %s873 = scalar_lea.vmem %s721, %s872 [#allocation3]
                %s874 = ssub.s32 %s733, %s871
                %s875 = scalar_lea.vmem %s732, %s874
                %s876 = sshrl.u32 %s733, 3
                %s877 = sshrl.u32 %s876, 5
                // While loop
                $region144: #{unet_forward.15} parent=142 // loop_pre_header
                  _
                $region145: #{unet_forward.15} parent=142 // loop_header
                  %s879 = sphi 0, %s881
                  %p880 = scmp.ge.s32.totalorder %s879, %s877
                  %s884 = sphi 0, %s953
                  %s885 = sphi %s721, %s956
                  %s886 = sphi %s732, %s957
                $region146: #{unet_forward.15} parent=142 // loop_header_branch
                  %883 = sbr.rel (%p880) target = $region150
                $region147: #{unet_forward.15} parent=142 // loop_body
                  %v887 = vld [vmem:[%s885] sm:$0xff]
                  %888 = vst [vmem:[%s886] sm:$0xff] %v887
                  %v889 = vld [vmem:[%s885 + $0x8] sm:$0xff]
                  %890 = vst [vmem:[%s886 + $0x8] sm:$0xff] %v889
                  %v891 = vld [vmem:[%s885 + $0x10] sm:$0xff]
                  %892 = vst [vmem:[%s886 + $0x10] sm:$0xff] %v891
                  %v893 = vld [vmem:[%s885 + $0x18] sm:$0xff]
                  %894 = vst [vmem:[%s886 + $0x18] sm:$0xff] %v893
                  %v895 = vld [vmem:[%s885 + $0x20] sm:$0xff]
                  %896 = vst [vmem:[%s886 + $0x20] sm:$0xff] %v895
                  %v897 = vld [vmem:[%s885 + $0x28] sm:$0xff]
                  %898 = vst [vmem:[%s886 + $0x28] sm:$0xff] %v897
                  %v899 = vld [vmem:[%s885 + $0x30] sm:$0xff]
                  %900 = vst [vmem:[%s886 + $0x30] sm:$0xff] %v899
                  %v901 = vld [vmem:[%s885 + $0x38] sm:$0xff]
                  %902 = vst [vmem:[%s886 + $0x38] sm:$0xff] %v901
                  %v903 = vld [vmem:[%s885 + $0x40] sm:$0xff]
                  %904 = vst [vmem:[%s886 + $0x40] sm:$0xff] %v903
                  %v905 = vld [vmem:[%s885 + $0x48] sm:$0xff]
                  %906 = vst [vmem:[%s886 + $0x48] sm:$0xff] %v905
                  %v907 = vld [vmem:[%s885 + $0x50] sm:$0xff]
                  %908 = vst [vmem:[%s886 + $0x50] sm:$0xff] %v907
                  %v909 = vld [vmem:[%s885 + $0x58] sm:$0xff]
                  %910 = vst [vmem:[%s886 + $0x58] sm:$0xff] %v909
                  %v911 = vld [vmem:[%s885 + $0x60] sm:$0xff]
                  %912 = vst [vmem:[%s886 + $0x60] sm:$0xff] %v911
                  %v913 = vld [vmem:[%s885 + $0x68] sm:$0xff]
                  %914 = vst [vmem:[%s886 + $0x68] sm:$0xff] %v913
                  %v915 = vld [vmem:[%s885 + $0x70] sm:$0xff]
                  %916 = vst [vmem:[%s886 + $0x70] sm:$0xff] %v915
                  %v917 = vld [vmem:[%s885 + $0x78] sm:$0xff]
                  %918 = vst [vmem:[%s886 + $0x78] sm:$0xff] %v917
                  %v919 = vld [vmem:[%s885 + $0x80] sm:$0xff]
                  %920 = vst [vmem:[%s886 + $0x80] sm:$0xff] %v919
                  %v921 = vld [vmem:[%s885 + $0x88] sm:$0xff]
                  %922 = vst [vmem:[%s886 + $0x88] sm:$0xff] %v921
                  %v923 = vld [vmem:[%s885 + $0x90] sm:$0xff]
                  %924 = vst [vmem:[%s886 + $0x90] sm:$0xff] %v923
                  %v925 = vld [vmem:[%s885 + $0x98] sm:$0xff]
                  %926 = vst [vmem:[%s886 + $0x98] sm:$0xff] %v925
                  %v927 = vld [vmem:[%s885 + $0xa0] sm:$0xff]
                  %928 = vst [vmem:[%s886 + $0xa0] sm:$0xff] %v927
                  %v929 = vld [vmem:[%s885 + $0xa8] sm:$0xff]
                  %930 = vst [vmem:[%s886 + $0xa8] sm:$0xff] %v929
                  %v931 = vld [vmem:[%s885 + $0xb0] sm:$0xff]
                  %932 = vst [vmem:[%s886 + $0xb0] sm:$0xff] %v931
                  %v933 = vld [vmem:[%s885 + $0xb8] sm:$0xff]
                  %934 = vst [vmem:[%s886 + $0xb8] sm:$0xff] %v933
                  %v935 = vld [vmem:[%s885 + $0xc0] sm:$0xff]
                  %936 = vst [vmem:[%s886 + $0xc0] sm:$0xff] %v935
                  %v937 = vld [vmem:[%s885 + $0xc8] sm:$0xff]
                  %938 = vst [vmem:[%s886 + $0xc8] sm:$0xff] %v937
                  %v939 = vld [vmem:[%s885 + $0xd0] sm:$0xff]
                  %940 = vst [vmem:[%s886 + $0xd0] sm:$0xff] %v939
                  %v941 = vld [vmem:[%s885 + $0xd8] sm:$0xff]
                  %942 = vst [vmem:[%s886 + $0xd8] sm:$0xff] %v941
                  %v943 = vld [vmem:[%s885 + $0xe0] sm:$0xff]
                  %944 = vst [vmem:[%s886 + $0xe0] sm:$0xff] %v943
                  %v945 = vld [vmem:[%s885 + $0xe8] sm:$0xff]
                  %946 = vst [vmem:[%s886 + $0xe8] sm:$0xff] %v945
                  %v947 = vld [vmem:[%s885 + $0xf0] sm:$0xff]
                  %948 = vst [vmem:[%s886 + $0xf0] sm:$0xff] %v947
                  %v949 = vld [vmem:[%s885 + $0xf8] sm:$0xff]
                  %950 = vst [vmem:[%s886 + $0xf8] sm:$0xff] %v949
                  %s951 = sadd.s32 1, %s884
                  %p952 = scmp.ge.s32.totalorder %s951, %s877
                  %s953 = scalar_select %p952, 0, %s951
                  %s954 = smul.u32 %s953, 256
                  %s955 = smul.u32 %s953, 256
                  %s956 = scalar_lea.vmem %s721, %s954 [#allocation3]
                  %s957 = scalar_lea.vmem %s732, %s955
                $region148: #{unet_forward.15} parent=142 // loop_footer
                  %s881 = sadd.s32 %s879, 1
                $region149: #{unet_forward.15} parent=142 // loop_footer_branch
                  %878 = sbr.rel target = $region145
                $region150: #{unet_forward.15} parent=142 // loop_exit
                  _
                %s958 = sshrl.u32 %s876, 5
                %s959 = sand.u32 %s876, 31
                %s960 = smul.u32 %s958, 32
                %s961 = smul.u32 8, %s960
                %s962 = scalar_lea.vmem %s721, %s961 [#allocation3]
                %s963 = smul.u32 8, %s960
                %s964 = scalar_lea.vmem %s732, %s963
                // While loop
                $region151: #{unet_forward.15} parent=142 // loop_pre_header
                  _
                $region152: #{unet_forward.15} parent=142 // loop_header
                  %s966 = sphi 0, %s968
                  %p967 = scmp.ge.s32.totalorder %s966, %s959
                  %s971 = sphi 0, %s978
                  %s972 = sphi %s962, %s981
                  %s973 = sphi %s964, %s982
                $region153: #{unet_forward.15} parent=142 // loop_header_branch
                  %970 = sbr.rel (%p967) target = $region157
                $region154: #{unet_forward.15} parent=142 // loop_body
                  %v974 = vld [vmem:[%s972] sm:$0xff]
                  %975 = vst [vmem:[%s973] sm:$0xff] %v974
                  %s976 = sadd.s32 1, %s971
                  %p977 = scmp.ge.s32.totalorder %s976, %s959
                  %s978 = scalar_select %p977, 0, %s976
                  %s979 = smul.u32 %s978, 8
                  %s980 = smul.u32 %s978, 8
                  %s981 = scalar_lea.vmem %s962, %s979 [#allocation3]
                  %s982 = scalar_lea.vmem %s964, %s980
                $region155: #{unet_forward.15} parent=142 // loop_footer
                  %s968 = sadd.s32 %s966, 1
                $region156: #{unet_forward.15} parent=142 // loop_footer_branch
                  %965 = sbr.rel target = $region152
                $region157: #{unet_forward.15} parent=142 // loop_exit
                  _
                %s983 = sshll.u32 1, %s871
                %s984 = ssub.s32 %s983, 1
                loop: start=0, step=1, limit=1
                $region158: #{unet_forward.15} parent=142 // loop_pre_header
                  _
                $region159: #{unet_forward.15} parent=142 // loop_header
                  %s986 = sphi 0, %s990
                  %p987 = scmp.ge.s32.totalorder %s986, 1
                  %s991 = sphi %s873, %s873
                  %s992 = sphi %s875, %s875
                $region160: #{unet_forward.15} parent=142 // loop_header_branch
                  %989 = sbr.rel (%p987) target = $region164
                $region161: #{unet_forward.15} parent=142 // loop_body
                  %v993 = vld [vmem:[%s991] sm:%s984]
                  %994 = vst [vmem:[%s992] sm:%s984] %v993
                $region162: #{unet_forward.15} parent=142 // loop_footer
                  %s990 = sadd.s32 1, %s986
                $region163: #{unet_forward.15} parent=142 // loop_footer_branch
                  %985 = sbr.rel target = $region159
                $region164: #{unet_forward.15} parent=142 // loop_exit
                  _
              $region143: #{unet_forward.15} parent=109 // pred_fallthru
                _
            $region110: #{unet_forward.15} parent=105 // pred_fallthru
              _
            // Predicated region
            $region111: #{unet_forward.15} parent=105 // pred_check
              %p741 = pneg %p737
            $region112: #{unet_forward.15} parent=105 // pred_check_branch
              %743 = sbr.rel (%p741) target = $region114
            $region113: #{unet_forward.15} parent=105 // pred_region
              %s744 = sshll.u32 1, %s733
              %s745 = ssub.s32 %s744, 1
              loop: start=0, step=1, limit=1
              $region115: #{unet_forward.15} parent=113 // loop_pre_header
                _
              $region116: #{unet_forward.15} parent=113 // loop_header
                %s747 = sphi 0, %s751
                %p748 = scmp.ge.s32.totalorder %s747, 1
                %s752 = sphi %s721, %s721
                %s753 = sphi %s732, %s732
              $region117: #{unet_forward.15} parent=113 // loop_header_branch
                %750 = sbr.rel (%p748) target = $region121
              $region118: #{unet_forward.15} parent=113 // loop_body
                %v754 = vld [vmem:[%s752] sm:%s745]
                %755 = vst [vmem:[%s753] sm:%s745] %v754
              $region119: #{unet_forward.15} parent=113 // loop_footer
                %s751 = sadd.s32 1, %s747
              $region120: #{unet_forward.15} parent=113 // loop_footer_branch
                %746 = sbr.rel target = $region116
              $region121: #{unet_forward.15} parent=113 // loop_exit
                _
            $region114: #{unet_forward.15} parent=105 // pred_fallthru
              _
          $region106: #{unet_forward.15} parent=101 // pred_fallthru
            _
          %995 = vnop
        $region102: #{unet_forward.15} parent=93 // pred_fallthru
          _
      $region94: #{unet_forward.15} parent=5 // pred_fallthru
        _
      %p996 = scmp.le.s32.totalorder 2, %s9
      // Predicated region
      $region165: #{unet_forward.15} parent=5 // pred_check
        %p997 = pneg %p996
      $region166: #{unet_forward.15} parent=5 // pred_check_branch
        %999 = sbr.rel (%p997) target = $region168
      $region167: #{unet_forward.15} parent=5 // pred_region
        %s1000 = ssub.s32 %s9, 2
        // Predicated region
        $region169: #{unet_forward.15} parent=167 // pred_check
          %p1001 = pneg %p106
        $region170: #{unet_forward.15} parent=167 // pred_check_branch
          %1003 = sbr.rel (%p1001) target = $region172
        $region171: #{unet_forward.15} parent=167 // pred_region
          %s1004 = sand.u32 %s91, 1
          %s1005 = sand.u32 %s91, 1
          %s1006 = smul.addr %s1005, 32
          %s1007 = scalar_lea.vmem [#allocation3], %s1006
        $region172: #{unet_forward.15} parent=167 // pred_fallthru
          _
      $region168: #{unet_forward.15} parent=5 // pred_fallthru
        _
    $region6: #{unet_forward.15} parent=1 // loop_footer
      %s13 = sadd.s32 1, %s9
    $region7: #{unet_forward.15} parent=1 // loop_footer_branch
      %8 = sbr.rel target = $region3
    $region8: #{unet_forward.15} parent=1 // loop_exit
      _

// kernel: unet_forward.16
$region0: #{unet_forward.16}
  #allocation0 [shape = 'u32[]', space=smem, size = 0x4, offset = 0x4, fixed_abs, tag = 'smem constant byte address 0x4 - core index']
  #allocation1 [shape = 'u32[72,128]{1,0:T(1,128)}', space=vmem, size = 0x9000, scoped, tag = 'internal scratch']
  %s0 = inlined_call_operand.vmem [shape: bf16[8,72], index: 0, kind: input, shape index: {}]
  %s1 = inlined_call_operand.vmem [shape: bf16[72,3200], index: 1, kind: input, shape index: {}]
  %s2 = inlined_call_operand.vmem [shape: f32[8,1], index: 2, kind: input, shape index: {}]
  %s3 = inlined_call_operand.vmem [shape: bf16[8,3200], index: 3, kind: output, shape index: {}]
  %s4 = sld [smem:[#allocation0]]
  $region173: #{unet_forward.16} parent=0
    _
  %s6 = ssub.s32 1, %s4
  %s7 = scalar_select 0, %s6, %s4
  $region1: #{unet_forward.16} parent=0
    #allocation2 [shape = 'u8[294912]{0}', space=vmem, size = 0x48000, scoped, tag = 'input window, operand 1']
    #allocation3 [shape = 'u8[32768]{0}', space=vmem, size = 0x8000, scoped, tag = 'output window, operand 0']
    loop: start=0, step=1, limit=6
    $region2: #{unet_forward.16} parent=1 // loop_pre_header
      _
    $region3: #{unet_forward.16} parent=1 // loop_header
      %s9 = sphi 0, %s13
      %p10 = scmp.ge.s32.totalorder %s9, 6
      %s17 = sphi 0, %s17
      %s19 = sphi 0, %s17
      %s20 = sphi 0, %s19
      %s34 = sphi 0, %s20
      %s40 = sphi 0, %s42
      %s43 = sphi 0, %s40
      %s44 = sphi 0, %s43
      %s60 = sphi 0, %s44
      %s64 = sphi 0, %s64
      %s66 = sphi 0, %s64
      %s67 = sphi 0, %s66
      %s81 = sphi 0, %s67
      %s87 = sphi 0, %s89
      %s90 = sphi 0, %s87
      %s91 = sphi 0, %s90
      %s107 = sphi 0, %s91
    $region4: #{unet_forward.16} parent=1 // loop_header_branch
      %12 = sbr.rel (%p10) target = $region8
    $region5: #{unet_forward.16} parent=1 // loop_body
      %s14 = ssub.s32 %s9, 1
      %s15 = ssub.s32 %s9, 2
      %s16 = sadd.s32 %s9, 1
      %s18 = sadd.s32 %s17, 1
      %p21 = scmp.eq.s32.totalorder %s9, 3
      %p22 = scmp.ne.s32.totalorder %s17, %s19
      %p23 = scmp.eq.s32.totalorder %s9, 0
      %p24 = por %p22, %p23
      %p25 = scmp.ne.s32.totalorder %s17, %s19
      %p26 = scmp.eq.s32.totalorder %s14, 3
      %p27 = por %p25, %p26
      %p28 = scmp.ne.s32.totalorder %s19, %s20
      %p29 = scmp.eq.s32.totalorder %s14, 0
      %p30 = por %p28, %p29
      %p31 = scmp.ne.s32.totalorder %s19, %s20
      %p32 = scmp.eq.s32.totalorder %s15, 3
      %p33 = por %p31, %p32
      %p35 = scmp.ne.s32.totalorder %s20, %s34
      %p36 = scmp.eq.s32.totalorder %s15, 0
      %p37 = por %p35, %p36
      %s38 = ssub.s32 %s9, %s16
      %p39 = scmp.eq.s32.totalorder %s38, 0
      %s41 = sadd.s32 %s40, 1
      %s42 = scalar_select %p39, %s40, %s41
      %p45 = pneg %p39
      %p46 = scmp.eq.s32.totalorder %s9, 3
      %p47 = por %p45, %p46
      %p48 = scmp.ne.s32.totalorder %s40, %s43
      %p49 = scmp.eq.s32.totalorder %s9, 0
      %p50 = por %p48, %p49
      %p51 = scmp.ne.s32.totalorder %s40, %s43
      %p52 = scmp.eq.s32.totalorder %s14, 3
      %p53 = por %p51, %p52
      %p54 = scmp.ne.s32.totalorder %s43, %s44
      %p55 = scmp.eq.s32.totalorder %s14, 0
      %p56 = por %p54, %p55
      %p57 = scmp.ne.s32.totalorder %s43, %s44
      %p58 = scmp.eq.s32.totalorder %s15, 3
      %p59 = por %p57, %p58
      %p61 = scmp.ne.s32.totalorder %s44, %s60
      %p62 = scmp.eq.s32.totalorder %s15, 0
      %p63 = por %p61, %p62
      %s65 = sadd.s32 %s64, 1
      %p68 = scmp.eq.s32.totalorder %s9, 3
      %p69 = scmp.ne.s32.totalorder %s64, %s66
      %p70 = scmp.eq.s32.totalorder %s9, 0
      %p71 = por %p69, %p70
      %p72 = scmp.ne.s32.totalorder %s64, %s66
      %p73 = scmp.eq.s32.totalorder %s14, 3
      %p74 = por %p72, %p73
      %p75 = scmp.ne.s32.totalorder %s66, %s67
      %p76 = scmp.eq.s32.totalorder %s14, 0
      %p77 = por %p75, %p76
      %p78 = scmp.ne.s32.totalorder %s66, %s67
      %p79 = scmp.eq.s32.totalorder %s15, 3
      %p80 = por %p78, %p79
      %p82 = scmp.ne.s32.totalorder %s67, %s81
      %p83 = scmp.eq.s32.totalorder %s15, 0
      %p84 = por %p82, %p83
      %s85 = ssub.s32 %s9, %s16
      %p86 = scmp.eq.s32.totalorder %s85, 0
      %s88 = sadd.s32 %s87, 1
      %s89 = scalar_select %p86, %s87, %s88
      %p92 = pneg %p86
      %p93 = scmp.eq.s32.totalorder %s9, 3
      %p94 = por %p92, %p93
      %p95 = scmp.ne.s32.totalorder %s87, %s90
      %p96 = scmp.eq.s32.totalorder %s9, 0
      %p97 = por %p95, %p96
      %p98 = scmp.ne.s32.totalorder %s87, %s90
      %p99 = scmp.eq.s32.totalorder %s14, 3
      %p100 = por %p98, %p99
      %p101 = scmp.ne.s32.totalorder %s90, %s91
      %p102 = scmp.eq.s32.totalorder %s14, 0
      %p103 = por %p101, %p102
      %p104 = scmp.ne.s32.totalorder %s90, %s91
      %p105 = scmp.eq.s32.totalorder %s15, 3
      %p106 = por %p104, %p105
      %p108 = scmp.ne.s32.totalorder %s91, %s107
      %p109 = scmp.eq.s32.totalorder %s15, 0
      %p110 = por %p108, %p109
      %p111 = scmp.le.s32.totalorder 1, %s9
      %p112 = scmp.lt.s32.totalorder %s9, 5
      %p113 = pnand %p111, %p112
      %p114 = pneg %p113
      // Predicated region
      $region9: #{unet_forward.16} parent=5 // pred_check
        _
      $region10: #{unet_forward.16} parent=5 // pred_check_branch
        %116 = sbr.rel (%p113) target = $region12
      $region11: #{unet_forward.16} parent=5 // pred_region
        %s117 = ssub.s32 %s9, 1
        // Predicated region
        $region13: #{unet_forward.16} parent=11 // pred_check
          %p118 = pneg %p30
        $region14: #{unet_forward.16} parent=11 // pred_check_branch
          %120 = sbr.rel (%p118) target = $region16
        $region15: #{unet_forward.16} parent=11 // pred_region
          _
        $region16: #{unet_forward.16} parent=11 // pred_fallthru
          _
        // Predicated region
        $region17: #{unet_forward.16} parent=11 // pred_check
          %p121 = pneg %p77
        $region18: #{unet_forward.16} parent=11 // pred_check_branch
          %123 = sbr.rel (%p121) target = $region20
        $region19: #{unet_forward.16} parent=11 // pred_region
          _
        $region20: #{unet_forward.16} parent=11 // pred_fallthru
          _
      $region12: #{unet_forward.16} parent=5 // pred_fallthru
        _
      %p124 = scmp.lt.s32.totalorder %s9, 4
      // Predicated region
      $region21: #{unet_forward.16} parent=5 // pred_check
        %p125 = pneg %p124
      $region22: #{unet_forward.16} parent=5 // pred_check_branch
        %127 = sbr.rel (%p125) target = $region24
      $region23: #{unet_forward.16} parent=5 // pred_region
        // Predicated region
        $region25: #{unet_forward.16} parent=23 // pred_check
          %p128 = pneg %p50
        $region26: #{unet_forward.16} parent=23 // pred_check_branch
          %130 = sbr.rel (%p128) target = $region28
        $region27: #{unet_forward.16} parent=23 // pred_region
          %s131 = sand.u32 %s40, 1
          %s132 = sand.u32 %s40, 1
          %s133 = smul.addr %s132, 288
          %s134 = scalar_lea.vmem [#allocation2], %s133
          %s135 = smul.u32 8, %s9
          %s136 = ssub.s32 25, %s135
          %p137 = scmp.lt.s32.totalorder %s136, 8
          %s138 = scalar_select %p137, %s136, 8
          %s139 = smul.u32 36, %s138
          %p140 = scmp.ne.s32.totalorder 0, %s139
          %s141 = smul.addr %s135, 4
          %s142 = scalar_lea.vmem %s1, %s141
          %s143 = smul.u32 %s138, 4
          // Predicated region
          $region29: #{unet_forward.16} parent=27 // pred_check
            %p144 = pneg %p140
          $region30: #{unet_forward.16} parent=27 // pred_check_branch
            %146 = sbr.rel (%p144) target = $region32
          $region31: #{unet_forward.16} parent=27 // pred_region
            %p147 = scmp.lt.u32.totalorder %s143, 8
            %p148 = pneg %p147
            // Predicated region
            $region33: #{unet_forward.16} parent=31 // pred_check
              _
            $region34: #{unet_forward.16} parent=31 // pred_check_branch
              %150 = sbr.rel (%p147) target = $region36
            $region35: #{unet_forward.16} parent=31 // pred_region
              %s182 = sand.u32 %s143, 7
              %p183 = scmp.eq.s32.totalorder %s182, 0
              // Predicated region
              $region48: #{unet_forward.16} parent=35 // pred_check
                %p184 = pneg %p183
              $region49: #{unet_forward.16} parent=35 // pred_check_branch
                %186 = sbr.rel (%p184) target = $region51
              $region50: #{unet_forward.16} parent=35 // pred_region
                %s187 = sshrl.u32 %s143, 3
                %s188 = sshrl.u32 %s187, 2
                // While loop
                $region52: #{unet_forward.16} parent=50 // loop_pre_header
                  _
                $region53: #{unet_forward.16} parent=50 // loop_header
                  %s190 = sphi 0, %s192
                  %p191 = scmp.ge.s32.totalorder %s190, %s188
                  %s195 = sphi 0, %s272
                  %s196 = sphi %s142, %s275
                  %s197 = sphi %s134, %s276
                $region54: #{unet_forward.16} parent=50 // loop_header_branch
                  %194 = sbr.rel (%p191) target = $region58
                $region55: #{unet_forward.16} parent=50 // loop_body
                  %v198 = vld [vmem:[%s196] sm:$0xff]
                  %199 = vst [vmem:[%s197] sm:$0xff] %v198
                  %v200 = vld [vmem:[%s196 + $0x8] sm:$0xff]
                  %201 = vst [vmem:[%s197 + $0x8] sm:$0xff] %v200
                  %v202 = vld [vmem:[%s196 + $0x10] sm:$0xff]
                  %203 = vst [vmem:[%s197 + $0x10] sm:$0xff] %v202
                  %v204 = vld [vmem:[%s196 + $0x18] sm:$0xff]
                  %205 = vst [vmem:[%s197 + $0x18] sm:$0xff] %v204
                  %v206 = vld [vmem:[%s196 + $0x64] sm:$0xff]
                  %207 = vst [vmem:[%s197 + $0x20] sm:$0xff] %v206
                  %v208 = vld [vmem:[%s196 + $0x6c] sm:$0xff]
                  %209 = vst [vmem:[%s197 + $0x28] sm:$0xff] %v208
                  %v210 = vld [vmem:[%s196 + $0x74] sm:$0xff]
                  %211 = vst [vmem:[%s197 + $0x30] sm:$0xff] %v210
                  %v212 = vld [vmem:[%s196 + $0x7c] sm:$0xff]
                  %213 = vst [vmem:[%s197 + $0x38] sm:$0xff] %v212
                  %v214 = vld [vmem:[%s196 + $0xc8] sm:$0xff]
                  %215 = vst [vmem:[%s197 + $0x40] sm:$0xff] %v214
                  %v216 = vld [vmem:[%s196 + $0xd0] sm:$0xff]
                  %217 = vst [vmem:[%s197 + $0x48] sm:$0xff] %v216
                  %v218 = vld [vmem:[%s196 + $0xd8] sm:$0xff]
                  %219 = vst [vmem:[%s197 + $0x50] sm:$0xff] %v218
                  %v220 = vld [vmem:[%s196 + $0xe0] sm:$0xff]
                  %221 = vst [vmem:[%s197 + $0x58] sm:$0xff] %v220
                  %v222 = vld [vmem:[%s196 + $0x12c] sm:$0xff]
                  %223 = vst [vmem:[%s197 + $0x60] sm:$0xff] %v222
                  %v224 = vld [vmem:[%s196 + $0x134] sm:$0xff]
                  %225 = vst [vmem:[%s197 + $0x68] sm:$0xff] %v224
                  %v226 = vld [vmem:[%s196 + $0x13c] sm:$0xff]
                  %227 = vst [vmem:[%s197 + $0x70] sm:$0xff] %v226
                  %v228 = vld [vmem:[%s196 + $0x144] sm:$0xff]
                  %229 = vst [vmem:[%s197 + $0x78] sm:$0xff] %v228
                  %v230 = vld [vmem:[%s196 + $0x190] sm:$0xff]
                  %231 = vst [vmem:[%s197 + $0x80] sm:$0xff] %v230
                  %v232 = vld [vmem:[%s196 + $0x198] sm:$0xff]
                  %233 = vst [vmem:[%s197 + $0x88] sm:$0xff] %v232
                  %v234 = vld [vmem:[%s196 + $0x1a0] sm:$0xff]
                  %235 = vst [vmem:[%s197 + $0x90] sm:$0xff] %v234
                  %v236 = vld [vmem:[%s196 + $0x1a8] sm:$0xff]
                  %237 = vst [vmem:[%s197 + $0x98] sm:$0xff] %v236
                  %v238 = vld [vmem:[%s196 + $0x1f4] sm:$0xff]
                  %239 = vst [vmem:[%s197 + $0xa0] sm:$0xff] %v238
                  %v240 = vld [vmem:[%s196 + $0x1fc] sm:$0xff]
                  %241 = vst [vmem:[%s197 + $0xa8] sm:$0xff] %v240
                  %v242 = vld [vmem:[%s196 + $0x204] sm:$0xff]
                  %243 = vst [vmem:[%s197 + $0xb0] sm:$0xff] %v242
                  %v244 = vld [vmem:[%s196 + $0x20c] sm:$0xff]
                  %245 = vst [vmem:[%s197 + $0xb8] sm:$0xff] %v244
                  %v246 = vld [vmem:[%s196 + $0x258] sm:$0xff]
                  %247 = vst [vmem:[%s197 + $0xc0] sm:$0xff] %v246
                  %v248 = vld [vmem:[%s196 + $0x260] sm:$0xff]
                  %249 = vst [vmem:[%s197 + $0xc8] sm:$0xff] %v248
                  %v250 = vld [vmem:[%s196 + $0x268] sm:$0xff]
                  %251 = vst [vmem:[%s197 + $0xd0] sm:$0xff] %v250
                  %v252 = vld [vmem:[%s196 + $0x270] sm:$0xff]
                  %253 = vst [vmem:[%s197 + $0xd8] sm:$0xff] %v252
                  %v254 = vld [vmem:[%s196 + $0x2bc] sm:$0xff]
                  %255 = vst [vmem:[%s197 + $0xe0] sm:$0xff] %v254
                  %v256 = vld [vmem:[%s196 + $0x2c4] sm:$0xff]
                  %257 = vst [vmem:[%s197 + $0xe8] sm:$0xff] %v256
                  %v258 = vld [vmem:[%s196 + $0x2cc] sm:$0xff]
                  %259 = vst [vmem:[%s197 + $0xf0] sm:$0xff] %v258
                  %v260 = vld [vmem:[%s196 + $0x2d4] sm:$0xff]
                  %261 = vst [vmem:[%s197 + $0xf8] sm:$0xff] %v260
                  %v262 = vld [vmem:[%s196 + $0x320] sm:$0xff]
                  %263 = vst [vmem:[%s197 + $0x100] sm:$0xff] %v262
                  %v264 = vld [vmem:[%s196 + $0x328] sm:$0xff]
                  %265 = vst [vmem:[%s197 + $0x108] sm:$0xff] %v264
                  %v266 = vld [vmem:[%s196 + $0x330] sm:$0xff]
                  %267 = vst [vmem:[%s197 + $0x110] sm:$0xff] %v266
                  %v268 = vld [vmem:[%s196 + $0x338] sm:$0xff]
                  %269 = vst [vmem:[%s197 + $0x118] sm:$0xff] %v268
                  %s270 = sadd.s32 1, %s195
                  %p271 = scmp.ge.s32.totalorder %s270, %s188
                  %s272 = scalar_select %p271, 0, %s270
                  %s273 = smul.u32 %s272, 32
                  %s274 = smul.u32 %s272, 32
                  %s275 = scalar_lea.vmem %s142, %s273
                  %s276 = scalar_lea.vmem %s134, %s274 [#allocation2]
                $region56: #{unet_forward.16} parent=50 // loop_footer
                  %s192 = sadd.s32 %s190, 1
                $region57: #{unet_forward.16} parent=50 // loop_footer_branch
                  %189 = sbr.rel target = $region53
                $region58: #{unet_forward.16} parent=50 // loop_exit
                  _
                %s277 = sshrl.u32 %s187, 2
                %s278 = sand.u32 %s187, 3
                %s279 = smul.u32 %s277, 4
                %s280 = smul.u32 8, %s279
                %s281 = scalar_lea.vmem %s142, %s280
                %s282 = smul.u32 8, %s279
                %s283 = scalar_lea.vmem %s134, %s282 [#allocation2]
                // While loop
                $region59: #{unet_forward.16} parent=50 // loop_pre_header
                  _
                $region60: #{unet_forward.16} parent=50 // loop_header
                  %s285 = sphi 0, %s287
                  %p286 = scmp.ge.s32.totalorder %s285, %s278
                  %s290 = sphi 0, %s313
                  %s291 = sphi %s281, %s316
                  %s292 = sphi %s283, %s317
                $region61: #{unet_forward.16} parent=50 // loop_header_branch
                  %289 = sbr.rel (%p286) target = $region65
                $region62: #{unet_forward.16} parent=50 // loop_body
                  %v293 = vld [vmem:[%s291] sm:$0xff]
                  %294 = vst [vmem:[%s292] sm:$0xff] %v293
                  %v295 = vld [vmem:[%s291 + $0x64] sm:$0xff]
                  %296 = vst [vmem:[%s292 + $0x20] sm:$0xff] %v295
                  %v297 = vld [vmem:[%s291 + $0xc8] sm:$0xff]
                  %298 = vst [vmem:[%s292 + $0x40] sm:$0xff] %v297
                  %v299 = vld [vmem:[%s291 + $0x12c] sm:$0xff]
                  %300 = vst [vmem:[%s292 + $0x60] sm:$0xff] %v299
                  %v301 = vld [vmem:[%s291 + $0x190] sm:$0xff]
                  %302 = vst [vmem:[%s292 + $0x80] sm:$0xff] %v301
                  %v303 = vld [vmem:[%s291 + $0x1f4] sm:$0xff]
                  %304 = vst [vmem:[%s292 + $0xa0] sm:$0xff] %v303
                  %v305 = vld [vmem:[%s291 + $0x258] sm:$0xff]
                  %306 = vst [vmem:[%s292 + $0xc0] sm:$0xff] %v305
                  %v307 = vld [vmem:[%s291 + $0x2bc] sm:$0xff]
                  %308 = vst [vmem:[%s292 + $0xe0] sm:$0xff] %v307
                  %v309 = vld [vmem:[%s291 + $0x320] sm:$0xff]
                  %310 = vst [vmem:[%s292 + $0x100] sm:$0xff] %v309
                  %s311 = sadd.s32 1, %s290
                  %p312 = scmp.ge.s32.totalorder %s311, %s278
                  %s313 = scalar_select %p312, 0, %s311
                  %s314 = smul.u32 %s313, 8
                  %s315 = smul.u32 %s313, 8
                  %s316 = scalar_lea.vmem %s281, %s314
                  %s317 = scalar_lea.vmem %s283, %s315 [#allocation2]
                $region63: #{unet_forward.16} parent=50 // loop_footer
                  %s287 = sadd.s32 %s285, 1
                $region64: #{unet_forward.16} parent=50 // loop_footer_branch
                  %284 = sbr.rel target = $region60
                $region65: #{unet_forward.16} parent=50 // loop_exit
                  _
              $region51: #{unet_forward.16} parent=35 // pred_fallthru
                _
              %p318 = pneg %p183
              // Predicated region
              $region66: #{unet_forward.16} parent=35 // pred_check
                _
              $region67: #{unet_forward.16} parent=35 // pred_check_branch
                %320 = sbr.rel (%p183) target = $region69
              $region68: #{unet_forward.16} parent=35 // pred_region
                %s321 = sand.u32 %s143, 7
                %s322 = ssub.s32 %s143, %s321
                %s323 = scalar_lea.vmem %s142, %s322
                %s324 = ssub.s32 %s143, %s321
                %s325 = scalar_lea.vmem %s134, %s324 [#allocation2]
                %s326 = sshrl.u32 %s143, 3
                %s327 = sshrl.u32 %s326, 2
                // While loop
                $region70: #{unet_forward.16} parent=68 // loop_pre_header
                  _
                $region71: #{unet_forward.16} parent=68 // loop_header
                  %s329 = sphi 0, %s331
                  %p330 = scmp.ge.s32.totalorder %s329, %s327
                  %s334 = sphi 0, %s411
                  %s335 = sphi %s142, %s414
                  %s336 = sphi %s134, %s415
                $region72: #{unet_forward.16} parent=68 // loop_header_branch
                  %333 = sbr.rel (%p330) target = $region76
                $region73: #{unet_forward.16} parent=68 // loop_body
                  %v337 = vld [vmem:[%s335] sm:$0xff]
                  %338 = vst [vmem:[%s336] sm:$0xff] %v337
                  %v339 = vld [vmem:[%s335 + $0x8] sm:$0xff]
                  %340 = vst [vmem:[%s336 + $0x8] sm:$0xff] %v339
                  %v341 = vld [vmem:[%s335 + $0x10] sm:$0xff]
                  %342 = vst [vmem:[%s336 + $0x10] sm:$0xff] %v341
                  %v343 = vld [vmem:[%s335 + $0x18] sm:$0xff]
                  %344 = vst [vmem:[%s336 + $0x18] sm:$0xff] %v343
                  %v345 = vld [vmem:[%s335 + $0x64] sm:$0xff]
                  %346 = vst [vmem:[%s336 + $0x20] sm:$0xff] %v345
                  %v347 = vld [vmem:[%s335 + $0x6c] sm:$0xff]
                  %348 = vst [vmem:[%s336 + $0x28] sm:$0xff] %v347
                  %v349 = vld [vmem:[%s335 + $0x74] sm:$0xff]
                  %350 = vst [vmem:[%s336 + $0x30] sm:$0xff] %v349
                  %v351 = vld [vmem:[%s335 + $0x7c] sm:$0xff]
                  %352 = vst [vmem:[%s336 + $0x38] sm:$0xff] %v351
                  %v353 = vld [vmem:[%s335 + $0xc8] sm:$0xff]
                  %354 = vst [vmem:[%s336 + $0x40] sm:$0xff] %v353
                  %v355 = vld [vmem:[%s335 + $0xd0] sm:$0xff]
                  %356 = vst [vmem:[%s336 + $0x48] sm:$0xff] %v355
                  %v357 = vld [vmem:[%s335 + $0xd8] sm:$0xff]
                  %358 = vst [vmem:[%s336 + $0x50] sm:$0xff] %v357
                  %v359 = vld [vmem:[%s335 + $0xe0] sm:$0xff]
                  %360 = vst [vmem:[%s336 + $0x58] sm:$0xff] %v359
                  %v361 = vld [vmem:[%s335 + $0x12c] sm:$0xff]
                  %362 = vst [vmem:[%s336 + $0x60] sm:$0xff] %v361
                  %v363 = vld [vmem:[%s335 + $0x134] sm:$0xff]
                  %364 = vst [vmem:[%s336 + $0x68] sm:$0xff] %v363
                  %v365 = vld [vmem:[%s335 + $0x13c] sm:$0xff]
                  %366 = vst [vmem:[%s336 + $0x70] sm:$0xff] %v365
                  %v367 = vld [vmem:[%s335 + $0x144] sm:$0xff]
                  %368 = vst [vmem:[%s336 + $0x78] sm:$0xff] %v367
                  %v369 = vld [vmem:[%s335 + $0x190] sm:$0xff]
                  %370 = vst [vmem:[%s336 + $0x80] sm:$0xff] %v369
                  %v371 = vld [vmem:[%s335 + $0x198] sm:$0xff]
                  %372 = vst [vmem:[%s336 + $0x88] sm:$0xff] %v371
                  %v373 = vld [vmem:[%s335 + $0x1a0] sm:$0xff]
                  %374 = vst [vmem:[%s336 + $0x90] sm:$0xff] %v373
                  %v375 = vld [vmem:[%s335 + $0x1a8] sm:$0xff]
                  %376 = vst [vmem:[%s336 + $0x98] sm:$0xff] %v375
                  %v377 = vld [vmem:[%s335 + $0x1f4] sm:$0xff]
                  %378 = vst [vmem:[%s336 + $0xa0] sm:$0xff] %v377
                  %v379 = vld [vmem:[%s335 + $0x1fc] sm:$0xff]
                  %380 = vst [vmem:[%s336 + $0xa8] sm:$0xff] %v379
                  %v381 = vld [vmem:[%s335 + $0x204] sm:$0xff]
                  %382 = vst [vmem:[%s336 + $0xb0] sm:$0xff] %v381
                  %v383 = vld [vmem:[%s335 + $0x20c] sm:$0xff]
                  %384 = vst [vmem:[%s336 + $0xb8] sm:$0xff] %v383
                  %v385 = vld [vmem:[%s335 + $0x258] sm:$0xff]
                  %386 = vst [vmem:[%s336 + $0xc0] sm:$0xff] %v385
                  %v387 = vld [vmem:[%s335 + $0x260] sm:$0xff]
                  %388 = vst [vmem:[%s336 + $0xc8] sm:$0xff] %v387
                  %v389 = vld [vmem:[%s335 + $0x268] sm:$0xff]
                  %390 = vst [vmem:[%s336 + $0xd0] sm:$0xff] %v389
                  %v391 = vld [vmem:[%s335 + $0x270] sm:$0xff]
                  %392 = vst [vmem:[%s336 + $0xd8] sm:$0xff] %v391
                  %v393 = vld [vmem:[%s335 + $0x2bc] sm:$0xff]
                  %394 = vst [vmem:[%s336 + $0xe0] sm:$0xff] %v393
                  %v395 = vld [vmem:[%s335 + $0x2c4] sm:$0xff]
                  %396 = vst [vmem:[%s336 + $0xe8] sm:$0xff] %v395
                  %v397 = vld [vmem:[%s335 + $0x2cc] sm:$0xff]
                  %398 = vst [vmem:[%s336 + $0xf0] sm:$0xff] %v397
                  %v399 = vld [vmem:[%s335 + $0x2d4] sm:$0xff]
                  %400 = vst [vmem:[%s336 + $0xf8] sm:$0xff] %v399
                  %v401 = vld [vmem:[%s335 + $0x320] sm:$0xff]
                  %402 = vst [vmem:[%s336 + $0x100] sm:$0xff] %v401
                  %v403 = vld [vmem:[%s335 + $0x328] sm:$0xff]
                  %404 = vst [vmem:[%s336 + $0x108] sm:$0xff] %v403
                  %v405 = vld [vmem:[%s335 + $0x330] sm:$0xff]
                  %406 = vst [vmem:[%s336 + $0x110] sm:$0xff] %v405
                  %v407 = vld [vmem:[%s335 + $0x338] sm:$0xff]
                  %408 = vst [vmem:[%s336 + $0x118] sm:$0xff] %v407
                  %s409 = sadd.s32 1, %s334
                  %p410 = scmp.ge.s32.totalorder %s409, %s327
                  %s411 = scalar_select %p410, 0, %s409
                  %s412 = smul.u32 %s411, 32
                  %s413 = smul.u32 %s411, 32
                  %s414 = scalar_lea.vmem %s142, %s412
                  %s415 = scalar_lea.vmem %s134, %s413 [#allocation2]
                $region74: #{unet_forward.16} parent=68 // loop_footer
                  %s331 = sadd.s32 %s329, 1
                $region75: #{unet_forward.16} parent=68 // loop_footer_branch
                  %328 = sbr.rel target = $region71
                $region76: #{unet_forward.16} parent=68 // loop_exit
                  _
                %s416 = sshrl.u32 %s326, 2
                %s417 = sand.u32 %s326, 3
                %s418 = smul.u32 %s416, 4
                %s419 = smul.u32 8, %s418
                %s420 = scalar_lea.vmem %s142, %s419
                %s421 = smul.u32 8, %s418
                %s422 = scalar_lea.vmem %s134, %s421 [#allocation2]
                // While loop
                $region77: #{unet_forward.16} parent=68 // loop_pre_header
                  _
                $region78: #{unet_forward.16} parent=68 // loop_header
                  %s424 = sphi 0, %s426
                  %p425 = scmp.ge.s32.totalorder %s424, %s417
                  %s429 = sphi 0, %s452
                  %s430 = sphi %s420, %s455
                  %s431 = sphi %s422, %s456
                $region79: #{unet_forward.16} parent=68 // loop_header_branch
                  %428 = sbr.rel (%p425) target = $region83
                $region80: #{unet_forward.16} parent=68 // loop_body
                  %v432 = vld [vmem:[%s430] sm:$0xff]
                  %433 = vst [vmem:[%s431] sm:$0xff] %v432
                  %v434 = vld [vmem:[%s430 + $0x64] sm:$0xff]
                  %435 = vst [vmem:[%s431 + $0x20] sm:$0xff] %v434
                  %v436 = vld [vmem:[%s430 + $0xc8] sm:$0xff]
                  %437 = vst [vmem:[%s431 + $0x40] sm:$0xff] %v436
                  %v438 = vld [vmem:[%s430 + $0x12c] sm:$0xff]
                  %439 = vst [vmem:[%s431 + $0x60] sm:$0xff] %v438
                  %v440 = vld [vmem:[%s430 + $0x190] sm:$0xff]
                  %441 = vst [vmem:[%s431 + $0x80] sm:$0xff] %v440
                  %v442 = vld [vmem:[%s430 + $0x1f4] sm:$0xff]
                  %443 = vst [vmem:[%s431 + $0xa0] sm:$0xff] %v442
                  %v444 = vld [vmem:[%s430 + $0x258] sm:$0xff]
                  %445 = vst [vmem:[%s431 + $0xc0] sm:$0xff] %v444
                  %v446 = vld [vmem:[%s430 + $0x2bc] sm:$0xff]
                  %447 = vst [vmem:[%s431 + $0xe0] sm:$0xff] %v446
                  %v448 = vld [vmem:[%s430 + $0x320] sm:$0xff]
                  %449 = vst [vmem:[%s431 + $0x100] sm:$0xff] %v448
                  %s450 = sadd.s32 1, %s429
                  %p451 = scmp.ge.s32.totalorder %s450, %s417
                  %s452 = scalar_select %p451, 0, %s450
                  %s453 = smul.u32 %s452, 8
                  %s454 = smul.u32 %s452, 8
                  %s455 = scalar_lea.vmem %s420, %s453
                  %s456 = scalar_lea.vmem %s422, %s454 [#allocation2]
                $region81: #{unet_forward.16} parent=68 // loop_footer
                  %s426 = sadd.s32 %s424, 1
                $region82: #{unet_forward.16} parent=68 // loop_footer_branch
                  %423 = sbr.rel target = $region78
                $region83: #{unet_forward.16} parent=68 // loop_exit
                  _
                %s457 = sshll.u32 1, %s321
                %s458 = ssub.s32 %s457, 1
                loop: start=0, step=1, limit=1
                $region84: #{unet_forward.16} parent=68 // loop_pre_header
                  _
                $region85: #{unet_forward.16} parent=68 // loop_header
                  %s460 = sphi 0, %s464
                  %p461 = scmp.ge.s32.totalorder %s460, 1
                  %s465 = sphi %s323, %s323
                  %s466 = sphi %s325, %s325
                $region86: #{unet_forward.16} parent=68 // loop_header_branch
                  %463 = sbr.rel (%p461) target = $region90
                $region87: #{unet_forward.16} parent=68 // loop_body
                  %v467 = vld [vmem:[%s465] sm:%s458]
                  %468 = vst [vmem:[%s466] sm:%s458] %v467
                  %v469 = vld [vmem:[%s465 + $0x64] sm:%s458]
                  %470 = vst [vmem:[%s466 + $0x20] sm:%s458] %v469
                  %v471 = vld [vmem:[%s465 + $0xc8] sm:%s458]
                  %472 = vst [vmem:[%s466 + $0x40] sm:%s458] %v471
                  %v473 = vld [vmem:[%s465 + $0x12c] sm:%s458]
                  %474 = vst [vmem:[%s466 + $0x60] sm:%s458] %v473
                  %v475 = vld [vmem:[%s465 + $0x190] sm:%s458]
                  %476 = vst [vmem:[%s466 + $0x80] sm:%s458] %v475
                  %v477 = vld [vmem:[%s465 + $0x1f4] sm:%s458]
                  %478 = vst [vmem:[%s466 + $0xa0] sm:%s458] %v477
                  %v479 = vld [vmem:[%s465 + $0x258] sm:%s458]
                  %480 = vst [vmem:[%s466 + $0xc0] sm:%s458] %v479
                  %v481 = vld [vmem:[%s465 + $0x2bc] sm:%s458]
                  %482 = vst [vmem:[%s466 + $0xe0] sm:%s458] %v481
                  %v483 = vld [vmem:[%s465 + $0x320] sm:%s458]
                  %484 = vst [vmem:[%s466 + $0x100] sm:%s458] %v483
                $region88: #{unet_forward.16} parent=68 // loop_footer
                  %s464 = sadd.s32 1, %s460
                $region89: #{unet_forward.16} parent=68 // loop_footer_branch
                  %459 = sbr.rel target = $region85
                $region90: #{unet_forward.16} parent=68 // loop_exit
                  _
              $region69: #{unet_forward.16} parent=35 // pred_fallthru
                _
            $region36: #{unet_forward.16} parent=31 // pred_fallthru
              _
            // Predicated region
            $region37: #{unet_forward.16} parent=31 // pred_check
              %p151 = pneg %p147
            $region38: #{unet_forward.16} parent=31 // pred_check_branch
              %153 = sbr.rel (%p151) target = $region40
            $region39: #{unet_forward.16} parent=31 // pred_region
              %s154 = sshll.u32 1, %s143
              %s155 = ssub.s32 %s154, 1
              loop: start=0, step=1, limit=1
              $region41: #{unet_forward.16} parent=39 // loop_pre_header
                _
              $region42: #{unet_forward.16} parent=39 // loop_header
                %s157 = sphi 0, %s161
                %p158 = scmp.ge.s32.totalorder %s157, 1
                %s162 = sphi %s142, %s142
                %s163 = sphi %s134, %s134
              $region43: #{unet_forward.16} parent=39 // loop_header_branch
                %160 = sbr.rel (%p158) target = $region47
              $region44: #{unet_forward.16} parent=39 // loop_body
                %v164 = vld [vmem:[%s162] sm:%s155]
                %165 = vst [vmem:[%s163] sm:%s155] %v164
                %v166 = vld [vmem:[%s162 + $0x64] sm:%s155]
                %167 = vst [vmem:[%s163 + $0x20] sm:%s155] %v166
                %v168 = vld [vmem:[%s162 + $0xc8] sm:%s155]
                %169 = vst [vmem:[%s163 + $0x40] sm:%s155] %v168
                %v170 = vld [vmem:[%s162 + $0x12c] sm:%s155]
                %171 = vst [vmem:[%s163 + $0x60] sm:%s155] %v170
                %v172 = vld [vmem:[%s162 + $0x190] sm:%s155]
                %173 = vst [vmem:[%s163 + $0x80] sm:%s155] %v172
                %v174 = vld [vmem:[%s162 + $0x1f4] sm:%s155]
                %175 = vst [vmem:[%s163 + $0xa0] sm:%s155] %v174
                %v176 = vld [vmem:[%s162 + $0x258] sm:%s155]
                %177 = vst [vmem:[%s163 + $0xc0] sm:%s155] %v176
                %v178 = vld [vmem:[%s162 + $0x2bc] sm:%s155]
                %179 = vst [vmem:[%s163 + $0xe0] sm:%s155] %v178
                %v180 = vld [vmem:[%s162 + $0x320] sm:%s155]
                %181 = vst [vmem:[%s163 + $0x100] sm:%s155] %v180
              $region45: #{unet_forward.16} parent=39 // loop_footer
                %s161 = sadd.s32 1, %s157
              $region46: #{unet_forward.16} parent=39 // loop_footer_branch
                %156 = sbr.rel target = $region42
              $region47: #{unet_forward.16} parent=39 // loop_exit
                _
            $region40: #{unet_forward.16} parent=31 // pred_fallthru
              _
          $region32: #{unet_forward.16} parent=27 // pred_fallthru
            _
          %485 = vnop
        $region28: #{unet_forward.16} parent=23 // pred_fallthru
          _
      $region24: #{unet_forward.16} parent=5 // pred_fallthru
        _
      %p486 = scmp.le.s32.totalorder 1, %s9
      %p487 = scmp.lt.s32.totalorder %s9, 5
      %p488 = pnand %p486, %p487
      %p489 = pneg %p488
      // Predicated region
      $region91: #{unet_forward.16} parent=5 // pred_check
        _
      $region92: #{unet_forward.16} parent=5 // pred_check_branch
        %491 = sbr.rel (%p488) target = $region94
      $region93: #{unet_forward.16} parent=5 // pred_region
        %s492 = ssub.s32 %s9, 1
        %s493 = sand.u32 %s43, 1
        %s494 = sand.u32 %s43, 1
        %s495 = smul.addr %s494, 288
        %s496 = scalar_lea.vmem [#allocation2], %s495
        // Predicated region
        $region95: #{unet_forward.16} parent=93 // pred_check
          %p497 = pneg %p56
        $region96: #{unet_forward.16} parent=93 // pred_check_branch
          %499 = sbr.rel (%p497) target = $region98
        $region97: #{unet_forward.16} parent=93 // pred_region
          _
        $region98: #{unet_forward.16} parent=93 // pred_fallthru
          _
        %p500 = pneg %p30
        %p501 = pneg %p27
        %s502 = sand.u32 %s43, 1
        %s503 = sand.u32 %s43, 1
        %s504 = smul.addr %s503, 288
        %s505 = scalar_lea.vmem [#allocation2], %s504
        %p506 = pneg %p56
        %p507 = pneg %p53
        %p508 = pneg %p77
        %p509 = pneg %p74
        %p510 = pneg %p103
        %p511 = pneg %p100
        %s512 = sand.u32 %s90, 1
        %s513 = sand.u32 %s90, 1
        %s514 = smul.addr %s513, 32
        %s515 = scalar_lea.vmem [#allocation3], %s514
        %s516 = smul.u32 8, %s14
        %s517 = ssub.s32 25, %s516
        %p518 = scmp.lt.s32.totalorder %s517, 8
        %s519 = scalar_select %p518, %s517, 8
        %s520 = smul.u32 36, %s519
        %s521 = smul.u32 8, %s14
        %s522 = ssub.s32 25, %s521
        %p523 = scmp.lt.s32.totalorder %s522, 8
        %s524 = scalar_select %p523, %s522, 8
        %s525 = smul.u32 4, %s524
        %v527 = vld [vmem:[%s0] sm:$0xf]
        %v528 = vld [vmem:[%s496] sm:$0xff]
        %v529 = vld [vmem:[%s496 + $0x8] sm:$0xff]
        %v530 = vld [vmem:[%s496 + $0x10] sm:$0xff]
        %v531 = vld [vmem:[%s496 + $0x18] sm:$0xff]
        %v532 = vld [vmem:[%s496 + $0x20] sm:$0xff]
        %v533 = vld [vmem:[%s496 + $0x28] sm:$0xff]
        %v534 = vld [vmem:[%s496 + $0x30] sm:$0xff]
        %v535 = vld [vmem:[%s496 + $0x38] sm:$0xff]
        %v536 = vld [vmem:[%s496 + $0x40] sm:$0xff]
        %v537 = vld [vmem:[%s496 + $0x48] sm:$0xff]
        %v538 = vld [vmem:[%s496 + $0x50] sm:$0xff]
        %v539 = vld [vmem:[%s496 + $0x58] sm:$0xff]
        %v540 = vld [vmem:[%s496 + $0x60] sm:$0xff]
        %v541 = vld [vmem:[%s496 + $0x68] sm:$0xff]
        %v542 = vld [vmem:[%s496 + $0x70] sm:$0xff]
        %v543 = vld [vmem:[%s496 + $0x78] sm:$0xff]
        %v544 = vld [vmem:[%s496 + $0x80] sm:$0xff]
        %v545 = vld [vmem:[%s496 + $0x88] sm:$0xff]
        %v546 = vld [vmem:[%s496 + $0x90] sm:$0xff]
        %v547 = vld [vmem:[%s496 + $0x98] sm:$0xff]
        %v548 = vld [vmem:[%s496 + $0xa0] sm:$0xff]
        %v549 = vld [vmem:[%s496 + $0xa8] sm:$0xff]
        %v550 = vld [vmem:[%s496 + $0xb0] sm:$0xff]
        %v551 = vld [vmem:[%s496 + $0xb8] sm:$0xff]
        %v552 = vld [vmem:[%s496 + $0xc0] sm:$0xff]
        %v553 = vld [vmem:[%s496 + $0xc8] sm:$0xff]
        %v554 = vld [vmem:[%s496 + $0xd0] sm:$0xff]
        %v555 = vld [vmem:[%s496 + $0xd8] sm:$0xff]
        %v556 = vld [vmem:[%s496 + $0xe0] sm:$0xff]
        %v557 = vld [vmem:[%s496 + $0xe8] sm:$0xff]
        %v558 = vld [vmem:[%s496 + $0xf0] sm:$0xff]
        %v559 = vld [vmem:[%s496 + $0xf8] sm:$0xff]
        %v560 = vld [vmem:[%s496 + $0x100] sm:$0xff]
        %v561 = vld [vmem:[%s496 + $0x108] sm:$0xff]
        %v562 = vld [vmem:[%s496 + $0x110] sm:$0xff]
        %v563 = vld [vmem:[%s496 + $0x118] sm:$0xff]
        %v564 = vld [vmem:[%s2] sm:$0xff]
        %566 = vset.pattern.permute.xlu0 0
        %567 = vperm.xlu0 %566, %v564
        %v568 = vpop.permute.xlu0 %567
        %v606 = vunpack.c.l.b16 %v528
        %v607 = vunpack.c.h.b16 %v528
        %v608 = vunpack.c.l.b16 %v529
        %v609 = vunpack.c.h.b16 %v529
        %v610 = vunpack.c.l.b16 %v530
        %v611 = vunpack.c.h.b16 %v530
        %v612 = vunpack.c.l.b16 %v531
        %v613 = vunpack.c.h.b16 %v531
        %v614 = vunpack.c.l.b16 %v532
        %v615 = vunpack.c.h.b16 %v532
        %v616 = vunpack.c.l.b16 %v533
        %v617 = vunpack.c.h.b16 %v533
        %v618 = vunpack.c.l.b16 %v534
        %v619 = vunpack.c.h.b16 %v534
        %v620 = vunpack.c.l.b16 %v535
        %v621 = vunpack.c.h.b16 %v535
        %v622 = vunpack.c.l.b16 %v536
        %v623 = vunpack.c.h.b16 %v536
        %v624 = vunpack.c.l.b16 %v537
        %v625 = vunpack.c.h.b16 %v537
        %v626 = vunpack.c.l.b16 %v538
        %v627 = vunpack.c.h.b16 %v538
        %v628 = vunpack.c.l.b16 %v539
        %v629 = vunpack.c.h.b16 %v539
        %v630 = vunpack.c.l.b16 %v540
        %v631 = vunpack.c.h.b16 %v540
        %v632 = vunpack.c.l.b16 %v541
        %v633 = vunpack.c.h.b16 %v541
        %v634 = vunpack.c.l.b16 %v542
        %v635 = vunpack.c.h.b16 %v542
        %v636 = vunpack.c.l.b16 %v543
        %v637 = vunpack.c.h.b16 %v543
        %v638 = vunpack.c.l.b16 %v544
        %v639 = vunpack.c.h.b16 %v544
        %v640 = vunpack.c.l.b16 %v545
        %v641 = vunpack.c.h.b16 %v545
        %v642 = vunpack.c.l.b16 %v546
        %v643 = vunpack.c.h.b16 %v546
        %v644 = vunpack.c.l.b16 %v547
        %v645 = vunpack.c.h.b16 %v547
        %v646 = vunpack.c.l.b16 %v548
        %v647 = vunpack.c.h.b16 %v548
        %v648 = vunpack.c.l.b16 %v549
        %v649 = vunpack.c.h.b16 %v549
        %v650 = vunpack.c.l.b16 %v550
        %v651 = vunpack.c.h.b16 %v550
        %v652 = vunpack.c.l.b16 %v551
        %v653 = vunpack.c.h.b16 %v551
        %v654 = vunpack.c.l.b16 %v552
        %v655 = vunpack.c.h.b16 %v552
        %v656 = vunpack.c.l.b16 %v553
        %v657 = vunpack.c.h.b16 %v553
        %v658 = vunpack.c.l.b16 %v554
        %v659 = vunpack.c.h.b16 %v554
        %v660 = vunpack.c.l.b16 %v555
        %v661 = vunpack.c.h.b16 %v555
        %v662 = vunpack.c.l.b16 %v556
        %v663 = vunpack.c.h.b16 %v556
        %v664 = vunpack.c.l.b16 %v557
        %v665 = vunpack.c.h.b16 %v557
        %v666 = vunpack.c.l.b16 %v558
        %v667 = vunpack.c.h.b16 %v558
        %v668 = vunpack.c.l.b16 %v559
        %v669 = vunpack.c.h.b16 %v559
        %v670 = vunpack.c.l.b16 %v560
        %v671 = vunpack.c.h.b16 %v560
        %v672 = vunpack.c.l.b16 %v561
        %v673 = vunpack.c.h.b16 %v561
        %v674 = vunpack.c.l.b16 %v562
        %v675 = vunpack.c.h.b16 %v562
        %v676 = vunpack.c.l.b16 %v563
        %v677 = vunpack.c.h.b16 %v563
        %v678 = vpack.c.b16 %v614, %v606
        %v679 = vpack.c.b16 %v615, %v607
        %v680 = vpack.c.b16 %v616, %v608
        %v681 = vpack.c.b16 %v617, %v609
        %v682 = vpack.c.b16 %v618, %v610
        %v683 = vpack.c.b16 %v619, %v611
        %v684 = vpack.c.b16 %v620, %v612
        %v685 = vpack.c.b16 %v621, %v613
        %v686 = vpack.c.b16 %v630, %v622
        %v687 = vpack.c.b16 %v631, %v623
        %v688 = vpack.c.b16 %v632, %v624
        %v689 = vpack.c.b16 %v633, %v625
        %v690 = vpack.c.b16 %v634, %v626
        %v691 = vpack.c.b16 %v635, %v627
        %v692 = vpack.c.b16 %v636, %v628
        %v693 = vpack.c.b16 %v637, %v629
        %v694 = vpack.c.b16 %v646, %v638
        %v695 = vpack.c.b16 %v647, %v639
        %v696 = vpack.c.b16 %v648, %v640
        %v697 = vpack.c.b16 %v649, %v641
        %v698 = vpack.c.b16 %v650, %v642
        %v699 = vpack.c.b16 %v651, %v643
        %v700 = vpack.c.b16 %v652, %v644
        %v701 = vpack.c.b16 %v653, %v645
        %v702 = vpack.c.b16 %v662, %v654
        %v703 = vpack.c.b16 %v663, %v655
        %v704 = vpack.c.b16 %v664, %v656
        %v705 = vpack.c.b16 %v665, %v657
        %v706 = vpack.c.b16 %v666, %v658
        %v707 = vpack.c.b16 %v667, %v659
        %v708 = vpack.c.b16 %v668, %v660
        %v709 = vpack.c.b16 %v669, %v661
        %v710 = vpack.c.b16 %v670, %v670
        %v711 = vpack.c.b16 %v671, %v671
        %v712 = vpack.c.b16 %v672, %v672
        %v713 = vpack.c.b16 %v673, %v673
        %v714 = vpack.c.b16 %v674, %v674
        %v715 = vpack.c.b16 %v675, %v675
        %v716 = vpack.c.b16 %v676, %v676
        %v717 = vpack.c.b16 %v677, %v677
        %vm750 = vcmask 588800
        %v752 = vsel %vm750, %v527, 0
        %vm754 = vcmask 1043456
        %v756 = vsel %vm754, %v710, 0
        %v759 = vsel %vm754, %v711, 0
        %v762 = vsel %vm754, %v712, 0
        %v765 = vsel %vm754, %v713, 0
        %v768 = vsel %vm754, %v714, 0
        %v771 = vsel %vm754, %v715, 0
        %v774 = vsel %vm754, %v716, 0
        %v777 = vsel %vm754, %v717, 0
        %779 = vmatpush.bf16.msra.mxu0 0
        %780 = vmatpush.bf16.msra.mxu0 0
        %781 = vmatpush.bf16.msra.mxu0 0
        %782 = vmatpush.bf16.msra.mxu0 %v756
        %783 = vmatpush.bf16.msra.mxu0 %v702
        %784 = vmatpush.bf16.msra.mxu0 %v694
        %785 = vmatpush.bf16.msra.mxu0 %v686
        %786 = vmatpush.bf16.msra.mxu0 %v678
        %787 = vmatmul.bf16.gmra.mxu0 %v752
        %v788 = vpop.f32.mrf.mxu0
        %v789 = vadd.f32 %v568, %v788
        %v790 = vpop.f32.mrf.mxu0
        %791 = vdwg.mxu0
        %792 = vmatpush.bf16.msra.mxu0 0
        %793 = vmatpush.bf16.msra.mxu0 0
        %794 = vmatpush.bf16.msra.mxu0 0
        %795 = vmatpush.bf16.msra.mxu0 %v759
        %796 = vmatpush.bf16.msra.mxu0 %v703
        %797 = vmatpush.bf16.msra.mxu0 %v695
        %798 = vmatpush.bf16.msra.mxu0 %v687
        %799 = vmatpush.bf16.msra.mxu0 %v679
        %800 = vmatmul.bf16.gmra.mxu0 %v752
        %v801 = vpop.f32.mrf.mxu0
        %v802 = vadd.f32 %v568, %v801
        %v803 = vpop.f32.mrf.mxu0
        %804 = vdwg.mxu0
        %805 = vmatpush.bf16.msra.mxu0 0
        %806 = vmatpush.bf16.msra.mxu0 0
        %807 = vmatpush.bf16.msra.mxu0 0
        %808 = vmatpush.bf16.msra.mxu0 %v762
        %809 = vmatpush.bf16.msra.mxu0 %v704
        %810 = vmatpush.bf16.msra.mxu0 %v696
        %811 = vmatpush.bf16.msra.mxu0 %v688
        %812 = vmatpush.bf16.msra.mxu0 %v680
        %813 = vmatmul.bf16.gmra.mxu0 %v752
        %v814 = vpop.f32.mrf.mxu0
        %v815 = vadd.f32 %v568, %v814
        %v816 = vpop.f32.mrf.mxu0
        %817 = vdwg.mxu0
        %818 = vmatpush.bf16.msra.mxu0 0
        %819 = vmatpush.bf16.msra.mxu0 0
        %820 = vmatpush.bf16.msra.mxu0 0
        %821 = vmatpush.bf16.msra.mxu0 %v765
        %822 = vmatpush.bf16.msra.mxu0 %v705
        %823 = vmatpush.bf16.msra.mxu0 %v697
        %824 = vmatpush.bf16.msra.mxu0 %v689
        %825 = vmatpush.bf16.msra.mxu0 %v681
        %826 = vmatmul.bf16.gmra.mxu0 %v752
        %v827 = vpop.f32.mrf.mxu0
        %v828 = vadd.f32 %v568, %v827
        %v829 = vpop.f32.mrf.mxu0
        %830 = vdwg.mxu0
        %831 = vmatpush.bf16.msra.mxu0 0
        %832 = vmatpush.bf16.msra.mxu0 0
        %833 = vmatpush.bf16.msra.mxu0 0
        %834 = vmatpush.bf16.msra.mxu0 %v768
        %835 = vmatpush.bf16.msra.mxu0 %v706
        %836 = vmatpush.bf16.msra.mxu0 %v698
        %837 = vmatpush.bf16.msra.mxu0 %v690
        %838 = vmatpush.bf16.msra.mxu0 %v682
        %839 = vmatmul.bf16.gmra.mxu0 %v752
        %v840 = vpop.f32.mrf.mxu0
        %v841 = vadd.f32 %v568, %v840
        %v842 = vpop.f32.mrf.mxu0
        %843 = vdwg.mxu0
        %844 = vmatpush.bf16.msra.mxu0 0
        %845 = vmatpush.bf16.msra.mxu0 0
        %846 = vmatpush.bf16.msra.mxu0 0
        %847 = vmatpush.bf16.msra.mxu0 %v771
        %848 = vmatpush.bf16.msra.mxu0 %v707
        %849 = vmatpush.bf16.msra.mxu0 %v699
        %850 = vmatpush.bf16.msra.mxu0 %v691
        %851 = vmatpush.bf16.msra.mxu0 %v683
        %852 = vmatmul.bf16.gmra.mxu0 %v752
        %v853 = vpop.f32.mrf.mxu0
        %v854 = vadd.f32 %v568, %v853
        %v855 = vpop.f32.mrf.mxu0
        %856 = vdwg.mxu0
        %857 = vmatpush.bf16.msra.mxu0 0
        %858 = vmatpush.bf16.msra.mxu0 0
        %859 = vmatpush.bf16.msra.mxu0 0
        %860 = vmatpush.bf16.msra.mxu0 %v774
        %861 = vmatpush.bf16.msra.mxu0 %v708
        %862 = vmatpush.bf16.msra.mxu0 %v700
        %863 = vmatpush.bf16.msra.mxu0 %v692
        %864 = vmatpush.bf16.msra.mxu0 %v684
        %865 = vmatmul.bf16.gmra.mxu0 %v752
        %v866 = vpop.f32.mrf.mxu0
        %v867 = vadd.f32 %v568, %v866
        %v868 = vpop.f32.mrf.mxu0
        %869 = vdwg.mxu0
        %870 = vmatpush.bf16.msra.mxu0 0
        %871 = vmatpush.bf16.msra.mxu0 0
        %872 = vmatpush.bf16.msra.mxu0 0
        %873 = vmatpush.bf16.msra.mxu0 %v777
        %874 = vmatpush.bf16.msra.mxu0 %v709
        %875 = vmatpush.bf16.msra.mxu0 %v701
        %876 = vmatpush.bf16.msra.mxu0 %v693
        %877 = vmatpush.bf16.msra.mxu0 %v685
        %878 = vmatmul.bf16.gmra.mxu0 %v752
        %v879 = vpop.f32.mrf.mxu0
        %v880 = vadd.f32 %v568, %v879
        %v881 = vpop.f32.mrf.mxu0
        %882 = vdwg.mxu0
        %v883 = vmax.f32 %v789, 0.0
        %v884 = vmax.f32 %v802, 0.0
        %v885 = vmax.f32 %v815, 0.0
        %v886 = vmax.f32 %v828, 0.0
        %v887 = vmax.f32 %v841, 0.0
        %v888 = vmax.f32 %v854, 0.0
        %v889 = vmax.f32 %v867, 0.0
        %v890 = vmax.f32 %v880, 0.0
        %v891 = vpack.c.bf16 %v884, %v883
        %v892 = vpack.c.bf16 %v886, %v885
        %v893 = vpack.c.bf16 %v888, %v887
        %v894 = vpack.c.bf16 %v890, %v889
        %895 = vst [vmem:[%s515] sm:$0xff] %v891
        %896 = vst [vmem:[%s515 + $0x8] sm:$0xff] %v892
        %897 = vst [vmem:[%s515 + $0x10] sm:$0xff] %v893
        %898 = vst [vmem:[%s515 + $0x18] sm:$0xff] %v894
        %s899 = sand.u32 %s90, 1
        %s900 = sand.u32 %s90, 1
        %s901 = smul.addr %s900, 32
        %s902 = scalar_lea.vmem [#allocation3], %s901
        // Predicated region
        $region99: #{unet_forward.16} parent=93 // pred_check
          %p903 = pneg %p100
        $region100: #{unet_forward.16} parent=93 // pred_check_branch
          %905 = sbr.rel (%p903) target = $region102
        $region101: #{unet_forward.16} parent=93 // pred_region
          %s906 = smul.u32 8, %s14
          %s907 = ssub.s32 25, %s906
          %p908 = scmp.lt.s32.totalorder %s907, 8
          %s909 = scalar_select %p908, %s907, 8
          %s910 = smul.u32 4, %s909
          %p911 = scmp.ne.s32.totalorder 0, %s910
          %s912 = smul.addr %s906, 4
          %s913 = scalar_lea.vmem %s3, %s912
          %s914 = smul.u32 %s909, 4
          // Predicated region
          $region103: #{unet_forward.16} parent=101 // pred_check
            %p915 = pneg %p911
          $region104: #{unet_forward.16} parent=101 // pred_check_branch
            %917 = sbr.rel (%p915) target = $region106
          $region105: #{unet_forward.16} parent=101 // pred_region
            %p918 = scmp.lt.u32.totalorder %s914, 8
            %p919 = pneg %p918
            // Predicated region
            $region107: #{unet_forward.16} parent=105 // pred_check
              _
            $region108: #{unet_forward.16} parent=105 // pred_check_branch
              %921 = sbr.rel (%p918) target = $region110
            $region109: #{unet_forward.16} parent=105 // pred_region
              %s937 = sand.u32 %s914, 7
              %p938 = scmp.eq.s32.totalorder %s937, 0
              // Predicated region
              $region122: #{unet_forward.16} parent=109 // pred_check
                %p939 = pneg %p938
              $region123: #{unet_forward.16} parent=109 // pred_check_branch
                %941 = sbr.rel (%p939) target = $region125
              $region124: #{unet_forward.16} parent=109 // pred_region
                %s942 = sshrl.u32 %s914, 3
                %s943 = sshrl.u32 %s942, 5
                // While loop
                $region126: #{unet_forward.16} parent=124 // loop_pre_header
                  _
                $region127: #{unet_forward.16} parent=124 // loop_header
                  %s945 = sphi 0, %s947
                  %p946 = scmp.ge.s32.totalorder %s945, %s943
                  %s950 = sphi 0, %s1019
                  %s951 = sphi %s902, %s1022
                  %s952 = sphi %s913, %s1023
                $region128: #{unet_forward.16} parent=124 // loop_header_branch
                  %949 = sbr.rel (%p946) target = $region132
                $region129: #{unet_forward.16} parent=124 // loop_body
                  %v953 = vld [vmem:[%s951] sm:$0xff]
                  %954 = vst [vmem:[%s952] sm:$0xff] %v953
                  %v955 = vld [vmem:[%s951 + $0x8] sm:$0xff]
                  %956 = vst [vmem:[%s952 + $0x8] sm:$0xff] %v955
                  %v957 = vld [vmem:[%s951 + $0x10] sm:$0xff]
                  %958 = vst [vmem:[%s952 + $0x10] sm:$0xff] %v957
                  %v959 = vld [vmem:[%s951 + $0x18] sm:$0xff]
                  %960 = vst [vmem:[%s952 + $0x18] sm:$0xff] %v959
                  %v961 = vld [vmem:[%s951 + $0x20] sm:$0xff]
                  %962 = vst [vmem:[%s952 + $0x20] sm:$0xff] %v961
                  %v963 = vld [vmem:[%s951 + $0x28] sm:$0xff]
                  %964 = vst [vmem:[%s952 + $0x28] sm:$0xff] %v963
                  %v965 = vld [vmem:[%s951 + $0x30] sm:$0xff]
                  %966 = vst [vmem:[%s952 + $0x30] sm:$0xff] %v965
                  %v967 = vld [vmem:[%s951 + $0x38] sm:$0xff]
                  %968 = vst [vmem:[%s952 + $0x38] sm:$0xff] %v967
                  %v969 = vld [vmem:[%s951 + $0x40] sm:$0xff]
                  %970 = vst [vmem:[%s952 + $0x40] sm:$0xff] %v969
                  %v971 = vld [vmem:[%s951 + $0x48] sm:$0xff]
                  %972 = vst [vmem:[%s952 + $0x48] sm:$0xff] %v971
                  %v973 = vld [vmem:[%s951 + $0x50] sm:$0xff]
                  %974 = vst [vmem:[%s952 + $0x50] sm:$0xff] %v973
                  %v975 = vld [vmem:[%s951 + $0x58] sm:$0xff]
                  %976 = vst [vmem:[%s952 + $0x58] sm:$0xff] %v975
                  %v977 = vld [vmem:[%s951 + $0x60] sm:$0xff]
                  %978 = vst [vmem:[%s952 + $0x60] sm:$0xff] %v977
                  %v979 = vld [vmem:[%s951 + $0x68] sm:$0xff]
                  %980 = vst [vmem:[%s952 + $0x68] sm:$0xff] %v979
                  %v981 = vld [vmem:[%s951 + $0x70] sm:$0xff]
                  %982 = vst [vmem:[%s952 + $0x70] sm:$0xff] %v981
                  %v983 = vld [vmem:[%s951 + $0x78] sm:$0xff]
                  %984 = vst [vmem:[%s952 + $0x78] sm:$0xff] %v983
                  %v985 = vld [vmem:[%s951 + $0x80] sm:$0xff]
                  %986 = vst [vmem:[%s952 + $0x80] sm:$0xff] %v985
                  %v987 = vld [vmem:[%s951 + $0x88] sm:$0xff]
                  %988 = vst [vmem:[%s952 + $0x88] sm:$0xff] %v987
                  %v989 = vld [vmem:[%s951 + $0x90] sm:$0xff]
                  %990 = vst [vmem:[%s952 + $0x90] sm:$0xff] %v989
                  %v991 = vld [vmem:[%s951 + $0x98] sm:$0xff]
                  %992 = vst [vmem:[%s952 + $0x98] sm:$0xff] %v991
                  %v993 = vld [vmem:[%s951 + $0xa0] sm:$0xff]
                  %994 = vst [vmem:[%s952 + $0xa0] sm:$0xff] %v993
                  %v995 = vld [vmem:[%s951 + $0xa8] sm:$0xff]
                  %996 = vst [vmem:[%s952 + $0xa8] sm:$0xff] %v995
                  %v997 = vld [vmem:[%s951 + $0xb0] sm:$0xff]
                  %998 = vst [vmem:[%s952 + $0xb0] sm:$0xff] %v997
                  %v999 = vld [vmem:[%s951 + $0xb8] sm:$0xff]
                  %1000 = vst [vmem:[%s952 + $0xb8] sm:$0xff] %v999
                  %v1001 = vld [vmem:[%s951 + $0xc0] sm:$0xff]
                  %1002 = vst [vmem:[%s952 + $0xc0] sm:$0xff] %v1001
                  %v1003 = vld [vmem:[%s951 + $0xc8] sm:$0xff]
                  %1004 = vst [vmem:[%s952 + $0xc8] sm:$0xff] %v1003
                  %v1005 = vld [vmem:[%s951 + $0xd0] sm:$0xff]
                  %1006 = vst [vmem:[%s952 + $0xd0] sm:$0xff] %v1005
                  %v1007 = vld [vmem:[%s951 + $0xd8] sm:$0xff]
                  %1008 = vst [vmem:[%s952 + $0xd8] sm:$0xff] %v1007
                  %v1009 = vld [vmem:[%s951 + $0xe0] sm:$0xff]
                  %1010 = vst [vmem:[%s952 + $0xe0] sm:$0xff] %v1009
                  %v1011 = vld [vmem:[%s951 + $0xe8] sm:$0xff]
                  %1012 = vst [vmem:[%s952 + $0xe8] sm:$0xff] %v1011
                  %v1013 = vld [vmem:[%s951 + $0xf0] sm:$0xff]
                  %1014 = vst [vmem:[%s952 + $0xf0] sm:$0xff] %v1013
                  %v1015 = vld [vmem:[%s951 + $0xf8] sm:$0xff]
                  %1016 = vst [vmem:[%s952 + $0xf8] sm:$0xff] %v1015
                  %s1017 = sadd.s32 1, %s950
                  %p1018 = scmp.ge.s32.totalorder %s1017, %s943
                  %s1019 = scalar_select %p1018, 0, %s1017
                  %s1020 = smul.u32 %s1019, 256
                  %s1021 = smul.u32 %s1019, 256
                  %s1022 = scalar_lea.vmem %s902, %s1020 [#allocation3]
                  %s1023 = scalar_lea.vmem %s913, %s1021
                $region130: #{unet_forward.16} parent=124 // loop_footer
                  %s947 = sadd.s32 %s945, 1
                $region131: #{unet_forward.16} parent=124 // loop_footer_branch
                  %944 = sbr.rel target = $region127
                $region132: #{unet_forward.16} parent=124 // loop_exit
                  _
                %s1024 = sshrl.u32 %s942, 5
                %s1025 = sand.u32 %s942, 31
                %s1026 = smul.u32 %s1024, 32
                %s1027 = smul.u32 8, %s1026
                %s1028 = scalar_lea.vmem %s902, %s1027 [#allocation3]
                %s1029 = smul.u32 8, %s1026
                %s1030 = scalar_lea.vmem %s913, %s1029
                // While loop
                $region133: #{unet_forward.16} parent=124 // loop_pre_header
                  _
                $region134: #{unet_forward.16} parent=124 // loop_header
                  %s1032 = sphi 0, %s1034
                  %p1033 = scmp.ge.s32.totalorder %s1032, %s1025
                  %s1037 = sphi 0, %s1044
                  %s1038 = sphi %s1028, %s1047
                  %s1039 = sphi %s1030, %s1048
                $region135: #{unet_forward.16} parent=124 // loop_header_branch
                  %1036 = sbr.rel (%p1033) target = $region139
                $region136: #{unet_forward.16} parent=124 // loop_body
                  %v1040 = vld [vmem:[%s1038] sm:$0xff]
                  %1041 = vst [vmem:[%s1039] sm:$0xff] %v1040
                  %s1042 = sadd.s32 1, %s1037
                  %p1043 = scmp.ge.s32.totalorder %s1042, %s1025
                  %s1044 = scalar_select %p1043, 0, %s1042
                  %s1045 = smul.u32 %s1044, 8
                  %s1046 = smul.u32 %s1044, 8
                  %s1047 = scalar_lea.vmem %s1028, %s1045 [#allocation3]
                  %s1048 = scalar_lea.vmem %s1030, %s1046
                $region137: #{unet_forward.16} parent=124 // loop_footer
                  %s1034 = sadd.s32 %s1032, 1
                $region138: #{unet_forward.16} parent=124 // loop_footer_branch
                  %1031 = sbr.rel target = $region134
                $region139: #{unet_forward.16} parent=124 // loop_exit
                  _
              $region125: #{unet_forward.16} parent=109 // pred_fallthru
                _
              %p1049 = pneg %p938
              // Predicated region
              $region140: #{unet_forward.16} parent=109 // pred_check
                _
              $region141: #{unet_forward.16} parent=109 // pred_check_branch
                %1051 = sbr.rel (%p938) target = $region143
              $region142: #{unet_forward.16} parent=109 // pred_region
                %s1052 = sand.u32 %s914, 7
                %s1053 = ssub.s32 %s914, %s1052
                %s1054 = scalar_lea.vmem %s902, %s1053 [#allocation3]
                %s1055 = ssub.s32 %s914, %s1052
                %s1056 = scalar_lea.vmem %s913, %s1055
                %s1057 = sshrl.u32 %s914, 3
                %s1058 = sshrl.u32 %s1057, 5
                // While loop
                $region144: #{unet_forward.16} parent=142 // loop_pre_header
                  _
                $region145: #{unet_forward.16} parent=142 // loop_header
                  %s1060 = sphi 0, %s1062
                  %p1061 = scmp.ge.s32.totalorder %s1060, %s1058
                  %s1065 = sphi 0, %s1134
                  %s1066 = sphi %s902, %s1137
                  %s1067 = sphi %s913, %s1138
                $region146: #{unet_forward.16} parent=142 // loop_header_branch
                  %1064 = sbr.rel (%p1061) target = $region150
                $region147: #{unet_forward.16} parent=142 // loop_body
                  %v1068 = vld [vmem:[%s1066] sm:$0xff]
                  %1069 = vst [vmem:[%s1067] sm:$0xff] %v1068
                  %v1070 = vld [vmem:[%s1066 + $0x8] sm:$0xff]
                  %1071 = vst [vmem:[%s1067 + $0x8] sm:$0xff] %v1070
                  %v1072 = vld [vmem:[%s1066 + $0x10] sm:$0xff]
                  %1073 = vst [vmem:[%s1067 + $0x10] sm:$0xff] %v1072
                  %v1074 = vld [vmem:[%s1066 + $0x18] sm:$0xff]
                  %1075 = vst [vmem:[%s1067 + $0x18] sm:$0xff] %v1074
                  %v1076 = vld [vmem:[%s1066 + $0x20] sm:$0xff]
                  %1077 = vst [vmem:[%s1067 + $0x20] sm:$0xff] %v1076
                  %v1078 = vld [vmem:[%s1066 + $0x28] sm:$0xff]
                  %1079 = vst [vmem:[%s1067 + $0x28] sm:$0xff] %v1078
                  %v1080 = vld [vmem:[%s1066 + $0x30] sm:$0xff]
                  %1081 = vst [vmem:[%s1067 + $0x30] sm:$0xff] %v1080
                  %v1082 = vld [vmem:[%s1066 + $0x38] sm:$0xff]
                  %1083 = vst [vmem:[%s1067 + $0x38] sm:$0xff] %v1082
                  %v1084 = vld [vmem:[%s1066 + $0x40] sm:$0xff]
                  %1085 = vst [vmem:[%s1067 + $0x40] sm:$0xff] %v1084
                  %v1086 = vld [vmem:[%s1066 + $0x48] sm:$0xff]
                  %1087 = vst [vmem:[%s1067 + $0x48] sm:$0xff] %v1086
                  %v1088 = vld [vmem:[%s1066 + $0x50] sm:$0xff]
                  %1089 = vst [vmem:[%s1067 + $0x50] sm:$0xff] %v1088
                  %v1090 = vld [vmem:[%s1066 + $0x58] sm:$0xff]
                  %1091 = vst [vmem:[%s1067 + $0x58] sm:$0xff] %v1090
                  %v1092 = vld [vmem:[%s1066 + $0x60] sm:$0xff]
                  %1093 = vst [vmem:[%s1067 + $0x60] sm:$0xff] %v1092
                  %v1094 = vld [vmem:[%s1066 + $0x68] sm:$0xff]
                  %1095 = vst [vmem:[%s1067 + $0x68] sm:$0xff] %v1094
                  %v1096 = vld [vmem:[%s1066 + $0x70] sm:$0xff]
                  %1097 = vst [vmem:[%s1067 + $0x70] sm:$0xff] %v1096
                  %v1098 = vld [vmem:[%s1066 + $0x78] sm:$0xff]
                  %1099 = vst [vmem:[%s1067 + $0x78] sm:$0xff] %v1098
                  %v1100 = vld [vmem:[%s1066 + $0x80] sm:$0xff]
                  %1101 = vst [vmem:[%s1067 + $0x80] sm:$0xff] %v1100
                  %v1102 = vld [vmem:[%s1066 + $0x88] sm:$0xff]
                  %1103 = vst [vmem:[%s1067 + $0x88] sm:$0xff] %v1102
                  %v1104 = vld [vmem:[%s1066 + $0x90] sm:$0xff]
                  %1105 = vst [vmem:[%s1067 + $0x90] sm:$0xff] %v1104
                  %v1106 = vld [vmem:[%s1066 + $0x98] sm:$0xff]
                  %1107 = vst [vmem:[%s1067 + $0x98] sm:$0xff] %v1106
                  %v1108 = vld [vmem:[%s1066 + $0xa0] sm:$0xff]
                  %1109 = vst [vmem:[%s1067 + $0xa0] sm:$0xff] %v1108
                  %v1110 = vld [vmem:[%s1066 + $0xa8] sm:$0xff]
                  %1111 = vst [vmem:[%s1067 + $0xa8] sm:$0xff] %v1110
                  %v1112 = vld [vmem:[%s1066 + $0xb0] sm:$0xff]
                  %1113 = vst [vmem:[%s1067 + $0xb0] sm:$0xff] %v1112
                  %v1114 = vld [vmem:[%s1066 + $0xb8] sm:$0xff]
                  %1115 = vst [vmem:[%s1067 + $0xb8] sm:$0xff] %v1114
                  %v1116 = vld [vmem:[%s1066 + $0xc0] sm:$0xff]
                  %1117 = vst [vmem:[%s1067 + $0xc0] sm:$0xff] %v1116
                  %v1118 = vld [vmem:[%s1066 + $0xc8] sm:$0xff]
                  %1119 = vst [vmem:[%s1067 + $0xc8] sm:$0xff] %v1118
                  %v1120 = vld [vmem:[%s1066 + $0xd0] sm:$0xff]
                  %1121 = vst [vmem:[%s1067 + $0xd0] sm:$0xff] %v1120
                  %v1122 = vld [vmem:[%s1066 + $0xd8] sm:$0xff]
                  %1123 = vst [vmem:[%s1067 + $0xd8] sm:$0xff] %v1122
                  %v1124 = vld [vmem:[%s1066 + $0xe0] sm:$0xff]
                  %1125 = vst [vmem:[%s1067 + $0xe0] sm:$0xff] %v1124
                  %v1126 = vld [vmem:[%s1066 + $0xe8] sm:$0xff]
                  %1127 = vst [vmem:[%s1067 + $0xe8] sm:$0xff] %v1126
                  %v1128 = vld [vmem:[%s1066 + $0xf0] sm:$0xff]
                  %1129 = vst [vmem:[%s1067 + $0xf0] sm:$0xff] %v1128
                  %v1130 = vld [vmem:[%s1066 + $0xf8] sm:$0xff]
                  %1131 = vst [vmem:[%s1067 + $0xf8] sm:$0xff] %v1130
                  %s1132 = sadd.s32 1, %s1065
                  %p1133 = scmp.ge.s32.totalorder %s1132, %s1058
                  %s1134 = scalar_select %p1133, 0, %s1132
                  %s1135 = smul.u32 %s1134, 256
                  %s1136 = smul.u32 %s1134, 256
                  %s1137 = scalar_lea.vmem %s902, %s1135 [#allocation3]
                  %s1138 = scalar_lea.vmem %s913, %s1136
                $region148: #{unet_forward.16} parent=142 // loop_footer
                  %s1062 = sadd.s32 %s1060, 1
                $region149: #{unet_forward.16} parent=142 // loop_footer_branch
                  %1059 = sbr.rel target = $region145
                $region150: #{unet_forward.16} parent=142 // loop_exit
                  _
                %s1139 = sshrl.u32 %s1057, 5
                %s1140 = sand.u32 %s1057, 31
                %s1141 = smul.u32 %s1139, 32
                %s1142 = smul.u32 8, %s1141
                %s1143 = scalar_lea.vmem %s902, %s1142 [#allocation3]
                %s1144 = smul.u32 8, %s1141
                %s1145 = scalar_lea.vmem %s913, %s1144
                // While loop
                $region151: #{unet_forward.16} parent=142 // loop_pre_header
                  _
                $region152: #{unet_forward.16} parent=142 // loop_header
                  %s1147 = sphi 0, %s1149
                  %p1148 = scmp.ge.s32.totalorder %s1147, %s1140
                  %s1152 = sphi 0, %s1159
                  %s1153 = sphi %s1143, %s1162
                  %s1154 = sphi %s1145, %s1163
                $region153: #{unet_forward.16} parent=142 // loop_header_branch
                  %1151 = sbr.rel (%p1148) target = $region157
                $region154: #{unet_forward.16} parent=142 // loop_body
                  %v1155 = vld [vmem:[%s1153] sm:$0xff]
                  %1156 = vst [vmem:[%s1154] sm:$0xff] %v1155
                  %s1157 = sadd.s32 1, %s1152
                  %p1158 = scmp.ge.s32.totalorder %s1157, %s1140
                  %s1159 = scalar_select %p1158, 0, %s1157
                  %s1160 = smul.u32 %s1159, 8
                  %s1161 = smul.u32 %s1159, 8
                  %s1162 = scalar_lea.vmem %s1143, %s1160 [#allocation3]
                  %s1163 = scalar_lea.vmem %s1145, %s1161
                $region155: #{unet_forward.16} parent=142 // loop_footer
                  %s1149 = sadd.s32 %s1147, 1
                $region156: #{unet_forward.16} parent=142 // loop_footer_branch
                  %1146 = sbr.rel target = $region152
                $region157: #{unet_forward.16} parent=142 // loop_exit
                  _
                %s1164 = sshll.u32 1, %s1052
                %s1165 = ssub.s32 %s1164, 1
                loop: start=0, step=1, limit=1
                $region158: #{unet_forward.16} parent=142 // loop_pre_header
                  _
                $region159: #{unet_forward.16} parent=142 // loop_header
                  %s1167 = sphi 0, %s1171
                  %p1168 = scmp.ge.s32.totalorder %s1167, 1
                  %s1172 = sphi %s1054, %s1054
                  %s1173 = sphi %s1056, %s1056
                $region160: #{unet_forward.16} parent=142 // loop_header_branch
                  %1170 = sbr.rel (%p1168) target = $region164
                $region161: #{unet_forward.16} parent=142 // loop_body
                  %v1174 = vld [vmem:[%s1172] sm:%s1165]
                  %1175 = vst [vmem:[%s1173] sm:%s1165] %v1174
                $region162: #{unet_forward.16} parent=142 // loop_footer
                  %s1171 = sadd.s32 1, %s1167
                $region163: #{unet_forward.16} parent=142 // loop_footer_branch
                  %1166 = sbr.rel target = $region159
                $region164: #{unet_forward.16} parent=142 // loop_exit
                  _
              $region143: #{unet_forward.16} parent=109 // pred_fallthru
                _
            $region110: #{unet_forward.16} parent=105 // pred_fallthru
              _
            // Predicated region
            $region111: #{unet_forward.16} parent=105 // pred_check
              %p922 = pneg %p918
            $region112: #{unet_forward.16} parent=105 // pred_check_branch
              %924 = sbr.rel (%p922) target = $region114
            $region113: #{unet_forward.16} parent=105 // pred_region
              %s925 = sshll.u32 1, %s914
              %s926 = ssub.s32 %s925, 1
              loop: start=0, step=1, limit=1
              $region115: #{unet_forward.16} parent=113 // loop_pre_header
                _
              $region116: #{unet_forward.16} parent=113 // loop_header
                %s928 = sphi 0, %s932
                %p929 = scmp.ge.s32.totalorder %s928, 1
                %s933 = sphi %s902, %s902
                %s934 = sphi %s913, %s913
              $region117: #{unet_forward.16} parent=113 // loop_header_branch
                %931 = sbr.rel (%p929) target = $region121
              $region118: #{unet_forward.16} parent=113 // loop_body
                %v935 = vld [vmem:[%s933] sm:%s926]
                %936 = vst [vmem:[%s934] sm:%s926] %v935
              $region119: #{unet_forward.16} parent=113 // loop_footer
                %s932 = sadd.s32 1, %s928
              $region120: #{unet_forward.16} parent=113 // loop_footer_branch
                %927 = sbr.rel target = $region116
              $region121: #{unet_forward.16} parent=113 // loop_exit
                _
            $region114: #{unet_forward.16} parent=105 // pred_fallthru
              _
          $region106: #{unet_forward.16} parent=101 // pred_fallthru
            _
          %1176 = vnop
        $region102: #{unet_forward.16} parent=93 // pred_fallthru
          _
      $region94: #{unet_forward.16} parent=5 // pred_fallthru
        _
      %p1177 = scmp.le.s32.totalorder 2, %s9
      // Predicated region
      $region165: #{unet_forward.16} parent=5 // pred_check
        %p1178 = pneg %p1177
      $region166: #{unet_forward.16} parent=5 // pred_check_branch
        %1180 = sbr.rel (%p1178) target = $region168
      $region167: #{unet_forward.16} parent=5 // pred_region
        %s1181 = ssub.s32 %s9, 2
        // Predicated region
        $region169: #{unet_forward.16} parent=167 // pred_check
          %p1182 = pneg %p106
        $region170: #{unet_forward.16} parent=167 // pred_check_branch
          %1184 = sbr.rel (%p1182) target = $region172
        $region171: #{unet_forward.16} parent=167 // pred_region
          %s1185 = sand.u32 %s91, 1
          %s1186 = sand.u32 %s91, 1
          %s1187 = smul.addr %s1186, 32
          %s1188 = scalar_lea.vmem [#allocation3], %s1187
        $region172: #{unet_forward.16} parent=167 // pred_fallthru
          _
      $region168: #{unet_forward.16} parent=5 // pred_fallthru
        _
    $region6: #{unet_forward.16} parent=1 // loop_footer
      %s13 = sadd.s32 1, %s9
    $region7: #{unet_forward.16} parent=1 // loop_footer_branch
      %8 = sbr.rel target = $region3
    $region8: #{unet_forward.16} parent=1 // loop_exit
      _

// kernel: unet_forward.17
$region0: #{unet_forward.17}
  #allocation0 [shape = 'u32[]', space=smem, size = 0x4, offset = 0x4, fixed_abs, tag = 'smem constant byte address 0x4 - core index']
  #allocation1 [shape = 'u32[72,128]{1,0:T(1,128)}', space=vmem, size = 0x9000, scoped, tag = 'internal scratch']
  %s0 = inlined_call_operand.vmem [shape: bf16[8,800], index: 0, kind: input, shape index: {}]
  %s1 = inlined_call_operand.vmem [shape: bf16[8,800], index: 1, kind: input, shape index: {}]
  %s2 = inlined_call_operand.vmem [shape: bf16[8,800], index: 2, kind: input, shape index: {}]
  %s3 = inlined_call_operand.vmem [shape: bf16[8,800], index: 3, kind: input, shape index: {}]
  %s4 = inlined_call_operand.vmem [shape: bf16[8,800], index: 4, kind: output, shape index: {}]
  %s5 = sld [smem:[#allocation0]]
  $region26: #{unet_forward.17} parent=0
    _
  %s7 = ssub.s32 1, %s5
  %s8 = scalar_select 0, %s7, %s5
  // Predicated region
  $region2: #{unet_forward.17} parent=0 // pred_check
    _
  $region3: #{unet_forward.17} parent=0 // pred_check_branch
    %10 = sbr.rel (0) target = $region5
  $region4: #{unet_forward.17} parent=0 // pred_region
    _
  $region5: #{unet_forward.17} parent=0 // pred_fallthru
    _
  // Predicated region
  $region6: #{unet_forward.17} parent=0 // pred_check
    _
  $region7: #{unet_forward.17} parent=0 // pred_check_branch
    %12 = sbr.rel (0) target = $region9
  $region8: #{unet_forward.17} parent=0 // pred_region
    _
  $region9: #{unet_forward.17} parent=0 // pred_fallthru
    _
  // Predicated region
  $region10: #{unet_forward.17} parent=0 // pred_check
    _
  $region11: #{unet_forward.17} parent=0 // pred_check_branch
    %14 = sbr.rel (0) target = $region13
  $region12: #{unet_forward.17} parent=0 // pred_region
    _
  $region13: #{unet_forward.17} parent=0 // pred_fallthru
    _
  // Predicated region
  $region14: #{unet_forward.17} parent=0 // pred_check
    _
  $region15: #{unet_forward.17} parent=0 // pred_check_branch
    %16 = sbr.rel (0) target = $region17
  $region16: #{unet_forward.17} parent=0 // pred_region
    _
  $region17: #{unet_forward.17} parent=0 // pred_fallthru
    _
  %v17 = vld [vmem:[%s0] sm:$0xff]
  %v18 = vld [vmem:[%s0 + $0x8] sm:$0xff]
  %v19 = vld [vmem:[%s0 + $0x10] sm:$0xff]
  %v20 = vld [vmem:[%s0 + $0x18] sm:$0xf]
  %v21 = vld [vmem:[%s1] sm:$0xff]
  %v22 = vld [vmem:[%s1 + $0x8] sm:$0xff]
  %v23 = vld [vmem:[%s1 + $0x10] sm:$0xff]
  %v24 = vld [vmem:[%s1 + $0x18] sm:$0xf]
  %v25 = vunpack.c.l.bf16 %v17
  %v26 = vunpack.c.h.bf16 %v17
  %v27 = vunpack.c.l.bf16 %v18
  %v28 = vunpack.c.h.bf16 %v18
  %v29 = vunpack.c.l.bf16 %v19
  %v30 = vunpack.c.h.bf16 %v19
  %v31 = vunpack.c.l.bf16 %v20
  %v32 = vunpack.c.l.bf16 %v21
  %v33 = vunpack.c.h.bf16 %v21
  %v34 = vunpack.c.l.bf16 %v22
  %v35 = vunpack.c.h.bf16 %v22
  %v36 = vunpack.c.l.bf16 %v23
  %v37 = vunpack.c.h.bf16 %v23
  %v38 = vunpack.c.l.bf16 %v24
  %v39 = vmax.f32 %v25, %v32
  %v40 = vmax.f32 %v26, %v33
  %v41 = vmax.f32 %v27, %v34
  %v42 = vmax.f32 %v28, %v35
  %v43 = vmax.f32 %v29, %v36
  %v44 = vmax.f32 %v30, %v37
  %v45 = vmax.f32 %v31, %v38
  %v46 = vpack.c.bf16 %v40, %v39
  %v47 = vpack.c.bf16 %v42, %v41
  %v48 = vpack.c.bf16 %v44, %v43
  %v49 = vpack.c.bf16 %v45, %v45
  %v50 = vld [vmem:[%s2] sm:$0xff]
  %v51 = vld [vmem:[%s2 + $0x8] sm:$0xff]
  %v52 = vld [vmem:[%s2 + $0x10] sm:$0xff]
  %v53 = vld [vmem:[%s2 + $0x18] sm:$0xf]
  %v54 = vld [vmem:[%s3] sm:$0xff]
  %v55 = vld [vmem:[%s3 + $0x8] sm:$0xff]
  %v56 = vld [vmem:[%s3 + $0x10] sm:$0xff]
  %v57 = vld [vmem:[%s3 + $0x18] sm:$0xf]
  %v58 = vunpack.c.l.bf16 %v50
  %v59 = vunpack.c.h.bf16 %v50
  %v60 = vunpack.c.l.bf16 %v51
  %v61 = vunpack.c.h.bf16 %v51
  %v62 = vunpack.c.l.bf16 %v52
  %v63 = vunpack.c.h.bf16 %v52
  %v64 = vunpack.c.l.bf16 %v53
  %v65 = vunpack.c.l.bf16 %v54
  %v66 = vunpack.c.h.bf16 %v54
  %v67 = vunpack.c.l.bf16 %v55
  %v68 = vunpack.c.h.bf16 %v55
  %v69 = vunpack.c.l.bf16 %v56
  %v70 = vunpack.c.h.bf16 %v56
  %v71 = vunpack.c.l.bf16 %v57
  %v72 = vmax.f32 %v58, %v65
  %v73 = vmax.f32 %v59, %v66
  %v74 = vmax.f32 %v60, %v67
  %v75 = vmax.f32 %v61, %v68
  %v76 = vmax.f32 %v62, %v69
  %v77 = vmax.f32 %v63, %v70
  %v78 = vmax.f32 %v64, %v71
  %v79 = vpack.c.bf16 %v73, %v72
  %v80 = vpack.c.bf16 %v75, %v74
  %v81 = vpack.c.bf16 %v77, %v76
  %v82 = vpack.c.bf16 %v78, %v78
  %v83 = vunpack.c.l.bf16 %v46
  %v84 = vunpack.c.h.bf16 %v46
  %v85 = vunpack.c.l.bf16 %v47
  %v86 = vunpack.c.h.bf16 %v47
  %v87 = vunpack.c.l.bf16 %v48
  %v88 = vunpack.c.h.bf16 %v48
  %v89 = vunpack.c.l.bf16 %v49
  %v90 = vunpack.c.l.bf16 %v79
  %v91 = vunpack.c.h.bf16 %v79
  %v92 = vunpack.c.l.bf16 %v80
  %v93 = vunpack.c.h.bf16 %v80
  %v94 = vunpack.c.l.bf16 %v81
  %v95 = vunpack.c.h.bf16 %v81
  %v96 = vunpack.c.l.bf16 %v82
  %v97 = vmax.f32 %v83, %v90
  %v98 = vmax.f32 %v84, %v91
  %v99 = vmax.f32 %v85, %v92
  %v100 = vmax.f32 %v86, %v93
  %v101 = vmax.f32 %v87, %v94
  %v102 = vmax.f32 %v88, %v95
  %v103 = vmax.f32 %v89, %v96
  %v104 = vpack.c.bf16 %v98, %v97
  %v105 = vpack.c.bf16 %v100, %v99
  %v106 = vpack.c.bf16 %v102, %v101
  %v107 = vpack.c.bf16 %v103, %v103
  %108 = vst [vmem:[%s4] sm:$0xff] %v104
  %109 = vst [vmem:[%s4 + $0x8] sm:$0xff] %v105
  %110 = vst [vmem:[%s4 + $0x10] sm:$0xff] %v106
  %vm111 = vcmask 257024
  %112 = vst.msk [vmem:[%s4 + $0x18] sm:$0xf] %vm111, %v107
  // Predicated region
  $region18: #{unet_forward.17} parent=0 // pred_check
    _
  $region19: #{unet_forward.17} parent=0 // pred_check_branch
    %114 = sbr.rel (0) target = $region21
  $region20: #{unet_forward.17} parent=0 // pred_region
    _
  $region21: #{unet_forward.17} parent=0 // pred_fallthru
    _
  // Predicated region
  $region22: #{unet_forward.17} parent=0 // pred_check
    _
  $region23: #{unet_forward.17} parent=0 // pred_check_branch
    %116 = sbr.rel (0) target = $region25
  $region24: #{unet_forward.17} parent=0 // pred_region
    _
  $region25: #{unet_forward.17} parent=0 // pred_fallthru
    _

// kernel: unet_forward.18
$region0: #{unet_forward.18}
  #allocation0 [shape = 'u32[]', space=smem, size = 0x4, offset = 0x4, fixed_abs, tag = 'smem constant byte address 0x4 - core index']
  #allocation1 [shape = 'u32[72,128]{1,0:T(1,128)}', space=vmem, size = 0x9000, scoped, tag = 'internal scratch']
  %s0 = inlined_call_operand.vmem [shape: bf16[16,72], index: 0, kind: input, shape index: {}]
  %s1 = inlined_call_operand.vmem [shape: bf16[72,648], index: 1, kind: input, shape index: {}]
  %s2 = inlined_call_operand.vmem [shape: f32[16,1], index: 2, kind: input, shape index: {}]
  %s3 = inlined_call_operand.vmem [shape: bf16[16,648], index: 3, kind: output, shape index: {}]
  %s4 = sld [smem:[#allocation0]]
  $region22: #{unet_forward.18} parent=0
    _
  %s6 = ssub.s32 1, %s4
  %s7 = scalar_select 0, %s6, %s4
  // Predicated region
  $region2: #{unet_forward.18} parent=0 // pred_check
    _
  $region3: #{unet_forward.18} parent=0 // pred_check_branch
    %9 = sbr.rel (0) target = $region5
  $region4: #{unet_forward.18} parent=0 // pred_region
    _
  $region5: #{unet_forward.18} parent=0 // pred_fallthru
    _
  // Predicated region
  $region6: #{unet_forward.18} parent=0 // pred_check
    _
  $region7: #{unet_forward.18} parent=0 // pred_check_branch
    %11 = sbr.rel (0) target = $region9
  $region8: #{unet_forward.18} parent=0 // pred_region
    _
  $region9: #{unet_forward.18} parent=0 // pred_fallthru
    _
  // Predicated region
  $region10: #{unet_forward.18} parent=0 // pred_check
    _
  $region11: #{unet_forward.18} parent=0 // pred_check_branch
    %13 = sbr.rel (0) target = $region13
  $region12: #{unet_forward.18} parent=0 // pred_region
    _
  $region13: #{unet_forward.18} parent=0 // pred_fallthru
    _
  %v15 = vld [vmem:[%s0] sm:$0xf]
  %v16 = vld [vmem:[%s0 + $0x4] sm:$0xf]
  %v17 = vld [vmem:[%s1] sm:$0xff]
  %v18 = vld [vmem:[%s1 + $0x8] sm:$0xff]
  %v19 = vld [vmem:[%s1 + $0x10] sm:$0xff]
  %v20 = vld [vmem:[%s1 + $0x18] sm:$0xff]
  %v21 = vld [vmem:[%s1 + $0x20] sm:$0xff]
  %v22 = vld [vmem:[%s1 + $0x28] sm:$0xff]
  %v23 = vld [vmem:[%s1 + $0x30] sm:$0xff]
  %v24 = vld [vmem:[%s1 + $0x38] sm:$0xff]
  %v25 = vld [vmem:[%s1 + $0x40] sm:$0xff]
  %v26 = vld [vmem:[%s1 + $0x48] sm:$0xff]
  %v27 = vld [vmem:[%s1 + $0x50] sm:$0xff]
  %v28 = vld [vmem:[%s1 + $0x58] sm:$0xff]
  %v29 = vld [vmem:[%s1 + $0x60] sm:$0xff]
  %v30 = vld [vmem:[%s1 + $0x68] sm:$0xff]
  %v31 = vld [vmem:[%s1 + $0x70] sm:$0xff]
  %v32 = vld [vmem:[%s1 + $0x78] sm:$0xff]
  %v33 = vld [vmem:[%s1 + $0x80] sm:$0xff]
  %v34 = vld [vmem:[%s1 + $0x88] sm:$0xff]
  %v35 = vld [vmem:[%s1 + $0x90] sm:$0xff]
  %v36 = vld [vmem:[%s1 + $0x98] sm:$0xff]
  %v37 = vld [vmem:[%s1 + $0xa0] sm:$0xff]
  %v38 = vld [vmem:[%s1 + $0xa8] sm:$0xff]
  %v39 = vld [vmem:[%s1 + $0xb0] sm:$0xff]
  %v40 = vld [vmem:[%s1 + $0xb8] sm:$0xff]
  %v41 = vld [vmem:[%s1 + $0xc0] sm:$0xff]
  %v42 = vld [vmem:[%s1 + $0xc8] sm:$0xff]
  %v43 = vld [vmem:[%s1 + $0xd0] sm:$0xff]
  %v44 = vld [vmem:[%s2] sm:$0xff]
  %v45 = vld [vmem:[%s2 + $0x8] sm:$0xff]
  %47 = vset.pattern.permute.xlu0 0
  %48 = vperm.xlu0 %47, %v44
  %v49 = vpop.permute.xlu0 %48
  %52 = vset.pattern.permute.xlu0 0
  %53 = vperm.xlu0 %52, %v45
  %v54 = vpop.permute.xlu0 %53
  %v58 = vunpack.c.l.b16 %v15
  %v59 = vunpack.c.l.b16 %v16
  %v60 = vpack.c.b16 %v59, %v58
  %v88 = vunpack.c.l.b16 %v17
  %v89 = vunpack.c.h.b16 %v17
  %v90 = vunpack.c.l.b16 %v18
  %v91 = vunpack.c.h.b16 %v18
  %v92 = vunpack.c.l.b16 %v19
  %v93 = vunpack.c.h.b16 %v19
  %v94 = vunpack.c.l.b16 %v20
  %v95 = vunpack.c.h.b16 %v20
  %v96 = vunpack.c.l.b16 %v21
  %v97 = vunpack.c.h.b16 %v21
  %v98 = vunpack.c.l.b16 %v22
  %v99 = vunpack.c.h.b16 %v22
  %v100 = vunpack.c.l.b16 %v23
  %v101 = vunpack.c.h.b16 %v23
  %v102 = vunpack.c.l.b16 %v24
  %v103 = vunpack.c.h.b16 %v24
  %v104 = vunpack.c.l.b16 %v25
  %v105 = vunpack.c.h.b16 %v25
  %v106 = vunpack.c.l.b16 %v26
  %v107 = vunpack.c.h.b16 %v26
  %v108 = vunpack.c.l.b16 %v27
  %v109 = vunpack.c.h.b16 %v27
  %v110 = vunpack.c.l.b16 %v28
  %v111 = vunpack.c.h.b16 %v28
  %v112 = vunpack.c.l.b16 %v29
  %v113 = vunpack.c.h.b16 %v29
  %v114 = vunpack.c.l.b16 %v30
  %v115 = vunpack.c.h.b16 %v30
  %v116 = vunpack.c.l.b16 %v31
  %v117 = vunpack.c.h.b16 %v31
  %v118 = vunpack.c.l.b16 %v32
  %v119 = vunpack.c.h.b16 %v32
  %v120 = vunpack.c.l.b16 %v33
  %v121 = vunpack.c.h.b16 %v33
  %v122 = vunpack.c.l.b16 %v34
  %v123 = vunpack.c.h.b16 %v34
  %v124 = vunpack.c.l.b16 %v35
  %v125 = vunpack.c.h.b16 %v35
  %v126 = vunpack.c.l.b16 %v36
  %v127 = vunpack.c.h.b16 %v36
  %v128 = vunpack.c.l.b16 %v37
  %v129 = vunpack.c.h.b16 %v37
  %v130 = vunpack.c.l.b16 %v38
  %v131 = vunpack.c.h.b16 %v38
  %v132 = vunpack.c.l.b16 %v39
  %v133 = vunpack.c.h.b16 %v39
  %v134 = vunpack.c.l.b16 %v40
  %v135 = vunpack.c.h.b16 %v40
  %v136 = vunpack.c.l.b16 %v41
  %v137 = vunpack.c.h.b16 %v41
  %v138 = vunpack.c.l.b16 %v42
  %v139 = vunpack.c.h.b16 %v42
  %v140 = vunpack.c.l.b16 %v43
  %v141 = vunpack.c.h.b16 %v43
  %v142 = vpack.c.b16 %v94, %v88
  %v143 = vpack.c.b16 %v95, %v89
  %v144 = vpack.c.b16 %v96, %v90
  %v145 = vpack.c.b16 %v97, %v91
  %v146 = vpack.c.b16 %v98, %v92
  %v147 = vpack.c.b16 %v99, %v93
  %v148 = vpack.c.b16 %v106, %v100
  %v149 = vpack.c.b16 %v107, %v101
  %v150 = vpack.c.b16 %v108, %v102
  %v151 = vpack.c.b16 %v109, %v103
  %v152 = vpack.c.b16 %v110, %v104
  %v153 = vpack.c.b16 %v111, %v105
  %v154 = vpack.c.b16 %v118, %v112
  %v155 = vpack.c.b16 %v119, %v113
  %v156 = vpack.c.b16 %v120, %v114
  %v157 = vpack.c.b16 %v121, %v115
  %v158 = vpack.c.b16 %v122, %v116
  %v159 = vpack.c.b16 %v123, %v117
  %v160 = vpack.c.b16 %v130, %v124
  %v161 = vpack.c.b16 %v131, %v125
  %v162 = vpack.c.b16 %v132, %v126
  %v163 = vpack.c.b16 %v133, %v127
  %v164 = vpack.c.b16 %v134, %v128
  %v165 = vpack.c.b16 %v135, %v129
  %v166 = vpack.c.b16 %v136, %v136
  %v167 = vpack.c.b16 %v137, %v137
  %v168 = vpack.c.b16 %v138, %v138
  %v169 = vpack.c.b16 %v139, %v139
  %v170 = vpack.c.b16 %v140, %v140
  %v171 = vpack.c.b16 %v141, %v141
  %vm196 = vcmask 588800
  %v198 = vsel %vm196, %v60, 0
  %vm200 = vcmask 1043456
  %v202 = vsel %vm200, %v166, 0
  %v205 = vsel %vm200, %v167, 0
  %v208 = vsel %vm200, %v168, 0
  %v211 = vsel %vm200, %v169, 0
  %v214 = vsel %vm200, %v170, 0
  %v217 = vsel %vm200, %v171, 0
  %219 = vmatpush.bf16.msra.mxu0 0
  %220 = vmatpush.bf16.msra.mxu0 0
  %221 = vmatpush.bf16.msra.mxu0 0
  %222 = vmatpush.bf16.msra.mxu0 %v202
  %223 = vmatpush.bf16.msra.mxu0 %v160
  %224 = vmatpush.bf16.msra.mxu0 %v154
  %225 = vmatpush.bf16.msra.mxu0 %v148
  %226 = vmatpush.bf16.msra.mxu0 %v142
  %227 = vmatmul.bf16.gmra.mxu0 %v198
  %v228 = vpop.f32.mrf.mxu0
  %v229 = vadd.f32 %v49, %v228
  %v230 = vpop.f32.mrf.mxu0
  %v231 = vadd.f32 %v54, %v230
  %232 = vdwg.mxu0
  %233 = vmatpush.bf16.msra.mxu0 0
  %234 = vmatpush.bf16.msra.mxu0 0
  %235 = vmatpush.bf16.msra.mxu0 0
  %236 = vmatpush.bf16.msra.mxu0 %v205
  %237 = vmatpush.bf16.msra.mxu0 %v161
  %238 = vmatpush.bf16.msra.mxu0 %v155
  %239 = vmatpush.bf16.msra.mxu0 %v149
  %240 = vmatpush.bf16.msra.mxu0 %v143
  %241 = vmatmul.bf16.gmra.mxu0 %v198
  %v242 = vpop.f32.mrf.mxu0
  %v243 = vadd.f32 %v49, %v242
  %v244 = vpop.f32.mrf.mxu0
  %v245 = vadd.f32 %v54, %v244
  %246 = vdwg.mxu0
  %247 = vmatpush.bf16.msra.mxu0 0
  %248 = vmatpush.bf16.msra.mxu0 0
  %249 = vmatpush.bf16.msra.mxu0 0
  %250 = vmatpush.bf16.msra.mxu0 %v208
  %251 = vmatpush.bf16.msra.mxu0 %v162
  %252 = vmatpush.bf16.msra.mxu0 %v156
  %253 = vmatpush.bf16.msra.mxu0 %v150
  %254 = vmatpush.bf16.msra.mxu0 %v144
  %255 = vmatmul.bf16.gmra.mxu0 %v198
  %v256 = vpop.f32.mrf.mxu0
  %v257 = vadd.f32 %v49, %v256
  %v258 = vpop.f32.mrf.mxu0
  %v259 = vadd.f32 %v54, %v258
  %260 = vdwg.mxu0
  %261 = vmatpush.bf16.msra.mxu0 0
  %262 = vmatpush.bf16.msra.mxu0 0
  %263 = vmatpush.bf16.msra.mxu0 0
  %264 = vmatpush.bf16.msra.mxu0 %v211
  %265 = vmatpush.bf16.msra.mxu0 %v163
  %266 = vmatpush.bf16.msra.mxu0 %v157
  %267 = vmatpush.bf16.msra.mxu0 %v151
  %268 = vmatpush.bf16.msra.mxu0 %v145
  %269 = vmatmul.bf16.gmra.mxu0 %v198
  %v270 = vpop.f32.mrf.mxu0
  %v271 = vadd.f32 %v49, %v270
  %v272 = vpop.f32.mrf.mxu0
  %v273 = vadd.f32 %v54, %v272
  %274 = vdwg.mxu0
  %275 = vmatpush.bf16.msra.mxu0 0
  %276 = vmatpush.bf16.msra.mxu0 0
  %277 = vmatpush.bf16.msra.mxu0 0
  %278 = vmatpush.bf16.msra.mxu0 %v214
  %279 = vmatpush.bf16.msra.mxu0 %v164
  %280 = vmatpush.bf16.msra.mxu0 %v158
  %281 = vmatpush.bf16.msra.mxu0 %v152
  %282 = vmatpush.bf16.msra.mxu0 %v146
  %283 = vmatmul.bf16.gmra.mxu0 %v198
  %v284 = vpop.f32.mrf.mxu0
  %v285 = vadd.f32 %v49, %v284
  %v286 = vpop.f32.mrf.mxu0
  %v287 = vadd.f32 %v54, %v286
  %288 = vdwg.mxu0
  %289 = vmatpush.bf16.msra.mxu0 0
  %290 = vmatpush.bf16.msra.mxu0 0
  %291 = vmatpush.bf16.msra.mxu0 0
  %292 = vmatpush.bf16.msra.mxu0 %v217
  %293 = vmatpush.bf16.msra.mxu0 %v165
  %294 = vmatpush.bf16.msra.mxu0 %v159
  %295 = vmatpush.bf16.msra.mxu0 %v153
  %296 = vmatpush.bf16.msra.mxu0 %v147
  %297 = vmatmul.bf16.gmra.mxu0 %v198
  %v298 = vpop.f32.mrf.mxu0
  %v299 = vadd.f32 %v49, %v298
  %v300 = vpop.f32.mrf.mxu0
  %v301 = vadd.f32 %v54, %v300
  %302 = vdwg.mxu0
  %v303 = vmax.f32 %v229, 0.0
  %v304 = vmax.f32 %v243, 0.0
  %v305 = vmax.f32 %v257, 0.0
  %v306 = vmax.f32 %v271, 0.0
  %v307 = vmax.f32 %v285, 0.0
  %v308 = vmax.f32 %v299, 0.0
  %v309 = vmax.f32 %v231, 0.0
  %v310 = vmax.f32 %v245, 0.0
  %v311 = vmax.f32 %v259, 0.0
  %v312 = vmax.f32 %v273, 0.0
  %v313 = vmax.f32 %v287, 0.0
  %v314 = vmax.f32 %v301, 0.0
  %v315 = vpack.c.bf16 %v304, %v303
  %v316 = vpack.c.bf16 %v306, %v305
  %v317 = vpack.c.bf16 %v308, %v307
  %v318 = vpack.c.bf16 %v310, %v309
  %v319 = vpack.c.bf16 %v312, %v311
  %v320 = vpack.c.bf16 %v314, %v313
  %321 = vst [vmem:[%s3] sm:$0xff] %v315
  %322 = vst [vmem:[%s3 + $0x8] sm:$0xff] %v316
  %vm323 = vcmask 64516
  %vm324 = vmor %vm323, %vm200
  %325 = vst.msk [vmem:[%s3 + $0x10] sm:$0xff] %vm324, %v317
  %326 = vst [vmem:[%s3 + $0x18] sm:$0xff] %v318
  %327 = vst [vmem:[%s3 + $0x20] sm:$0xff] %v319
  %328 = vst.msk [vmem:[%s3 + $0x28] sm:$0xff] %vm324, %v320
  // Predicated region
  $region14: #{unet_forward.18} parent=0 // pred_check
    _
  $region15: #{unet_forward.18} parent=0 // pred_check_branch
    %330 = sbr.rel (0) target = $region17
  $region16: #{unet_forward.18} parent=0 // pred_region
    _
  $region17: #{unet_forward.18} parent=0 // pred_fallthru
    _
  // Predicated region
  $region18: #{unet_forward.18} parent=0 // pred_check
    _
  $region19: #{unet_forward.18} parent=0 // pred_check_branch
    %332 = sbr.rel (0) target = $region21
  $region20: #{unet_forward.18} parent=0 // pred_region
    _
  $region21: #{unet_forward.18} parent=0 // pred_fallthru
    _

// kernel: unet_forward.19
$region0: #{unet_forward.19}
  #allocation0 [shape = 'u32[]', space=smem, size = 0x4, offset = 0x4, fixed_abs, tag = 'smem constant byte address 0x4 - core index']
  #allocation1 [shape = 'u32[72,128]{1,0:T(1,128)}', space=vmem, size = 0x9000, scoped, tag = 'internal scratch']
  %s0 = inlined_call_operand.vmem [shape: bf16[16,144], index: 0, kind: input, shape index: {}]
  %s1 = inlined_call_operand.vmem [shape: bf16[144,512], index: 1, kind: input, shape index: {}]
  %s2 = inlined_call_operand.vmem [shape: f32[16,1], index: 2, kind: input, shape index: {}]
  %s3 = inlined_call_operand.vmem [shape: bf16[16,512], index: 3, kind: output, shape index: {}]
  %s4 = sld [smem:[#allocation0]]
  $region22: #{unet_forward.19} parent=0
    _
  %s6 = ssub.s32 1, %s4
  %s7 = scalar_select 0, %s6, %s4
  // Predicated region
  $region2: #{unet_forward.19} parent=0 // pred_check
    _
  $region3: #{unet_forward.19} parent=0 // pred_check_branch
    %9 = sbr.rel (0) target = $region5
  $region4: #{unet_forward.19} parent=0 // pred_region
    _
  $region5: #{unet_forward.19} parent=0 // pred_fallthru
    _
  // Predicated region
  $region6: #{unet_forward.19} parent=0 // pred_check
    _
  $region7: #{unet_forward.19} parent=0 // pred_check_branch
    %11 = sbr.rel (0) target = $region9
  $region8: #{unet_forward.19} parent=0 // pred_region
    _
  $region9: #{unet_forward.19} parent=0 // pred_fallthru
    _
  // Predicated region
  $region10: #{unet_forward.19} parent=0 // pred_check
    _
  $region11: #{unet_forward.19} parent=0 // pred_check_branch
    %13 = sbr.rel (0) target = $region13
  $region12: #{unet_forward.19} parent=0 // pred_region
    _
  $region13: #{unet_forward.19} parent=0 // pred_fallthru
    _
  %v15 = vld [vmem:[%s0] sm:$0xff]
  %v16 = vld [vmem:[%s0 + $0x8] sm:$0xff]
  %v17 = vld [vmem:[%s1] sm:$0xff]
  %v18 = vld [vmem:[%s1 + $0x8] sm:$0xff]
  %v19 = vld [vmem:[%s1 + $0x10] sm:$0xff]
  %v20 = vld [vmem:[%s1 + $0x18] sm:$0xff]
  %v21 = vld [vmem:[%s1 + $0x20] sm:$0xff]
  %v22 = vld [vmem:[%s1 + $0x28] sm:$0xff]
  %v23 = vld [vmem:[%s1 + $0x30] sm:$0xff]
  %v24 = vld [vmem:[%s1 + $0x38] sm:$0xff]
  %v25 = vld [vmem:[%s1 + $0x40] sm:$0xff]
  %v26 = vld [vmem:[%s1 + $0x48] sm:$0xff]
  %v27 = vld [vmem:[%s1 + $0x50] sm:$0xff]
  %v28 = vld [vmem:[%s1 + $0x58] sm:$0xff]
  %v29 = vld [vmem:[%s1 + $0x60] sm:$0xff]
  %v30 = vld [vmem:[%s1 + $0x68] sm:$0xff]
  %v31 = vld [vmem:[%s1 + $0x70] sm:$0xff]
  %v32 = vld [vmem:[%s1 + $0x78] sm:$0xff]
  %v33 = vld [vmem:[%s1 + $0x80] sm:$0xff]
  %v34 = vld [vmem:[%s1 + $0x88] sm:$0xff]
  %v35 = vld [vmem:[%s1 + $0x90] sm:$0xff]
  %v36 = vld [vmem:[%s1 + $0x98] sm:$0xff]
  %v37 = vld [vmem:[%s1 + $0xa0] sm:$0xff]
  %v38 = vld [vmem:[%s1 + $0xa8] sm:$0xff]
  %v39 = vld [vmem:[%s1 + $0xb0] sm:$0xff]
  %v40 = vld [vmem:[%s1 + $0xb8] sm:$0xff]
  %v41 = vld [vmem:[%s1 + $0xc0] sm:$0xff]
  %v42 = vld [vmem:[%s1 + $0xc8] sm:$0xff]
  %v43 = vld [vmem:[%s1 + $0xd0] sm:$0xff]
  %v44 = vld [vmem:[%s1 + $0xd8] sm:$0xff]
  %v45 = vld [vmem:[%s1 + $0xe0] sm:$0xff]
  %v46 = vld [vmem:[%s1 + $0xe8] sm:$0xff]
  %v47 = vld [vmem:[%s1 + $0xf0] sm:$0xff]
  %v48 = vld [vmem:[%s1 + $0xf8] sm:$0xff]
  %v49 = vld [vmem:[%s1 + $0x100] sm:$0xff]
  %v50 = vld [vmem:[%s1 + $0x108] sm:$0xff]
  %v51 = vld [vmem:[%s1 + $0x110] sm:$0xff]
  %v52 = vld [vmem:[%s1 + $0x118] sm:$0xff]
  %v53 = vld [vmem:[%s2] sm:$0xff]
  %v54 = vld [vmem:[%s2 + $0x8] sm:$0xff]
  %56 = vset.pattern.permute.xlu0 0
  %57 = vperm.xlu0 %56, %v53
  %v58 = vpop.permute.xlu0 %57
  %61 = vset.pattern.permute.xlu0 0
  %62 = vperm.xlu0 %61, %v54
  %v63 = vpop.permute.xlu0 %62
  %v67 = vunpack.c.l.b16 %v15
  %v68 = vunpack.c.h.b16 %v15
  %v69 = vunpack.c.l.b16 %v16
  %v70 = vunpack.c.h.b16 %v16
  %v71 = vpack.c.b16 %v69, %v67
  %v72 = vpack.c.b16 %v70, %v68
  %v110 = vunpack.c.l.b16 %v17
  %v111 = vunpack.c.h.b16 %v17
  %v112 = vunpack.c.l.b16 %v18
  %v113 = vunpack.c.h.b16 %v18
  %v114 = vunpack.c.l.b16 %v19
  %v115 = vunpack.c.h.b16 %v19
  %v116 = vunpack.c.l.b16 %v20
  %v117 = vunpack.c.h.b16 %v20
  %v118 = vunpack.c.l.b16 %v21
  %v119 = vunpack.c.h.b16 %v21
  %v120 = vunpack.c.l.b16 %v22
  %v121 = vunpack.c.h.b16 %v22
  %v122 = vunpack.c.l.b16 %v23
  %v123 = vunpack.c.h.b16 %v23
  %v124 = vunpack.c.l.b16 %v24
  %v125 = vunpack.c.h.b16 %v24
  %v126 = vunpack.c.l.b16 %v25
  %v127 = vunpack.c.h.b16 %v25
  %v128 = vunpack.c.l.b16 %v26
  %v129 = vunpack.c.h.b16 %v26
  %v130 = vunpack.c.l.b16 %v27
  %v131 = vunpack.c.h.b16 %v27
  %v132 = vunpack.c.l.b16 %v28
  %v133 = vunpack.c.h.b16 %v28
  %v134 = vunpack.c.l.b16 %v29
  %v135 = vunpack.c.h.b16 %v29
  %v136 = vunpack.c.l.b16 %v30
  %v137 = vunpack.c.h.b16 %v30
  %v138 = vunpack.c.l.b16 %v31
  %v139 = vunpack.c.h.b16 %v31
  %v140 = vunpack.c.l.b16 %v32
  %v141 = vunpack.c.h.b16 %v32
  %v142 = vunpack.c.l.b16 %v33
  %v143 = vunpack.c.h.b16 %v33
  %v144 = vunpack.c.l.b16 %v34
  %v145 = vunpack.c.h.b16 %v34
  %v146 = vunpack.c.l.b16 %v35
  %v147 = vunpack.c.h.b16 %v35
  %v148 = vunpack.c.l.b16 %v36
  %v149 = vunpack.c.h.b16 %v36
  %v150 = vunpack.c.l.b16 %v37
  %v151 = vunpack.c.h.b16 %v37
  %v152 = vunpack.c.l.b16 %v38
  %v153 = vunpack.c.h.b16 %v38
  %v154 = vunpack.c.l.b16 %v39
  %v155 = vunpack.c.h.b16 %v39
  %v156 = vunpack.c.l.b16 %v40
  %v157 = vunpack.c.h.b16 %v40
  %v158 = vunpack.c.l.b16 %v41
  %v159 = vunpack.c.h.b16 %v41
  %v160 = vunpack.c.l.b16 %v42
  %v161 = vunpack.c.h.b16 %v42
  %v162 = vunpack.c.l.b16 %v43
  %v163 = vunpack.c.h.b16 %v43
  %v164 = vunpack.c.l.b16 %v44
  %v165 = vunpack.c.h.b16 %v44
  %v166 = vunpack.c.l.b16 %v45
  %v167 = vunpack.c.h.b16 %v45
  %v168 = vunpack.c.l.b16 %v46
  %v169 = vunpack.c.h.b16 %v46
  %v170 = vunpack.c.l.b16 %v47
  %v171 = vunpack.c.h.b16 %v47
  %v172 = vunpack.c.l.b16 %v48
  %v173 = vunpack.c.h.b16 %v48
  %v174 = vunpack.c.l.b16 %v49
  %v175 = vunpack.c.h.b16 %v49
  %v176 = vunpack.c.l.b16 %v50
  %v177 = vunpack.c.h.b16 %v50
  %v178 = vunpack.c.l.b16 %v51
  %v179 = vunpack.c.h.b16 %v51
  %v180 = vunpack.c.l.b16 %v52
  %v181 = vunpack.c.h.b16 %v52
  %v182 = vpack.c.b16 %v114, %v110
  %v183 = vpack.c.b16 %v115, %v111
  %v184 = vpack.c.b16 %v116, %v112
  %v185 = vpack.c.b16 %v117, %v113
  %v186 = vpack.c.b16 %v122, %v118
  %v187 = vpack.c.b16 %v123, %v119
  %v188 = vpack.c.b16 %v124, %v120
  %v189 = vpack.c.b16 %v125, %v121
  %v190 = vpack.c.b16 %v130, %v126
  %v191 = vpack.c.b16 %v131, %v127
  %v192 = vpack.c.b16 %v132, %v128
  %v193 = vpack.c.b16 %v133, %v129
  %v194 = vpack.c.b16 %v138, %v134
  %v195 = vpack.c.b16 %v139, %v135
  %v196 = vpack.c.b16 %v140, %v136
  %v197 = vpack.c.b16 %v141, %v137
  %v198 = vpack.c.b16 %v146, %v142
  %v199 = vpack.c.b16 %v147, %v143
  %v200 = vpack.c.b16 %v148, %v144
  %v201 = vpack.c.b16 %v149, %v145
  %v202 = vpack.c.b16 %v154, %v150
  %v203 = vpack.c.b16 %v155, %v151
  %v204 = vpack.c.b16 %v156, %v152
  %v205 = vpack.c.b16 %v157, %v153
  %v206 = vpack.c.b16 %v162, %v158
  %v207 = vpack.c.b16 %v163, %v159
  %v208 = vpack.c.b16 %v164, %v160
  %v209 = vpack.c.b16 %v165, %v161
  %v210 = vpack.c.b16 %v170, %v166
  %v211 = vpack.c.b16 %v171, %v167
  %v212 = vpack.c.b16 %v172, %v168
  %v213 = vpack.c.b16 %v173, %v169
  %v214 = vpack.c.b16 %v178, %v174
  %v215 = vpack.c.b16 %v179, %v175
  %v216 = vpack.c.b16 %v180, %v176
  %v217 = vpack.c.b16 %v181, %v177
  %vm254 = vcmask 130048
  %v256 = vsel %vm254, %v72, 0
  %258 = vmatpush.bf16.msra.mxu0 %v210
  %259 = vmatpush.bf16.msra.mxu0 %v206
  %260 = vmatpush.bf16.msra.mxu0 %v202
  %261 = vmatpush.bf16.msra.mxu0 %v198
  %262 = vmatpush.bf16.msra.mxu0 %v194
  %263 = vmatpush.bf16.msra.mxu0 %v190
  %264 = vmatpush.bf16.msra.mxu0 %v186
  %265 = vmatpush.bf16.msra.mxu0 %v182
  %266 = vmatmul.bf16.gmra.mxu0 %v71
  %v267 = vpop.f32.mrf.mxu0
  %v268 = vadd.f32 %v58, %v267
  %v269 = vpop.f32.mrf.mxu0
  %v270 = vadd.f32 %v63, %v269
  %271 = vdwg.mxu0
  %272 = vmatpush.bf16.msra.mxu0 0
  %273 = vmatpush.bf16.msra.mxu0 0
  %274 = vmatpush.bf16.msra.mxu0 0
  %275 = vmatpush.bf16.msra.mxu0 0
  %276 = vmatpush.bf16.msra.mxu0 0
  %277 = vmatpush.bf16.msra.mxu0 0
  %278 = vmatpush.bf16.msra.mxu0 0
  %279 = vmatpush.bf16.msra.mxu0 %v214
  %280 = vmatmul.bf16.gmra.mxu0 %v256
  %v281 = vpop.f32.mrf.mxu0
  %v282 = vadd.f32 %v268, %v281
  %v283 = vpop.f32.mrf.mxu0
  %v284 = vadd.f32 %v270, %v283
  %285 = vdwg.mxu0
  %286 = vmatpush.bf16.msra.mxu0 %v211
  %287 = vmatpush.bf16.msra.mxu0 %v207
  %288 = vmatpush.bf16.msra.mxu0 %v203
  %289 = vmatpush.bf16.msra.mxu0 %v199
  %290 = vmatpush.bf16.msra.mxu0 %v195
  %291 = vmatpush.bf16.msra.mxu0 %v191
  %292 = vmatpush.bf16.msra.mxu0 %v187
  %293 = vmatpush.bf16.msra.mxu0 %v183
  %294 = vmatmul.bf16.gmra.mxu0 %v71
  %v295 = vpop.f32.mrf.mxu0
  %v296 = vadd.f32 %v58, %v295
  %v297 = vpop.f32.mrf.mxu0
  %v298 = vadd.f32 %v63, %v297
  %299 = vdwg.mxu0
  %300 = vmatpush.bf16.msra.mxu0 0
  %301 = vmatpush.bf16.msra.mxu0 0
  %302 = vmatpush.bf16.msra.mxu0 0
  %303 = vmatpush.bf16.msra.mxu0 0
  %304 = vmatpush.bf16.msra.mxu0 0
  %305 = vmatpush.bf16.msra.mxu0 0
  %306 = vmatpush.bf16.msra.mxu0 0
  %307 = vmatpush.bf16.msra.mxu0 %v215
  %308 = vmatmul.bf16.gmra.mxu0 %v256
  %v309 = vpop.f32.mrf.mxu0
  %v310 = vadd.f32 %v296, %v309
  %v311 = vpop.f32.mrf.mxu0
  %v312 = vadd.f32 %v298, %v311
  %313 = vdwg.mxu0
  %314 = vmatpush.bf16.msra.mxu0 %v212
  %315 = vmatpush.bf16.msra.mxu0 %v208
  %316 = vmatpush.bf16.msra.mxu0 %v204
  %317 = vmatpush.bf16.msra.mxu0 %v200
  %318 = vmatpush.bf16.msra.mxu0 %v196
  %319 = vmatpush.bf16.msra.mxu0 %v192
  %320 = vmatpush.bf16.msra.mxu0 %v188
  %321 = vmatpush.bf16.msra.mxu0 %v184
  %322 = vmatmul.bf16.gmra.mxu0 %v71
  %v323 = vpop.f32.mrf.mxu0
  %v324 = vadd.f32 %v58, %v323
  %v325 = vpop.f32.mrf.mxu0
  %v326 = vadd.f32 %v63, %v325
  %327 = vdwg.mxu0
  %328 = vmatpush.bf16.msra.mxu0 0
  %329 = vmatpush.bf16.msra.mxu0 0
  %330 = vmatpush.bf16.msra.mxu0 0
  %331 = vmatpush.bf16.msra.mxu0 0
  %332 = vmatpush.bf16.msra.mxu0 0
  %333 = vmatpush.bf16.msra.mxu0 0
  %334 = vmatpush.bf16.msra.mxu0 0
  %335 = vmatpush.bf16.msra.mxu0 %v216
  %336 = vmatmul.bf16.gmra.mxu0 %v256
  %v337 = vpop.f32.mrf.mxu0
  %v338 = vadd.f32 %v324, %v337
  %v339 = vpop.f32.mrf.mxu0
  %v340 = vadd.f32 %v326, %v339
  %341 = vdwg.mxu0
  %342 = vmatpush.bf16.msra.mxu0 %v213
  %343 = vmatpush.bf16.msra.mxu0 %v209
  %344 = vmatpush.bf16.msra.mxu0 %v205
  %345 = vmatpush.bf16.msra.mxu0 %v201
  %346 = vmatpush.bf16.msra.mxu0 %v197
  %347 = vmatpush.bf16.msra.mxu0 %v193
  %348 = vmatpush.bf16.msra.mxu0 %v189
  %349 = vmatpush.bf16.msra.mxu0 %v185
  %350 = vmatmul.bf16.gmra.mxu0 %v71
  %v351 = vpop.f32.mrf.mxu0
  %v352 = vadd.f32 %v58, %v351
  %v353 = vpop.f32.mrf.mxu0
  %v354 = vadd.f32 %v63, %v353
  %355 = vdwg.mxu0
  %356 = vmatpush.bf16.msra.mxu0 0
  %357 = vmatpush.bf16.msra.mxu0 0
  %358 = vmatpush.bf16.msra.mxu0 0
  %359 = vmatpush.bf16.msra.mxu0 0
  %360 = vmatpush.bf16.msra.mxu0 0
  %361 = vmatpush.bf16.msra.mxu0 0
  %362 = vmatpush.bf16.msra.mxu0 0
  %363 = vmatpush.bf16.msra.mxu0 %v217
  %364 = vmatmul.bf16.gmra.mxu0 %v256
  %v365 = vpop.f32.mrf.mxu0
  %v366 = vadd.f32 %v352, %v365
  %v367 = vpop.f32.mrf.mxu0
  %v368 = vadd.f32 %v354, %v367
  %369 = vdwg.mxu0
  %v370 = vmax.f32 %v282, 0.0
  %v371 = vmax.f32 %v310, 0.0
  %v372 = vmax.f32 %v338, 0.0
  %v373 = vmax.f32 %v366, 0.0
  %v374 = vmax.f32 %v284, 0.0
  %v375 = vmax.f32 %v312, 0.0
  %v376 = vmax.f32 %v340, 0.0
  %v377 = vmax.f32 %v368, 0.0
  %v378 = vpack.c.bf16 %v371, %v370
  %v379 = vpack.c.bf16 %v373, %v372
  %v380 = vpack.c.bf16 %v375, %v374
  %v381 = vpack.c.bf16 %v377, %v376
  %382 = vst [vmem:[%s3] sm:$0xff] %v378
  %383 = vst [vmem:[%s3 + $0x8] sm:$0xff] %v379
  %384 = vst [vmem:[%s3 + $0x10] sm:$0xff] %v380
  %385 = vst [vmem:[%s3 + $0x18] sm:$0xff] %v381
  // Predicated region
  $region14: #{unet_forward.19} parent=0 // pred_check
    _
  $region15: #{unet_forward.19} parent=0 // pred_check_branch
    %387 = sbr.rel (0) target = $region17
  $region16: #{unet_forward.19} parent=0 // pred_region
    _
  $region17: #{unet_forward.19} parent=0 // pred_fallthru
    _
  // Predicated region
  $region18: #{unet_forward.19} parent=0 // pred_check
    _
  $region19: #{unet_forward.19} parent=0 // pred_check_branch
    %389 = sbr.rel (0) target = $region21
  $region20: #{unet_forward.19} parent=0 // pred_region
    _
  $region21: #{unet_forward.19} parent=0 // pred_fallthru
    _

// kernel: unet_forward.20
$region0: #{unet_forward.20}
  #allocation0 [shape = 'u32[]', space=smem, size = 0x4, offset = 0x4, fixed_abs, tag = 'smem constant byte address 0x4 - core index']
  #allocation1 [shape = 'u32[72,128]{1,0:T(1,128)}', space=vmem, size = 0x9000, scoped, tag = 'internal scratch']
  %s0 = inlined_call_operand.vmem [shape: bf16[16,128], index: 0, kind: input, shape index: {}]
  %s1 = inlined_call_operand.vmem [shape: bf16[16,128], index: 1, kind: input, shape index: {}]
  %s2 = inlined_call_operand.vmem [shape: bf16[16,128], index: 2, kind: input, shape index: {}]
  %s3 = inlined_call_operand.vmem [shape: bf16[16,128], index: 3, kind: input, shape index: {}]
  %s4 = inlined_call_operand.vmem [shape: bf16[16,128], index: 4, kind: output, shape index: {}]
  %s5 = sld [smem:[#allocation0]]
  $region26: #{unet_forward.20} parent=0
    _
  %s7 = ssub.s32 1, %s5
  %s8 = scalar_select 0, %s7, %s5
  // Predicated region
  $region2: #{unet_forward.20} parent=0 // pred_check
    _
  $region3: #{unet_forward.20} parent=0 // pred_check_branch
    %10 = sbr.rel (0) target = $region5
  $region4: #{unet_forward.20} parent=0 // pred_region
    _
  $region5: #{unet_forward.20} parent=0 // pred_fallthru
    _
  // Predicated region
  $region6: #{unet_forward.20} parent=0 // pred_check
    _
  $region7: #{unet_forward.20} parent=0 // pred_check_branch
    %12 = sbr.rel (0) target = $region9
  $region8: #{unet_forward.20} parent=0 // pred_region
    _
  $region9: #{unet_forward.20} parent=0 // pred_fallthru
    _
  // Predicated region
  $region10: #{unet_forward.20} parent=0 // pred_check
    _
  $region11: #{unet_forward.20} parent=0 // pred_check_branch
    %14 = sbr.rel (0) target = $region13
  $region12: #{unet_forward.20} parent=0 // pred_region
    _
  $region13: #{unet_forward.20} parent=0 // pred_fallthru
    _
  // Predicated region
  $region14: #{unet_forward.20} parent=0 // pred_check
    _
  $region15: #{unet_forward.20} parent=0 // pred_check_branch
    %16 = sbr.rel (0) target = $region17
  $region16: #{unet_forward.20} parent=0 // pred_region
    _
  $region17: #{unet_forward.20} parent=0 // pred_fallthru
    _
  %v17 = vld [vmem:[%s0] sm:$0xf]
  %v18 = vld [vmem:[%s0 + $0x4] sm:$0xf]
  %v19 = vld [vmem:[%s1] sm:$0xf]
  %v20 = vld [vmem:[%s1 + $0x4] sm:$0xf]
  %v21 = vunpack.c.l.bf16 %v17
  %v22 = vunpack.c.l.bf16 %v18
  %v23 = vunpack.c.l.bf16 %v19
  %v24 = vunpack.c.l.bf16 %v20
  %v25 = vmax.f32 %v21, %v23
  %v26 = vmax.f32 %v22, %v24
  %v27 = vpack.c.bf16 %v25, %v25
  %v28 = vpack.c.bf16 %v26, %v26
  %v29 = vld [vmem:[%s2] sm:$0xf]
  %v30 = vld [vmem:[%s2 + $0x4] sm:$0xf]
  %v31 = vld [vmem:[%s3] sm:$0xf]
  %v32 = vld [vmem:[%s3 + $0x4] sm:$0xf]
  %v33 = vunpack.c.l.bf16 %v29
  %v34 = vunpack.c.l.bf16 %v30
  %v35 = vunpack.c.l.bf16 %v31
  %v36 = vunpack.c.l.bf16 %v32
  %v37 = vmax.f32 %v33, %v35
  %v38 = vmax.f32 %v34, %v36
  %v39 = vpack.c.bf16 %v37, %v37
  %v40 = vpack.c.bf16 %v38, %v38
  %v41 = vunpack.c.l.bf16 %v27
  %v42 = vunpack.c.l.bf16 %v28
  %v43 = vunpack.c.l.bf16 %v39
  %v44 = vunpack.c.l.bf16 %v40
  %v45 = vmax.f32 %v41, %v43
  %v46 = vmax.f32 %v42, %v44
  %v47 = vpack.c.bf16 %v45, %v45
  %v48 = vpack.c.bf16 %v46, %v46
  %49 = vst [vmem:[%s4] sm:$0xf] %v47
  %50 = vst [vmem:[%s4 + $0x4] sm:$0xf] %v48
  // Predicated region
  $region18: #{unet_forward.20} parent=0 // pred_check
    _
  $region19: #{unet_forward.20} parent=0 // pred_check_branch
    %52 = sbr.rel (0) target = $region21
  $region20: #{unet_forward.20} parent=0 // pred_region
    _
  $region21: #{unet_forward.20} parent=0 // pred_fallthru
    _
  // Predicated region
  $region22: #{unet_forward.20} parent=0 // pred_check
    _
  $region23: #{unet_forward.20} parent=0 // pred_check_branch
    %54 = sbr.rel (0) target = $region25
  $region24: #{unet_forward.20} parent=0 // pred_region
    _
  $region25: #{unet_forward.20} parent=0 // pred_fallthru
    _

// kernel: unet_forward.21
$region0: #{unet_forward.21}
  #allocation0 [shape = 'u32[]', space=smem, size = 0x4, offset = 0x4, fixed_abs, tag = 'smem constant byte address 0x4 - core index']
  #allocation1 [shape = 'u32[72,128]{1,0:T(1,128)}', space=vmem, size = 0x9000, scoped, tag = 'internal scratch']
  %s0 = inlined_call_operand.vmem [shape: bf16[32,144], index: 0, kind: input, shape index: {}]
  %s1 = inlined_call_operand.vmem [shape: bf16[144,72], index: 1, kind: input, shape index: {}]
  %s2 = inlined_call_operand.vmem [shape: f32[32,1], index: 2, kind: input, shape index: {}]
  %s3 = inlined_call_operand.vmem [shape: bf16[32,72], index: 3, kind: output, shape index: {}]
  %s4 = sld [smem:[#allocation0]]
  $region22: #{unet_forward.21} parent=0
    _
  %s6 = ssub.s32 1, %s4
  %s7 = scalar_select 0, %s6, %s4
  // Predicated region
  $region2: #{unet_forward.21} parent=0 // pred_check
    _
  $region3: #{unet_forward.21} parent=0 // pred_check_branch
    %9 = sbr.rel (0) target = $region5
  $region4: #{unet_forward.21} parent=0 // pred_region
    _
  $region5: #{unet_forward.21} parent=0 // pred_fallthru
    _
  // Predicated region
  $region6: #{unet_forward.21} parent=0 // pred_check
    _
  $region7: #{unet_forward.21} parent=0 // pred_check_branch
    %11 = sbr.rel (0) target = $region9
  $region8: #{unet_forward.21} parent=0 // pred_region
    _
  $region9: #{unet_forward.21} parent=0 // pred_fallthru
    _
  // Predicated region
  $region10: #{unet_forward.21} parent=0 // pred_check
    _
  $region11: #{unet_forward.21} parent=0 // pred_check_branch
    %13 = sbr.rel (0) target = $region13
  $region12: #{unet_forward.21} parent=0 // pred_region
    _
  $region13: #{unet_forward.21} parent=0 // pred_fallthru
    _
  %v15 = vld [vmem:[%s0] sm:$0xff]
  %v16 = vld [vmem:[%s0 + $0x8] sm:$0xff]
  %v17 = vld [vmem:[%s0 + $0x10] sm:$0xff]
  %v18 = vld [vmem:[%s0 + $0x18] sm:$0xff]
  %v19 = vld [vmem:[%s1] sm:$0xf]
  %v20 = vld [vmem:[%s1 + $0x4] sm:$0xf]
  %v21 = vld [vmem:[%s1 + $0x8] sm:$0xf]
  %v22 = vld [vmem:[%s1 + $0xc] sm:$0xf]
  %v23 = vld [vmem:[%s1 + $0x10] sm:$0xf]
  %v24 = vld [vmem:[%s1 + $0x14] sm:$0xf]
  %v25 = vld [vmem:[%s1 + $0x18] sm:$0xf]
  %v26 = vld [vmem:[%s1 + $0x1c] sm:$0xf]
  %v27 = vld [vmem:[%s1 + $0x20] sm:$0xf]
  %v28 = vld [vmem:[%s1 + $0x24] sm:$0xf]
  %v29 = vld [vmem:[%s1 + $0x28] sm:$0xf]
  %v30 = vld [vmem:[%s1 + $0x2c] sm:$0xf]
  %v31 = vld [vmem:[%s1 + $0x30] sm:$0xf]
  %v32 = vld [vmem:[%s1 + $0x34] sm:$0xf]
  %v33 = vld [vmem:[%s1 + $0x38] sm:$0xf]
  %v34 = vld [vmem:[%s1 + $0x3c] sm:$0xf]
  %v35 = vld [vmem:[%s1 + $0x40] sm:$0xf]
  %v36 = vld [vmem:[%s1 + $0x44] sm:$0xf]
  %v37 = vld [vmem:[%s2] sm:$0xff]
  %v38 = vld [vmem:[%s2 + $0x8] sm:$0xff]
  %v39 = vld [vmem:[%s2 + $0x10] sm:$0xff]
  %v40 = vld [vmem:[%s2 + $0x18] sm:$0xff]
  %42 = vset.pattern.permute.xlu0 0
  %43 = vperm.xlu0 %42, %v37
  %v44 = vpop.permute.xlu0 %43
  %47 = vset.pattern.permute.xlu0 0
  %48 = vperm.xlu0 %47, %v38
  %v49 = vpop.permute.xlu0 %48
  %52 = vset.pattern.permute.xlu0 0
  %53 = vperm.xlu0 %52, %v39
  %v54 = vpop.permute.xlu0 %53
  %57 = vset.pattern.permute.xlu0 0
  %58 = vperm.xlu0 %57, %v40
  %v59 = vpop.permute.xlu0 %58
  %v65 = vunpack.c.l.b16 %v15
  %v66 = vunpack.c.h.b16 %v15
  %v67 = vunpack.c.l.b16 %v16
  %v68 = vunpack.c.h.b16 %v16
  %v69 = vunpack.c.l.b16 %v17
  %v70 = vunpack.c.h.b16 %v17
  %v71 = vunpack.c.l.b16 %v18
  %v72 = vunpack.c.h.b16 %v18
  %v73 = vpack.c.b16 %v67, %v65
  %v74 = vpack.c.b16 %v68, %v66
  %v75 = vpack.c.b16 %v71, %v69
  %v76 = vpack.c.b16 %v72, %v70
  %v97 = vunpack.c.l.b16 %v19
  %v98 = vunpack.c.l.b16 %v20
  %v99 = vunpack.c.l.b16 %v21
  %v100 = vunpack.c.l.b16 %v22
  %v101 = vunpack.c.l.b16 %v23
  %v102 = vunpack.c.l.b16 %v24
  %v103 = vunpack.c.l.b16 %v25
  %v104 = vunpack.c.l.b16 %v26
  %v105 = vunpack.c.l.b16 %v27
  %v106 = vunpack.c.l.b16 %v28
  %v107 = vunpack.c.l.b16 %v29
  %v108 = vunpack.c.l.b16 %v30
  %v109 = vunpack.c.l.b16 %v31
  %v110 = vunpack.c.l.b16 %v32
  %v111 = vunpack.c.l.b16 %v33
  %v112 = vunpack.c.l.b16 %v34
  %v113 = vunpack.c.l.b16 %v35
  %v114 = vunpack.c.l.b16 %v36
  %v115 = vpack.c.b16 %v98, %v97
  %v116 = vpack.c.b16 %v100, %v99
  %v117 = vpack.c.b16 %v102, %v101
  %v118 = vpack.c.b16 %v104, %v103
  %v119 = vpack.c.b16 %v106, %v105
  %v120 = vpack.c.b16 %v108, %v107
  %v121 = vpack.c.b16 %v110, %v109
  %v122 = vpack.c.b16 %v112, %v111
  %v123 = vpack.c.b16 %v114, %v113
  %vm133 = vcmask 130048
  %v135 = vsel %vm133, %v74, 0
  %v138 = vsel %vm133, %v76, 0
  %140 = vmatpush.bf16.msra.mxu0 %v122
  %141 = vmatpush.bf16.msra.mxu0 %v121
  %142 = vmatpush.bf16.msra.mxu0 %v120
  %143 = vmatpush.bf16.msra.mxu0 %v119
  %144 = vmatpush.bf16.msra.mxu0 %v118
  %145 = vmatpush.bf16.msra.mxu0 %v117
  %146 = vmatpush.bf16.msra.mxu0 %v116
  %147 = vmatpush.bf16.msra.mxu0 %v115
  %148 = vmatmul.bf16.gmra.mxu0 %v73
  %v149 = vpop.f32.mrf.mxu0
  %v150 = vadd.f32 %v44, %v149
  %v151 = vpop.f32.mrf.mxu0
  %v152 = vadd.f32 %v49, %v151
  %153 = vmatmul.bf16.gmra.mxu0 %v75
  %v154 = vpop.f32.mrf.mxu0
  %v155 = vadd.f32 %v54, %v154
  %v156 = vpop.f32.mrf.mxu0
  %v157 = vadd.f32 %v59, %v156
  %158 = vdwg.mxu0
  %159 = vmatpush.bf16.msra.mxu0 0
  %160 = vmatpush.bf16.msra.mxu0 0
  %161 = vmatpush.bf16.msra.mxu0 0
  %162 = vmatpush.bf16.msra.mxu0 0
  %163 = vmatpush.bf16.msra.mxu0 0
  %164 = vmatpush.bf16.msra.mxu0 0
  %165 = vmatpush.bf16.msra.mxu0 0
  %166 = vmatpush.bf16.msra.mxu0 %v123
  %167 = vmatmul.bf16.gmra.mxu0 %v135
  %v168 = vpop.f32.mrf.mxu0
  %v169 = vadd.f32 %v150, %v168
  %v170 = vpop.f32.mrf.mxu0
  %v171 = vadd.f32 %v152, %v170
  %172 = vmatmul.bf16.gmra.mxu0 %v138
  %v173 = vpop.f32.mrf.mxu0
  %v174 = vadd.f32 %v155, %v173
  %v175 = vpop.f32.mrf.mxu0
  %v176 = vadd.f32 %v157, %v175
  %177 = vdwg.mxu0
  %v178 = vmax.f32 %v169, 0.0
  %v179 = vmax.f32 %v171, 0.0
  %v180 = vmax.f32 %v174, 0.0
  %v181 = vmax.f32 %v176, 0.0
  %v182 = vpack.c.bf16 %v178, %v178
  %v183 = vpack.c.bf16 %v179, %v179
  %v184 = vpack.c.bf16 %v180, %v180
  %v185 = vpack.c.bf16 %v181, %v181
  %vm186 = vcmask 584704
  %187 = vst.msk [vmem:[%s3] sm:$0xf] %vm186, %v182
  %188 = vst.msk [vmem:[%s3 + $0x4] sm:$0xf] %vm186, %v183
  %189 = vst.msk [vmem:[%s3 + $0x8] sm:$0xf] %vm186, %v184
  %190 = vst.msk [vmem:[%s3 + $0xc] sm:$0xf] %vm186, %v185
  // Predicated region
  $region14: #{unet_forward.21} parent=0 // pred_check
    _
  $region15: #{unet_forward.21} parent=0 // pred_check_branch
    %192 = sbr.rel (0) target = $region17
  $region16: #{unet_forward.21} parent=0 // pred_region
    _
  $region17: #{unet_forward.21} parent=0 // pred_fallthru
    _
  // Predicated region
  $region18: #{unet_forward.21} parent=0 // pred_check
    _
  $region19: #{unet_forward.21} parent=0 // pred_check_branch
    %194 = sbr.rel (0) target = $region21
  $region20: #{unet_forward.21} parent=0 // pred_region
    _
  $region21: #{unet_forward.21} parent=0 // pred_fallthru
    _

// kernel: unet_forward.22
$region0: #{unet_forward.22}
  #allocation0 [shape = 'u32[]', space=smem, size = 0x4, offset = 0x4, fixed_abs, tag = 'smem constant byte address 0x4 - core index']
  #allocation1 [shape = 'u32[72,128]{1,0:T(1,128)}', space=vmem, size = 0x9000, scoped, tag = 'internal scratch']
  %s0 = inlined_call_operand.vmem [shape: bf16[32,288], index: 0, kind: input, shape index: {}]
  %s1 = inlined_call_operand.vmem [shape: bf16[288,32], index: 1, kind: input, shape index: {}]
  %s2 = inlined_call_operand.vmem [shape: f32[32,1], index: 2, kind: input, shape index: {}]
  %s3 = inlined_call_operand.vmem [shape: bf16[32,32], index: 3, kind: output, shape index: {}]
  %s4 = sld [smem:[#allocation0]]
  $region22: #{unet_forward.22} parent=0
    _
  %s6 = ssub.s32 1, %s4
  %s7 = scalar_select 0, %s6, %s4
  // Predicated region
  $region2: #{unet_forward.22} parent=0 // pred_check
    _
  $region3: #{unet_forward.22} parent=0 // pred_check_branch
    %9 = sbr.rel (0) target = $region5
  $region4: #{unet_forward.22} parent=0 // pred_region
    _
  $region5: #{unet_forward.22} parent=0 // pred_fallthru
    _
  // Predicated region
  $region6: #{unet_forward.22} parent=0 // pred_check
    _
  $region7: #{unet_forward.22} parent=0 // pred_check_branch
    %11 = sbr.rel (0) target = $region9
  $region8: #{unet_forward.22} parent=0 // pred_region
    _
  $region9: #{unet_forward.22} parent=0 // pred_fallthru
    _
  // Predicated region
  $region10: #{unet_forward.22} parent=0 // pred_check
    _
  $region11: #{unet_forward.22} parent=0 // pred_check_branch
    %13 = sbr.rel (0) target = $region13
  $region12: #{unet_forward.22} parent=0 // pred_region
    _
  $region13: #{unet_forward.22} parent=0 // pred_fallthru
    _
  %v15 = vld [vmem:[%s0] sm:$0xff]
  %v16 = vld [vmem:[%s0 + $0x8] sm:$0xf]
  %v17 = vld [vmem:[%s0 + $0xc] sm:$0xff]
  %v18 = vld [vmem:[%s0 + $0x14] sm:$0xf]
  %v19 = vld [vmem:[%s0 + $0x18] sm:$0xff]
  %v20 = vld [vmem:[%s0 + $0x20] sm:$0xf]
  %v21 = vld [vmem:[%s0 + $0x24] sm:$0xff]
  %v22 = vld [vmem:[%s0 + $0x2c] sm:$0xf]
  %v23 = vld [vmem:[%s1] sm:$0xf]
  %v24 = vld [vmem:[%s1 + $0x4] sm:$0xf]
  %v25 = vld [vmem:[%s1 + $0x8] sm:$0xf]
  %v26 = vld [vmem:[%s1 + $0xc] sm:$0xf]
  %v27 = vld [vmem:[%s1 + $0x10] sm:$0xf]
  %v28 = vld [vmem:[%s1 + $0x14] sm:$0xf]
  %v29 = vld [vmem:[%s1 + $0x18] sm:$0xf]
  %v30 = vld [vmem:[%s1 + $0x1c] sm:$0xf]
  %v31 = vld [vmem:[%s1 + $0x20] sm:$0xf]
  %v32 = vld [vmem:[%s1 + $0x24] sm:$0xf]
  %v33 = vld [vmem:[%s1 + $0x28] sm:$0xf]
  %v34 = vld [vmem:[%s1 + $0x2c] sm:$0xf]
  %v35 = vld [vmem:[%s1 + $0x30] sm:$0xf]
  %v36 = vld [vmem:[%s1 + $0x34] sm:$0xf]
  %v37 = vld [vmem:[%s1 + $0x38] sm:$0xf]
  %v38 = vld [vmem:[%s1 + $0x3c] sm:$0xf]
  %v39 = vld [vmem:[%s1 + $0x40] sm:$0xf]
  %v40 = vld [vmem:[%s1 + $0x44] sm:$0xf]
  %v41 = vld [vmem:[%s1 + $0x48] sm:$0xf]
  %v42 = vld [vmem:[%s1 + $0x4c] sm:$0xf]
  %v43 = vld [vmem:[%s1 + $0x50] sm:$0xf]
  %v44 = vld [vmem:[%s1 + $0x54] sm:$0xf]
  %v45 = vld [vmem:[%s1 + $0x58] sm:$0xf]
  %v46 = vld [vmem:[%s1 + $0x5c] sm:$0xf]
  %v47 = vld [vmem:[%s1 + $0x60] sm:$0xf]
  %v48 = vld [vmem:[%s1 + $0x64] sm:$0xf]
  %v49 = vld [vmem:[%s1 + $0x68] sm:$0xf]
  %v50 = vld [vmem:[%s1 + $0x6c] sm:$0xf]
  %v51 = vld [vmem:[%s1 + $0x70] sm:$0xf]
  %v52 = vld [vmem:[%s1 + $0x74] sm:$0xf]
  %v53 = vld [vmem:[%s1 + $0x78] sm:$0xf]
  %v54 = vld [vmem:[%s1 + $0x7c] sm:$0xf]
  %v55 = vld [vmem:[%s1 + $0x80] sm:$0xf]
  %v56 = vld [vmem:[%s1 + $0x84] sm:$0xf]
  %v57 = vld [vmem:[%s1 + $0x88] sm:$0xf]
  %v58 = vld [vmem:[%s1 + $0x8c] sm:$0xf]
  %v59 = vld [vmem:[%s2] sm:$0xff]
  %v60 = vld [vmem:[%s2 + $0x8] sm:$0xff]
  %v61 = vld [vmem:[%s2 + $0x10] sm:$0xff]
  %v62 = vld [vmem:[%s2 + $0x18] sm:$0xff]
  %64 = vset.pattern.permute.xlu0 0
  %65 = vperm.xlu0 %64, %v59
  %v66 = vpop.permute.xlu0 %65
  %69 = vset.pattern.permute.xlu0 0
  %70 = vperm.xlu0 %69, %v60
  %v71 = vpop.permute.xlu0 %70
  %74 = vset.pattern.permute.xlu0 0
  %75 = vperm.xlu0 %74, %v61
  %v76 = vpop.permute.xlu0 %75
  %79 = vset.pattern.permute.xlu0 0
  %80 = vperm.xlu0 %79, %v62
  %v81 = vpop.permute.xlu0 %80
  %v91 = vunpack.c.l.b16 %v15
  %v92 = vunpack.c.h.b16 %v15
  %v93 = vunpack.c.l.b16 %v16
  %v94 = vunpack.c.l.b16 %v17
  %v95 = vunpack.c.h.b16 %v17
  %v96 = vunpack.c.l.b16 %v18
  %v97 = vunpack.c.l.b16 %v19
  %v98 = vunpack.c.h.b16 %v19
  %v99 = vunpack.c.l.b16 %v20
  %v100 = vunpack.c.l.b16 %v21
  %v101 = vunpack.c.h.b16 %v21
  %v102 = vunpack.c.l.b16 %v22
  %v103 = vpack.c.b16 %v94, %v91
  %v104 = vpack.c.b16 %v95, %v92
  %v105 = vpack.c.b16 %v96, %v93
  %v106 = vpack.c.b16 %v100, %v97
  %v107 = vpack.c.b16 %v101, %v98
  %v108 = vpack.c.b16 %v102, %v99
  %v149 = vunpack.c.l.b16 %v23
  %v150 = vunpack.c.l.b16 %v24
  %v151 = vunpack.c.l.b16 %v25
  %v152 = vunpack.c.l.b16 %v26
  %v153 = vunpack.c.l.b16 %v27
  %v154 = vunpack.c.l.b16 %v28
  %v155 = vunpack.c.l.b16 %v29
  %v156 = vunpack.c.l.b16 %v30
  %v157 = vunpack.c.l.b16 %v31
  %v158 = vunpack.c.l.b16 %v32
  %v159 = vunpack.c.l.b16 %v33
  %v160 = vunpack.c.l.b16 %v34
  %v161 = vunpack.c.l.b16 %v35
  %v162 = vunpack.c.l.b16 %v36
  %v163 = vunpack.c.l.b16 %v37
  %v164 = vunpack.c.l.b16 %v38
  %v165 = vunpack.c.l.b16 %v39
  %v166 = vunpack.c.l.b16 %v40
  %v167 = vunpack.c.l.b16 %v41
  %v168 = vunpack.c.l.b16 %v42
  %v169 = vunpack.c.l.b16 %v43
  %v170 = vunpack.c.l.b16 %v44
  %v171 = vunpack.c.l.b16 %v45
  %v172 = vunpack.c.l.b16 %v46
  %v173 = vunpack.c.l.b16 %v47
  %v174 = vunpack.c.l.b16 %v48
  %v175 = vunpack.c.l.b16 %v49
  %v176 = vunpack.c.l.b16 %v50
  %v177 = vunpack.c.l.b16 %v51
  %v178 = vunpack.c.l.b16 %v52
  %v179 = vunpack.c.l.b16 %v53
  %v180 = vunpack.c.l.b16 %v54
  %v181 = vunpack.c.l.b16 %v55
  %v182 = vunpack.c.l.b16 %v56
  %v183 = vunpack.c.l.b16 %v57
  %v184 = vunpack.c.l.b16 %v58
  %v185 = vpack.c.b16 %v150, %v149
  %v186 = vpack.c.b16 %v152, %v151
  %v187 = vpack.c.b16 %v154, %v153
  %v188 = vpack.c.b16 %v156, %v155
  %v189 = vpack.c.b16 %v158, %v157
  %v190 = vpack.c.b16 %v160, %v159
  %v191 = vpack.c.b16 %v162, %v161
  %v192 = vpack.c.b16 %v164, %v163
  %v193 = vpack.c.b16 %v166, %v165
  %v194 = vpack.c.b16 %v168, %v167
  %v195 = vpack.c.b16 %v170, %v169
  %v196 = vpack.c.b16 %v172, %v171
  %v197 = vpack.c.b16 %v174, %v173
  %v198 = vpack.c.b16 %v176, %v175
  %v199 = vpack.c.b16 %v178, %v177
  %v200 = vpack.c.b16 %v180, %v179
  %v201 = vpack.c.b16 %v182, %v181
  %v202 = vpack.c.b16 %v184, %v183
  %vm221 = vcmask 261120
  %v223 = vsel %vm221, %v105, 0
  %v226 = vsel %vm221, %v108, 0
  %228 = vmatpush.bf16.msra.mxu0 %v192
  %229 = vmatpush.bf16.msra.mxu0 %v191
  %230 = vmatpush.bf16.msra.mxu0 %v190
  %231 = vmatpush.bf16.msra.mxu0 %v189
  %232 = vmatpush.bf16.msra.mxu0 %v188
  %233 = vmatpush.bf16.msra.mxu0 %v187
  %234 = vmatpush.bf16.msra.mxu0 %v186
  %235 = vmatpush.bf16.msra.mxu0 %v185
  %236 = vmatmul.bf16.gmra.mxu0 %v103
  %v237 = vpop.f32.mrf.mxu0
  %v238 = vadd.f32 %v66, %v237
  %v239 = vpop.f32.mrf.mxu0
  %v240 = vadd.f32 %v71, %v239
  %241 = vmatmul.bf16.gmra.mxu0 %v106
  %v242 = vpop.f32.mrf.mxu0
  %v243 = vadd.f32 %v76, %v242
  %v244 = vpop.f32.mrf.mxu0
  %v245 = vadd.f32 %v81, %v244
  %246 = vdwg.mxu0
  %247 = vmatpush.bf16.msra.mxu0 %v200
  %248 = vmatpush.bf16.msra.mxu0 %v199
  %249 = vmatpush.bf16.msra.mxu0 %v198
  %250 = vmatpush.bf16.msra.mxu0 %v197
  %251 = vmatpush.bf16.msra.mxu0 %v196
  %252 = vmatpush.bf16.msra.mxu0 %v195
  %253 = vmatpush.bf16.msra.mxu0 %v194
  %254 = vmatpush.bf16.msra.mxu0 %v193
  %255 = vmatmul.bf16.gmra.mxu0 %v104
  %v256 = vpop.f32.mrf.mxu0
  %v257 = vadd.f32 %v238, %v256
  %v258 = vpop.f32.mrf.mxu0
  %v259 = vadd.f32 %v240, %v258
  %260 = vmatmul.bf16.gmra.mxu0 %v107
  %v261 = vpop.f32.mrf.mxu0
  %v262 = vadd.f32 %v243, %v261
  %v263 = vpop.f32.mrf.mxu0
  %v264 = vadd.f32 %v245, %v263
  %265 = vdwg.mxu0
  %266 = vmatpush.bf16.msra.mxu0 0
  %267 = vmatpush.bf16.msra.mxu0 0
  %268 = vmatpush.bf16.msra.mxu0 0
  %269 = vmatpush.bf16.msra.mxu0 0
  %270 = vmatpush.bf16.msra.mxu0 0
  %271 = vmatpush.bf16.msra.mxu0 0
  %272 = vmatpush.bf16.msra.mxu0 %v202
  %273 = vmatpush.bf16.msra.mxu0 %v201
  %274 = vmatmul.bf16.gmra.mxu0 %v223
  %v275 = vpop.f32.mrf.mxu0
  %v276 = vadd.f32 %v257, %v275
  %v277 = vpop.f32.mrf.mxu0
  %v278 = vadd.f32 %v259, %v277
  %279 = vmatmul.bf16.gmra.mxu0 %v226
  %v280 = vpop.f32.mrf.mxu0
  %v281 = vadd.f32 %v262, %v280
  %v282 = vpop.f32.mrf.mxu0
  %v283 = vadd.f32 %v264, %v282
  %284 = vdwg.mxu0
  %v285 = vmax.f32 %v276, 0.0
  %v286 = vmax.f32 %v278, 0.0
  %v287 = vmax.f32 %v281, 0.0
  %v288 = vmax.f32 %v283, 0.0
  %v289 = vpack.c.bf16 %v285, %v285
  %v290 = vpack.c.bf16 %v286, %v286
  %v291 = vpack.c.bf16 %v287, %v287
  %v292 = vpack.c.bf16 %v288, %v288
  %vm293 = vcmask 257024
  %294 = vst.msk [vmem:[%s3] sm:$0xf] %vm293, %v289
  %295 = vst.msk [vmem:[%s3 + $0x4] sm:$0xf] %vm293, %v290
  %296 = vst.msk [vmem:[%s3 + $0x8] sm:$0xf] %vm293, %v291
  %297 = vst.msk [vmem:[%s3 + $0xc] sm:$0xf] %vm293, %v292
  // Predicated region
  $region14: #{unet_forward.22} parent=0 // pred_check
    _
  $region15: #{unet_forward.22} parent=0 // pred_check_branch
    %299 = sbr.rel (0) target = $region17
  $region16: #{unet_forward.22} parent=0 // pred_region
    _
  $region17: #{unet_forward.22} parent=0 // pred_fallthru
    _
  // Predicated region
  $region18: #{unet_forward.22} parent=0 // pred_check
    _
  $region19: #{unet_forward.22} parent=0 // pred_check_branch
    %301 = sbr.rel (0) target = $region21
  $region20: #{unet_forward.22} parent=0 // pred_region
    _
  $region21: #{unet_forward.22} parent=0 // pred_fallthru
    _

// kernel: unet_forward.23
$region0: #{unet_forward.23}
  #allocation0 [shape = 'u32[]', space=smem, size = 0x4, offset = 0x4, fixed_abs, tag = 'smem constant byte address 0x4 - core index']
  #allocation1 [shape = 'u32[72,128]{1,0:T(1,128)}', space=vmem, size = 0x9000, scoped, tag = 'internal scratch']
  %s0 = inlined_call_operand.vmem [shape: bf16[64,32], index: 0, kind: input, shape index: {}]
  %s1 = inlined_call_operand.vmem [shape: bf16[32,32], index: 1, kind: input, shape index: {}]
  %s2 = inlined_call_operand.vmem [shape: f32[64,1], index: 2, kind: input, shape index: {}]
  %s3 = inlined_call_operand.vmem [shape: bf16[64,32], index: 3, kind: output, shape index: {}]
  %s4 = sld [smem:[#allocation0]]
  $region22: #{unet_forward.23} parent=0
    _
  %s6 = ssub.s32 1, %s4
  %s7 = scalar_select 0, %s6, %s4
  // Predicated region
  $region2: #{unet_forward.23} parent=0 // pred_check
    _
  $region3: #{unet_forward.23} parent=0 // pred_check_branch
    %9 = sbr.rel (0) target = $region5
  $region4: #{unet_forward.23} parent=0 // pred_region
    _
  $region5: #{unet_forward.23} parent=0 // pred_fallthru
    _
  // Predicated region
  $region6: #{unet_forward.23} parent=0 // pred_check
    _
  $region7: #{unet_forward.23} parent=0 // pred_check_branch
    %11 = sbr.rel (0) target = $region9
  $region8: #{unet_forward.23} parent=0 // pred_region
    _
  $region9: #{unet_forward.23} parent=0 // pred_fallthru
    _
  // Predicated region
  $region10: #{unet_forward.23} parent=0 // pred_check
    _
  $region11: #{unet_forward.23} parent=0 // pred_check_branch
    %13 = sbr.rel (0) target = $region13
  $region12: #{unet_forward.23} parent=0 // pred_region
    _
  $region13: #{unet_forward.23} parent=0 // pred_fallthru
    _
  %v15 = vld [vmem:[%s0] sm:$0xf]
  %v16 = vld [vmem:[%s0 + $0x4] sm:$0xf]
  %v17 = vld [vmem:[%s0 + $0x8] sm:$0xf]
  %v18 = vld [vmem:[%s0 + $0xc] sm:$0xf]
  %v19 = vld [vmem:[%s0 + $0x10] sm:$0xf]
  %v20 = vld [vmem:[%s0 + $0x14] sm:$0xf]
  %v21 = vld [vmem:[%s0 + $0x18] sm:$0xf]
  %v22 = vld [vmem:[%s0 + $0x1c] sm:$0xf]
  %v23 = vld [vmem:[%s1] sm:$0xf]
  %v24 = vld [vmem:[%s1 + $0x4] sm:$0xf]
  %v25 = vld [vmem:[%s1 + $0x8] sm:$0xf]
  %v26 = vld [vmem:[%s1 + $0xc] sm:$0xf]
  %v27 = vld [vmem:[%s2] sm:$0xff]
  %v28 = vld [vmem:[%s2 + $0x8] sm:$0xff]
  %v29 = vld [vmem:[%s2 + $0x10] sm:$0xff]
  %v30 = vld [vmem:[%s2 + $0x18] sm:$0xff]
  %v31 = vld [vmem:[%s2 + $0x20] sm:$0xff]
  %v32 = vld [vmem:[%s2 + $0x28] sm:$0xff]
  %v33 = vld [vmem:[%s2 + $0x30] sm:$0xff]
  %v34 = vld [vmem:[%s2 + $0x38] sm:$0xff]
  %36 = vset.pattern.permute.xlu0 0
  %37 = vperm.xlu0 %36, %v27
  %v38 = vpop.permute.xlu0 %37
  %41 = vset.pattern.permute.xlu0 0
  %42 = vperm.xlu0 %41, %v28
  %v43 = vpop.permute.xlu0 %42
  %46 = vset.pattern.permute.xlu0 0
  %47 = vperm.xlu0 %46, %v29
  %v48 = vpop.permute.xlu0 %47
  %51 = vset.pattern.permute.xlu0 0
  %52 = vperm.xlu0 %51, %v30
  %v53 = vpop.permute.xlu0 %52
  %56 = vset.pattern.permute.xlu0 0
  %57 = vperm.xlu0 %56, %v31
  %v58 = vpop.permute.xlu0 %57
  %61 = vset.pattern.permute.xlu0 0
  %62 = vperm.xlu0 %61, %v32
  %v63 = vpop.permute.xlu0 %62
  %66 = vset.pattern.permute.xlu0 0
  %67 = vperm.xlu0 %66, %v33
  %v68 = vpop.permute.xlu0 %67
  %71 = vset.pattern.permute.xlu0 0
  %72 = vperm.xlu0 %71, %v34
  %v73 = vpop.permute.xlu0 %72
  %v83 = vunpack.c.l.b16 %v15
  %v84 = vunpack.c.l.b16 %v16
  %v85 = vunpack.c.l.b16 %v17
  %v86 = vunpack.c.l.b16 %v18
  %v87 = vunpack.c.l.b16 %v19
  %v88 = vunpack.c.l.b16 %v20
  %v89 = vunpack.c.l.b16 %v21
  %v90 = vunpack.c.l.b16 %v22
  %v91 = vpack.c.b16 %v84, %v83
  %v92 = vpack.c.b16 %v86, %v85
  %v93 = vpack.c.b16 %v88, %v87
  %v94 = vpack.c.b16 %v90, %v89
  %v99 = vunpack.c.l.b16 %v23
  %v100 = vunpack.c.l.b16 %v24
  %v101 = vunpack.c.l.b16 %v25
  %v102 = vunpack.c.l.b16 %v26
  %v103 = vpack.c.b16 %v100, %v99
  %v104 = vpack.c.b16 %v102, %v101
  %vm107 = vcmask 261120
  %v109 = vsel %vm107, %v91, 0
  %v112 = vsel %vm107, %v92, 0
  %v115 = vsel %vm107, %v93, 0
  %v118 = vsel %vm107, %v94, 0
  %120 = vmatpush.bf16.msra.mxu0 0
  %121 = vmatpush.bf16.msra.mxu0 0
  %122 = vmatpush.bf16.msra.mxu0 0
  %123 = vmatpush.bf16.msra.mxu0 0
  %124 = vmatpush.bf16.msra.mxu0 0
  %125 = vmatpush.bf16.msra.mxu0 0
  %126 = vmatpush.bf16.msra.mxu0 %v104
  %127 = vmatpush.bf16.msra.mxu0 %v103
  %128 = vmatmul.bf16.gmra.mxu0 %v109
  %v129 = vpop.f32.mrf.mxu0
  %v130 = vadd.f32 %v38, %v129
  %v131 = vpop.f32.mrf.mxu0
  %v132 = vadd.f32 %v43, %v131
  %133 = vmatmul.bf16.gmra.mxu0 %v112
  %v134 = vpop.f32.mrf.mxu0
  %v135 = vadd.f32 %v48, %v134
  %v136 = vpop.f32.mrf.mxu0
  %v137 = vadd.f32 %v53, %v136
  %138 = vmatmul.bf16.gmra.mxu0 %v115
  %v139 = vpop.f32.mrf.mxu0
  %v140 = vadd.f32 %v58, %v139
  %v141 = vpop.f32.mrf.mxu0
  %v142 = vadd.f32 %v63, %v141
  %143 = vmatmul.bf16.gmra.mxu0 %v118
  %v144 = vpop.f32.mrf.mxu0
  %v145 = vadd.f32 %v68, %v144
  %v146 = vpop.f32.mrf.mxu0
  %v147 = vadd.f32 %v73, %v146
  %148 = vdwg.mxu0
  %v149 = vpack.c.bf16 %v130, %v130
  %v150 = vpack.c.bf16 %v132, %v132
  %v151 = vpack.c.bf16 %v135, %v135
  %v152 = vpack.c.bf16 %v137, %v137
  %v153 = vpack.c.bf16 %v140, %v140
  %v154 = vpack.c.bf16 %v142, %v142
  %v155 = vpack.c.bf16 %v145, %v145
  %v156 = vpack.c.bf16 %v147, %v147
  %vm157 = vcmask 257024
  %158 = vst.msk [vmem:[%s3] sm:$0xf] %vm157, %v149
  %159 = vst.msk [vmem:[%s3 + $0x4] sm:$0xf] %vm157, %v150
  %160 = vst.msk [vmem:[%s3 + $0x8] sm:$0xf] %vm157, %v151
  %161 = vst.msk [vmem:[%s3 + $0xc] sm:$0xf] %vm157, %v152
  %162 = vst.msk [vmem:[%s3 + $0x10] sm:$0xf] %vm157, %v153
  %163 = vst.msk [vmem:[%s3 + $0x14] sm:$0xf] %vm157, %v154
  %164 = vst.msk [vmem:[%s3 + $0x18] sm:$0xf] %vm157, %v155
  %165 = vst.msk [vmem:[%s3 + $0x1c] sm:$0xf] %vm157, %v156
  // Predicated region
  $region14: #{unet_forward.23} parent=0 // pred_check
    _
  $region15: #{unet_forward.23} parent=0 // pred_check_branch
    %167 = sbr.rel (0) target = $region17
  $region16: #{unet_forward.23} parent=0 // pred_region
    _
  $region17: #{unet_forward.23} parent=0 // pred_fallthru
    _
  // Predicated region
  $region18: #{unet_forward.23} parent=0 // pred_check
    _
  $region19: #{unet_forward.23} parent=0 // pred_check_branch
    %169 = sbr.rel (0) target = $region21
  $region20: #{unet_forward.23} parent=0 // pred_region
    _
  $region21: #{unet_forward.23} parent=0 // pred_fallthru
    _

// kernel: unet_forward.24
$region0: #{unet_forward.24}
  #allocation0 [shape = 'u32[]', space=smem, size = 0x4, offset = 0x4, fixed_abs, tag = 'smem constant byte address 0x4 - core index']
  #allocation1 [shape = 'u32[72,128]{1,0:T(1,128)}', space=vmem, size = 0x9000, scoped, tag = 'internal scratch']
  %s0 = inlined_call_operand.vmem [shape: bf16[16,288], index: 0, kind: input, shape index: {}]
  %s1 = inlined_call_operand.vmem [shape: bf16[288,72], index: 1, kind: input, shape index: {}]
  %s2 = inlined_call_operand.vmem [shape: f32[16,1], index: 2, kind: input, shape index: {}]
  %s3 = inlined_call_operand.vmem [shape: bf16[16,72], index: 3, kind: output, shape index: {}]
  %s4 = sld [smem:[#allocation0]]
  $region22: #{unet_forward.24} parent=0
    _
  %s6 = ssub.s32 1, %s4
  %s7 = scalar_select 0, %s6, %s4
  // Predicated region
  $region2: #{unet_forward.24} parent=0 // pred_check
    _
  $region3: #{unet_forward.24} parent=0 // pred_check_branch
    %9 = sbr.rel (0) target = $region5
  $region4: #{unet_forward.24} parent=0 // pred_region
    _
  $region5: #{unet_forward.24} parent=0 // pred_fallthru
    _
  // Predicated region
  $region6: #{unet_forward.24} parent=0 // pred_check
    _
  $region7: #{unet_forward.24} parent=0 // pred_check_branch
    %11 = sbr.rel (0) target = $region9
  $region8: #{unet_forward.24} parent=0 // pred_region
    _
  $region9: #{unet_forward.24} parent=0 // pred_fallthru
    _
  // Predicated region
  $region10: #{unet_forward.24} parent=0 // pred_check
    _
  $region11: #{unet_forward.24} parent=0 // pred_check_branch
    %13 = sbr.rel (0) target = $region13
  $region12: #{unet_forward.24} parent=0 // pred_region
    _
  $region13: #{unet_forward.24} parent=0 // pred_fallthru
    _
  %v15 = vld [vmem:[%s0] sm:$0xff]
  %v16 = vld [vmem:[%s0 + $0x8] sm:$0xf]
  %v17 = vld [vmem:[%s0 + $0xc] sm:$0xff]
  %v18 = vld [vmem:[%s0 + $0x14] sm:$0xf]
  %v19 = vld [vmem:[%s1] sm:$0xf]
  %v20 = vld [vmem:[%s1 + $0x4] sm:$0xf]
  %v21 = vld [vmem:[%s1 + $0x8] sm:$0xf]
  %v22 = vld [vmem:[%s1 + $0xc] sm:$0xf]
  %v23 = vld [vmem:[%s1 + $0x10] sm:$0xf]
  %v24 = vld [vmem:[%s1 + $0x14] sm:$0xf]
  %v25 = vld [vmem:[%s1 + $0x18] sm:$0xf]
  %v26 = vld [vmem:[%s1 + $0x1c] sm:$0xf]
  %v27 = vld [vmem:[%s1 + $0x20] sm:$0xf]
  %v28 = vld [vmem:[%s1 + $0x24] sm:$0xf]
  %v29 = vld [vmem:[%s1 + $0x28] sm:$0xf]
  %v30 = vld [vmem:[%s1 + $0x2c] sm:$0xf]
  %v31 = vld [vmem:[%s1 + $0x30] sm:$0xf]
  %v32 = vld [vmem:[%s1 + $0x34] sm:$0xf]
  %v33 = vld [vmem:[%s1 + $0x38] sm:$0xf]
  %v34 = vld [vmem:[%s1 + $0x3c] sm:$0xf]
  %v35 = vld [vmem:[%s1 + $0x40] sm:$0xf]
  %v36 = vld [vmem:[%s1 + $0x44] sm:$0xf]
  %v37 = vld [vmem:[%s1 + $0x48] sm:$0xf]
  %v38 = vld [vmem:[%s1 + $0x4c] sm:$0xf]
  %v39 = vld [vmem:[%s1 + $0x50] sm:$0xf]
  %v40 = vld [vmem:[%s1 + $0x54] sm:$0xf]
  %v41 = vld [vmem:[%s1 + $0x58] sm:$0xf]
  %v42 = vld [vmem:[%s1 + $0x5c] sm:$0xf]
  %v43 = vld [vmem:[%s1 + $0x60] sm:$0xf]
  %v44 = vld [vmem:[%s1 + $0x64] sm:$0xf]
  %v45 = vld [vmem:[%s1 + $0x68] sm:$0xf]
  %v46 = vld [vmem:[%s1 + $0x6c] sm:$0xf]
  %v47 = vld [vmem:[%s1 + $0x70] sm:$0xf]
  %v48 = vld [vmem:[%s1 + $0x74] sm:$0xf]
  %v49 = vld [vmem:[%s1 + $0x78] sm:$0xf]
  %v50 = vld [vmem:[%s1 + $0x7c] sm:$0xf]
  %v51 = vld [vmem:[%s1 + $0x80] sm:$0xf]
  %v52 = vld [vmem:[%s1 + $0x84] sm:$0xf]
  %v53 = vld [vmem:[%s1 + $0x88] sm:$0xf]
  %v54 = vld [vmem:[%s1 + $0x8c] sm:$0xf]
  %v55 = vld [vmem:[%s2] sm:$0xff]
  %v56 = vld [vmem:[%s2 + $0x8] sm:$0xff]
  %58 = vset.pattern.permute.xlu0 0
  %59 = vperm.xlu0 %58, %v55
  %v60 = vpop.permute.xlu0 %59
  %63 = vset.pattern.permute.xlu0 0
  %64 = vperm.xlu0 %63, %v56
  %v65 = vpop.permute.xlu0 %64
  %v71 = vunpack.c.l.b16 %v15
  %v72 = vunpack.c.h.b16 %v15
  %v73 = vunpack.c.l.b16 %v16
  %v74 = vunpack.c.l.b16 %v17
  %v75 = vunpack.c.h.b16 %v17
  %v76 = vunpack.c.l.b16 %v18
  %v77 = vpack.c.b16 %v74, %v71
  %v78 = vpack.c.b16 %v75, %v72
  %v79 = vpack.c.b16 %v76, %v73
  %v118 = vunpack.c.l.b16 %v19
  %v119 = vunpack.c.l.b16 %v20
  %v120 = vunpack.c.l.b16 %v21
  %v121 = vunpack.c.l.b16 %v22
  %v122 = vunpack.c.l.b16 %v23
  %v123 = vunpack.c.l.b16 %v24
  %v124 = vunpack.c.l.b16 %v25
  %v125 = vunpack.c.l.b16 %v26
  %v126 = vunpack.c.l.b16 %v27
  %v127 = vunpack.c.l.b16 %v28
  %v128 = vunpack.c.l.b16 %v29
  %v129 = vunpack.c.l.b16 %v30
  %v130 = vunpack.c.l.b16 %v31
  %v131 = vunpack.c.l.b16 %v32
  %v132 = vunpack.c.l.b16 %v33
  %v133 = vunpack.c.l.b16 %v34
  %v134 = vunpack.c.l.b16 %v35
  %v135 = vunpack.c.l.b16 %v36
  %v136 = vunpack.c.l.b16 %v37
  %v137 = vunpack.c.l.b16 %v38
  %v138 = vunpack.c.l.b16 %v39
  %v139 = vunpack.c.l.b16 %v40
  %v140 = vunpack.c.l.b16 %v41
  %v141 = vunpack.c.l.b16 %v42
  %v142 = vunpack.c.l.b16 %v43
  %v143 = vunpack.c.l.b16 %v44
  %v144 = vunpack.c.l.b16 %v45
  %v145 = vunpack.c.l.b16 %v46
  %v146 = vunpack.c.l.b16 %v47
  %v147 = vunpack.c.l.b16 %v48
  %v148 = vunpack.c.l.b16 %v49
  %v149 = vunpack.c.l.b16 %v50
  %v150 = vunpack.c.l.b16 %v51
  %v151 = vunpack.c.l.b16 %v52
  %v152 = vunpack.c.l.b16 %v53
  %v153 = vunpack.c.l.b16 %v54
  %v154 = vpack.c.b16 %v119, %v118
  %v155 = vpack.c.b16 %v121, %v120
  %v156 = vpack.c.b16 %v123, %v122
  %v157 = vpack.c.b16 %v125, %v124
  %v158 = vpack.c.b16 %v127, %v126
  %v159 = vpack.c.b16 %v129, %v128
  %v160 = vpack.c.b16 %v131, %v130
  %v161 = vpack.c.b16 %v133, %v132
  %v162 = vpack.c.b16 %v135, %v134
  %v163 = vpack.c.b16 %v137, %v136
  %v164 = vpack.c.b16 %v139, %v138
  %v165 = vpack.c.b16 %v141, %v140
  %v166 = vpack.c.b16 %v143, %v142
  %v167 = vpack.c.b16 %v145, %v144
  %v168 = vpack.c.b16 %v147, %v146
  %v169 = vpack.c.b16 %v149, %v148
  %v170 = vpack.c.b16 %v151, %v150
  %v171 = vpack.c.b16 %v153, %v152
  %vm190 = vcmask 261120
  %v192 = vsel %vm190, %v79, 0
  %194 = vmatpush.bf16.msra.mxu0 %v161
  %195 = vmatpush.bf16.msra.mxu0 %v160
  %196 = vmatpush.bf16.msra.mxu0 %v159
  %197 = vmatpush.bf16.msra.mxu0 %v158
  %198 = vmatpush.bf16.msra.mxu0 %v157
  %199 = vmatpush.bf16.msra.mxu0 %v156
  %200 = vmatpush.bf16.msra.mxu0 %v155
  %201 = vmatpush.bf16.msra.mxu0 %v154
  %202 = vmatmul.bf16.gmra.mxu0 %v77
  %v203 = vpop.f32.mrf.mxu0
  %v204 = vadd.f32 %v60, %v203
  %v205 = vpop.f32.mrf.mxu0
  %v206 = vadd.f32 %v65, %v205
  %207 = vdwg.mxu0
  %208 = vmatpush.bf16.msra.mxu0 %v169
  %209 = vmatpush.bf16.msra.mxu0 %v168
  %210 = vmatpush.bf16.msra.mxu0 %v167
  %211 = vmatpush.bf16.msra.mxu0 %v166
  %212 = vmatpush.bf16.msra.mxu0 %v165
  %213 = vmatpush.bf16.msra.mxu0 %v164
  %214 = vmatpush.bf16.msra.mxu0 %v163
  %215 = vmatpush.bf16.msra.mxu0 %v162
  %216 = vmatmul.bf16.gmra.mxu0 %v78
  %v217 = vpop.f32.mrf.mxu0
  %v218 = vadd.f32 %v204, %v217
  %v219 = vpop.f32.mrf.mxu0
  %v220 = vadd.f32 %v206, %v219
  %221 = vdwg.mxu0
  %222 = vmatpush.bf16.msra.mxu0 0
  %223 = vmatpush.bf16.msra.mxu0 0
  %224 = vmatpush.bf16.msra.mxu0 0
  %225 = vmatpush.bf16.msra.mxu0 0
  %226 = vmatpush.bf16.msra.mxu0 0
  %227 = vmatpush.bf16.msra.mxu0 0
  %228 = vmatpush.bf16.msra.mxu0 %v171
  %229 = vmatpush.bf16.msra.mxu0 %v170
  %230 = vmatmul.bf16.gmra.mxu0 %v192
  %v231 = vpop.f32.mrf.mxu0
  %v232 = vadd.f32 %v218, %v231
  %v233 = vpop.f32.mrf.mxu0
  %v234 = vadd.f32 %v220, %v233
  %235 = vdwg.mxu0
  %v236 = vmax.f32 %v232, 0.0
  %v237 = vmax.f32 %v234, 0.0
  %v238 = vpack.c.bf16 %v236, %v236
  %v239 = vpack.c.bf16 %v237, %v237
  %vm240 = vcmask 584704
  %241 = vst.msk [vmem:[%s3] sm:$0xf] %vm240, %v238
  %242 = vst.msk [vmem:[%s3 + $0x4] sm:$0xf] %vm240, %v239
  // Predicated region
  $region14: #{unet_forward.24} parent=0 // pred_check
    _
  $region15: #{unet_forward.24} parent=0 // pred_check_branch
    %244 = sbr.rel (0) target = $region17
  $region16: #{unet_forward.24} parent=0 // pred_region
    _
  $region17: #{unet_forward.24} parent=0 // pred_fallthru
    _
  // Predicated region
  $region18: #{unet_forward.24} parent=0 // pred_check
    _
  $region19: #{unet_forward.24} parent=0 // pred_check_branch
    %246 = sbr.rel (0) target = $region21
  $region20: #{unet_forward.24} parent=0 // pred_region
    _
  $region21: #{unet_forward.24} parent=0 // pred_fallthru
    _

// kernel: unet_forward.25
$region0: #{unet_forward.25}
  #allocation0 [shape = 'u32[]', space=smem, size = 0x4, offset = 0x4, fixed_abs, tag = 'smem constant byte address 0x4 - core index']
  #allocation1 [shape = 'u32[72,128]{1,0:T(1,128)}', space=vmem, size = 0x9000, scoped, tag = 'internal scratch']
  %s0 = inlined_call_operand.vmem [shape: bf16[16,144], index: 0, kind: input, shape index: {}]
  %s1 = inlined_call_operand.vmem [shape: bf16[144,32], index: 1, kind: input, shape index: {}]
  %s2 = inlined_call_operand.vmem [shape: f32[16,1], index: 2, kind: input, shape index: {}]
  %s3 = inlined_call_operand.vmem [shape: bf16[16,32], index: 3, kind: output, shape index: {}]
  %s4 = sld [smem:[#allocation0]]
  $region22: #{unet_forward.25} parent=0
    _
  %s6 = ssub.s32 1, %s4
  %s7 = scalar_select 0, %s6, %s4
  // Predicated region
  $region2: #{unet_forward.25} parent=0 // pred_check
    _
  $region3: #{unet_forward.25} parent=0 // pred_check_branch
    %9 = sbr.rel (0) target = $region5
  $region4: #{unet_forward.25} parent=0 // pred_region
    _
  $region5: #{unet_forward.25} parent=0 // pred_fallthru
    _
  // Predicated region
  $region6: #{unet_forward.25} parent=0 // pred_check
    _
  $region7: #{unet_forward.25} parent=0 // pred_check_branch
    %11 = sbr.rel (0) target = $region9
  $region8: #{unet_forward.25} parent=0 // pred_region
    _
  $region9: #{unet_forward.25} parent=0 // pred_fallthru
    _
  // Predicated region
  $region10: #{unet_forward.25} parent=0 // pred_check
    _
  $region11: #{unet_forward.25} parent=0 // pred_check_branch
    %13 = sbr.rel (0) target = $region13
  $region12: #{unet_forward.25} parent=0 // pred_region
    _
  $region13: #{unet_forward.25} parent=0 // pred_fallthru
    _
  %v15 = vld [vmem:[%s0] sm:$0xff]
  %v16 = vld [vmem:[%s0 + $0x8] sm:$0xff]
  %v17 = vld [vmem:[%s1] sm:$0xf]
  %v18 = vld [vmem:[%s1 + $0x4] sm:$0xf]
  %v19 = vld [vmem:[%s1 + $0x8] sm:$0xf]
  %v20 = vld [vmem:[%s1 + $0xc] sm:$0xf]
  %v21 = vld [vmem:[%s1 + $0x10] sm:$0xf]
  %v22 = vld [vmem:[%s1 + $0x14] sm:$0xf]
  %v23 = vld [vmem:[%s1 + $0x18] sm:$0xf]
  %v24 = vld [vmem:[%s1 + $0x1c] sm:$0xf]
  %v25 = vld [vmem:[%s1 + $0x20] sm:$0xf]
  %v26 = vld [vmem:[%s1 + $0x24] sm:$0xf]
  %v27 = vld [vmem:[%s1 + $0x28] sm:$0xf]
  %v28 = vld [vmem:[%s1 + $0x2c] sm:$0xf]
  %v29 = vld [vmem:[%s1 + $0x30] sm:$0xf]
  %v30 = vld [vmem:[%s1 + $0x34] sm:$0xf]
  %v31 = vld [vmem:[%s1 + $0x38] sm:$0xf]
  %v32 = vld [vmem:[%s1 + $0x3c] sm:$0xf]
  %v33 = vld [vmem:[%s1 + $0x40] sm:$0xf]
  %v34 = vld [vmem:[%s1 + $0x44] sm:$0xf]
  %v35 = vld [vmem:[%s2] sm:$0xff]
  %v36 = vld [vmem:[%s2 + $0x8] sm:$0xff]
  %38 = vset.pattern.permute.xlu0 0
  %39 = vperm.xlu0 %38, %v35
  %v40 = vpop.permute.xlu0 %39
  %43 = vset.pattern.permute.xlu0 0
  %44 = vperm.xlu0 %43, %v36
  %v45 = vpop.permute.xlu0 %44
  %v49 = vunpack.c.l.b16 %v15
  %v50 = vunpack.c.h.b16 %v15
  %v51 = vunpack.c.l.b16 %v16
  %v52 = vunpack.c.h.b16 %v16
  %v53 = vpack.c.b16 %v51, %v49
  %v54 = vpack.c.b16 %v52, %v50
  %v74 = vunpack.c.l.b16 %v17
  %v75 = vunpack.c.l.b16 %v18
  %v76 = vunpack.c.l.b16 %v19
  %v77 = vunpack.c.l.b16 %v20
  %v78 = vunpack.c.l.b16 %v21
  %v79 = vunpack.c.l.b16 %v22
  %v80 = vunpack.c.l.b16 %v23
  %v81 = vunpack.c.l.b16 %v24
  %v82 = vunpack.c.l.b16 %v25
  %v83 = vunpack.c.l.b16 %v26
  %v84 = vunpack.c.l.b16 %v27
  %v85 = vunpack.c.l.b16 %v28
  %v86 = vunpack.c.l.b16 %v29
  %v87 = vunpack.c.l.b16 %v30
  %v88 = vunpack.c.l.b16 %v31
  %v89 = vunpack.c.l.b16 %v32
  %v90 = vunpack.c.l.b16 %v33
  %v91 = vunpack.c.l.b16 %v34
  %v92 = vpack.c.b16 %v75, %v74
  %v93 = vpack.c.b16 %v77, %v76
  %v94 = vpack.c.b16 %v79, %v78
  %v95 = vpack.c.b16 %v81, %v80
  %v96 = vpack.c.b16 %v83, %v82
  %v97 = vpack.c.b16 %v85, %v84
  %v98 = vpack.c.b16 %v87, %v86
  %v99 = vpack.c.b16 %v89, %v88
  %v100 = vpack.c.b16 %v91, %v90
  %vm110 = vcmask 130048
  %v112 = vsel %vm110, %v54, 0
  %114 = vmatpush.bf16.msra.mxu0 %v99
  %115 = vmatpush.bf16.msra.mxu0 %v98
  %116 = vmatpush.bf16.msra.mxu0 %v97
  %117 = vmatpush.bf16.msra.mxu0 %v96
  %118 = vmatpush.bf16.msra.mxu0 %v95
  %119 = vmatpush.bf16.msra.mxu0 %v94
  %120 = vmatpush.bf16.msra.mxu0 %v93
  %121 = vmatpush.bf16.msra.mxu0 %v92
  %122 = vmatmul.bf16.gmra.mxu0 %v53
  %v123 = vpop.f32.mrf.mxu0
  %v124 = vadd.f32 %v40, %v123
  %v125 = vpop.f32.mrf.mxu0
  %v126 = vadd.f32 %v45, %v125
  %127 = vdwg.mxu0
  %128 = vmatpush.bf16.msra.mxu0 0
  %129 = vmatpush.bf16.msra.mxu0 0
  %130 = vmatpush.bf16.msra.mxu0 0
  %131 = vmatpush.bf16.msra.mxu0 0
  %132 = vmatpush.bf16.msra.mxu0 0
  %133 = vmatpush.bf16.msra.mxu0 0
  %134 = vmatpush.bf16.msra.mxu0 0
  %135 = vmatpush.bf16.msra.mxu0 %v100
  %136 = vmatmul.bf16.gmra.mxu0 %v112
  %v137 = vpop.f32.mrf.mxu0
  %v138 = vadd.f32 %v124, %v137
  %v139 = vpop.f32.mrf.mxu0
  %v140 = vadd.f32 %v126, %v139
  %141 = vdwg.mxu0
  %v142 = vmax.f32 %v138, 0.0
  %v143 = vmax.f32 %v140, 0.0
  %v144 = vpack.c.bf16 %v142, %v142
  %v145 = vpack.c.bf16 %v143, %v143
  %vm146 = vcmask 257024
  %147 = vst.msk [vmem:[%s3] sm:$0xf] %vm146, %v144
  %148 = vst.msk [vmem:[%s3 + $0x4] sm:$0xf] %vm146, %v145
  // Predicated region
  $region14: #{unet_forward.25} parent=0 // pred_check
    _
  $region15: #{unet_forward.25} parent=0 // pred_check_branch
    %150 = sbr.rel (0) target = $region17
  $region16: #{unet_forward.25} parent=0 // pred_region
    _
  $region17: #{unet_forward.25} parent=0 // pred_fallthru
    _
  // Predicated region
  $region18: #{unet_forward.25} parent=0 // pred_check
    _
  $region19: #{unet_forward.25} parent=0 // pred_check_branch
    %152 = sbr.rel (0) target = $region21
  $region20: #{unet_forward.25} parent=0 // pred_region
    _
  $region21: #{unet_forward.25} parent=0 // pred_fallthru
    _

// kernel: unet_forward.26
$region0: #{unet_forward.26}
  #allocation0 [shape = 'u32[]', space=smem, size = 0x4, offset = 0x4, fixed_abs, tag = 'smem constant byte address 0x4 - core index']
  #allocation1 [shape = 'u32[72,128]{1,0:T(1,128)}', space=vmem, size = 0x9000, scoped, tag = 'internal scratch']
  %s0 = inlined_call_operand.vmem [shape: bf16[32,16], index: 0, kind: input, shape index: {}]
  %s1 = inlined_call_operand.vmem [shape: bf16[16,32], index: 1, kind: input, shape index: {}]
  %s2 = inlined_call_operand.vmem [shape: f32[32,1], index: 2, kind: input, shape index: {}]
  %s3 = inlined_call_operand.vmem [shape: bf16[32,32], index: 3, kind: output, shape index: {}]
  %s4 = sld [smem:[#allocation0]]
  $region22: #{unet_forward.26} parent=0
    _
  %s6 = ssub.s32 1, %s4
  %s7 = scalar_select 0, %s6, %s4
  // Predicated region
  $region2: #{unet_forward.26} parent=0 // pred_check
    _
  $region3: #{unet_forward.26} parent=0 // pred_check_branch
    %9 = sbr.rel (0) target = $region5
  $region4: #{unet_forward.26} parent=0 // pred_region
    _
  $region5: #{unet_forward.26} parent=0 // pred_fallthru
    _
  // Predicated region
  $region6: #{unet_forward.26} parent=0 // pred_check
    _
  $region7: #{unet_forward.26} parent=0 // pred_check_branch
    %11 = sbr.rel (0) target = $region9
  $region8: #{unet_forward.26} parent=0 // pred_region
    _
  $region9: #{unet_forward.26} parent=0 // pred_fallthru
    _
  // Predicated region
  $region10: #{unet_forward.26} parent=0 // pred_check
    _
  $region11: #{unet_forward.26} parent=0 // pred_check_branch
    %13 = sbr.rel (0) target = $region13
  $region12: #{unet_forward.26} parent=0 // pred_region
    _
  $region13: #{unet_forward.26} parent=0 // pred_fallthru
    _
  %v15 = vld [vmem:[%s0] sm:$0xf]
  %v16 = vld [vmem:[%s0 + $0x4] sm:$0xf]
  %v17 = vld [vmem:[%s0 + $0x8] sm:$0xf]
  %v18 = vld [vmem:[%s0 + $0xc] sm:$0xf]
  %v19 = vld [vmem:[%s1] sm:$0xf]
  %v20 = vld [vmem:[%s1 + $0x4] sm:$0xf]
  %v21 = vld [vmem:[%s2] sm:$0xff]
  %v22 = vld [vmem:[%s2 + $0x8] sm:$0xff]
  %v23 = vld [vmem:[%s2 + $0x10] sm:$0xff]
  %v24 = vld [vmem:[%s2 + $0x18] sm:$0xff]
  %26 = vset.pattern.permute.xlu0 0
  %27 = vperm.xlu0 %26, %v21
  %v28 = vpop.permute.xlu0 %27
  %31 = vset.pattern.permute.xlu0 0
  %32 = vperm.xlu0 %31, %v22
  %v33 = vpop.permute.xlu0 %32
  %36 = vset.pattern.permute.xlu0 0
  %37 = vperm.xlu0 %36, %v23
  %v38 = vpop.permute.xlu0 %37
  %41 = vset.pattern.permute.xlu0 0
  %42 = vperm.xlu0 %41, %v24
  %v43 = vpop.permute.xlu0 %42
  %v49 = vunpack.c.l.b16 %v15
  %v50 = vunpack.c.l.b16 %v16
  %v51 = vunpack.c.l.b16 %v17
  %v52 = vunpack.c.l.b16 %v18
  %v53 = vpack.c.b16 %v50, %v49
  %v54 = vpack.c.b16 %v52, %v51
  %v57 = vunpack.c.l.b16 %v19
  %v58 = vunpack.c.l.b16 %v20
  %v59 = vpack.c.b16 %v58, %v57
  %vm61 = vcmask 130048
  %v63 = vsel %vm61, %v53, 0
  %v66 = vsel %vm61, %v54, 0
  %68 = vmatpush.bf16.msra.mxu0 0
  %69 = vmatpush.bf16.msra.mxu0 0
  %70 = vmatpush.bf16.msra.mxu0 0
  %71 = vmatpush.bf16.msra.mxu0 0
  %72 = vmatpush.bf16.msra.mxu0 0
  %73 = vmatpush.bf16.msra.mxu0 0
  %74 = vmatpush.bf16.msra.mxu0 0
  %75 = vmatpush.bf16.msra.mxu0 %v59
  %76 = vmatmul.bf16.gmra.mxu0 %v63
  %v77 = vpop.f32.mrf.mxu0
  %v78 = vadd.f32 %v28, %v77
  %v79 = vpop.f32.mrf.mxu0
  %v80 = vadd.f32 %v33, %v79
  %81 = vmatmul.bf16.gmra.mxu0 %v66
  %v82 = vpop.f32.mrf.mxu0
  %v83 = vadd.f32 %v38, %v82
  %v84 = vpop.f32.mrf.mxu0
  %v85 = vadd.f32 %v43, %v84
  %86 = vdwg.mxu0
  %v87 = vpack.c.bf16 %v78, %v78
  %v88 = vpack.c.bf16 %v80, %v80
  %v89 = vpack.c.bf16 %v83, %v83
  %v90 = vpack.c.bf16 %v85, %v85
  %vm91 = vcmask 257024
  %92 = vst.msk [vmem:[%s3] sm:$0xf] %vm91, %v87
  %93 = vst.msk [vmem:[%s3 + $0x4] sm:$0xf] %vm91, %v88
  %94 = vst.msk [vmem:[%s3 + $0x8] sm:$0xf] %vm91, %v89
  %95 = vst.msk [vmem:[%s3 + $0xc] sm:$0xf] %vm91, %v90
  // Predicated region
  $region14: #{unet_forward.26} parent=0 // pred_check
    _
  $region15: #{unet_forward.26} parent=0 // pred_check_branch
    %97 = sbr.rel (0) target = $region17
  $region16: #{unet_forward.26} parent=0 // pred_region
    _
  $region17: #{unet_forward.26} parent=0 // pred_fallthru
    _
  // Predicated region
  $region18: #{unet_forward.26} parent=0 // pred_check
    _
  $region19: #{unet_forward.26} parent=0 // pred_check_branch
    %99 = sbr.rel (0) target = $region21
  $region20: #{unet_forward.26} parent=0 // pred_region
    _
  $region21: #{unet_forward.26} parent=0 // pred_fallthru
    _

// kernel: unet_forward.27
$region0: #{unet_forward.27}
  #allocation0 [shape = 'u32[]', space=smem, size = 0x4, offset = 0x4, fixed_abs, tag = 'smem constant byte address 0x4 - core index']
  #allocation1 [shape = 'u32[72,128]{1,0:T(1,128)}', space=vmem, size = 0x9000, scoped, tag = 'internal scratch']
  %s0 = inlined_call_operand.vmem [shape: bf16[8,144], index: 0, kind: input, shape index: {}]
  %s1 = inlined_call_operand.vmem [shape: bf16[144,72], index: 1, kind: input, shape index: {}]
  %s2 = inlined_call_operand.vmem [shape: f32[8,1], index: 2, kind: input, shape index: {}]
  %s3 = inlined_call_operand.vmem [shape: bf16[8,72], index: 3, kind: output, shape index: {}]
  %s4 = sld [smem:[#allocation0]]
  $region22: #{unet_forward.27} parent=0
    _
  %s6 = ssub.s32 1, %s4
  %s7 = scalar_select 0, %s6, %s4
  // Predicated region
  $region2: #{unet_forward.27} parent=0 // pred_check
    _
  $region3: #{unet_forward.27} parent=0 // pred_check_branch
    %9 = sbr.rel (0) target = $region5
  $region4: #{unet_forward.27} parent=0 // pred_region
    _
  $region5: #{unet_forward.27} parent=0 // pred_fallthru
    _
  // Predicated region
  $region6: #{unet_forward.27} parent=0 // pred_check
    _
  $region7: #{unet_forward.27} parent=0 // pred_check_branch
    %11 = sbr.rel (0) target = $region9
  $region8: #{unet_forward.27} parent=0 // pred_region
    _
  $region9: #{unet_forward.27} parent=0 // pred_fallthru
    _
  // Predicated region
  $region10: #{unet_forward.27} parent=0 // pred_check
    _
  $region11: #{unet_forward.27} parent=0 // pred_check_branch
    %13 = sbr.rel (0) target = $region13
  $region12: #{unet_forward.27} parent=0 // pred_region
    _
  $region13: #{unet_forward.27} parent=0 // pred_fallthru
    _
  %v15 = vld [vmem:[%s0] sm:$0xff]
  %v16 = vld [vmem:[%s1] sm:$0xf]
  %v17 = vld [vmem:[%s1 + $0x4] sm:$0xf]
  %v18 = vld [vmem:[%s1 + $0x8] sm:$0xf]
  %v19 = vld [vmem:[%s1 + $0xc] sm:$0xf]
  %v20 = vld [vmem:[%s1 + $0x10] sm:$0xf]
  %v21 = vld [vmem:[%s1 + $0x14] sm:$0xf]
  %v22 = vld [vmem:[%s1 + $0x18] sm:$0xf]
  %v23 = vld [vmem:[%s1 + $0x1c] sm:$0xf]
  %v24 = vld [vmem:[%s1 + $0x20] sm:$0xf]
  %v25 = vld [vmem:[%s1 + $0x24] sm:$0xf]
  %v26 = vld [vmem:[%s1 + $0x28] sm:$0xf]
  %v27 = vld [vmem:[%s1 + $0x2c] sm:$0xf]
  %v28 = vld [vmem:[%s1 + $0x30] sm:$0xf]
  %v29 = vld [vmem:[%s1 + $0x34] sm:$0xf]
  %v30 = vld [vmem:[%s1 + $0x38] sm:$0xf]
  %v31 = vld [vmem:[%s1 + $0x3c] sm:$0xf]
  %v32 = vld [vmem:[%s1 + $0x40] sm:$0xf]
  %v33 = vld [vmem:[%s1 + $0x44] sm:$0xf]
  %v34 = vld [vmem:[%s2] sm:$0xff]
  %36 = vset.pattern.permute.xlu0 0
  %37 = vperm.xlu0 %36, %v34
  %v38 = vpop.permute.xlu0 %37
  %v41 = vunpack.c.l.b16 %v15
  %v42 = vunpack.c.h.b16 %v15
  %v43 = vpack.c.b16 %v41, %v41
  %v44 = vpack.c.b16 %v42, %v42
  %v64 = vunpack.c.l.b16 %v16
  %v65 = vunpack.c.l.b16 %v17
  %v66 = vunpack.c.l.b16 %v18
  %v67 = vunpack.c.l.b16 %v19
  %v68 = vunpack.c.l.b16 %v20
  %v69 = vunpack.c.l.b16 %v21
  %v70 = vunpack.c.l.b16 %v22
  %v71 = vunpack.c.l.b16 %v23
  %v72 = vunpack.c.l.b16 %v24
  %v73 = vunpack.c.l.b16 %v25
  %v74 = vunpack.c.l.b16 %v26
  %v75 = vunpack.c.l.b16 %v27
  %v76 = vunpack.c.l.b16 %v28
  %v77 = vunpack.c.l.b16 %v29
  %v78 = vunpack.c.l.b16 %v30
  %v79 = vunpack.c.l.b16 %v31
  %v80 = vunpack.c.l.b16 %v32
  %v81 = vunpack.c.l.b16 %v33
  %v82 = vpack.c.b16 %v65, %v64
  %v83 = vpack.c.b16 %v67, %v66
  %v84 = vpack.c.b16 %v69, %v68
  %v85 = vpack.c.b16 %v71, %v70
  %v86 = vpack.c.b16 %v73, %v72
  %v87 = vpack.c.b16 %v75, %v74
  %v88 = vpack.c.b16 %v77, %v76
  %v89 = vpack.c.b16 %v79, %v78
  %v90 = vpack.c.b16 %v81, %v80
  %vm100 = vcmask 130048
  %v102 = vsel %vm100, %v44, 0
  %104 = vmatpush.bf16.msra.mxu0 %v89
  %105 = vmatpush.bf16.msra.mxu0 %v88
  %106 = vmatpush.bf16.msra.mxu0 %v87
  %107 = vmatpush.bf16.msra.mxu0 %v86
  %108 = vmatpush.bf16.msra.mxu0 %v85
  %109 = vmatpush.bf16.msra.mxu0 %v84
  %110 = vmatpush.bf16.msra.mxu0 %v83
  %111 = vmatpush.bf16.msra.mxu0 %v82
  %112 = vmatmul.bf16.gmra.mxu0 %v43
  %v113 = vpop.f32.mrf.mxu0
  %v114 = vadd.f32 %v38, %v113
  %v115 = vpop.f32.mrf.mxu0
  %116 = vdwg.mxu0
  %117 = vmatpush.bf16.msra.mxu0 0
  %118 = vmatpush.bf16.msra.mxu0 0
  %119 = vmatpush.bf16.msra.mxu0 0
  %120 = vmatpush.bf16.msra.mxu0 0
  %121 = vmatpush.bf16.msra.mxu0 0
  %122 = vmatpush.bf16.msra.mxu0 0
  %123 = vmatpush.bf16.msra.mxu0 0
  %124 = vmatpush.bf16.msra.mxu0 %v90
  %125 = vmatmul.bf16.gmra.mxu0 %v102
  %v126 = vpop.f32.mrf.mxu0
  %v127 = vadd.f32 %v114, %v126
  %v128 = vpop.f32.mrf.mxu0
  %129 = vdwg.mxu0
  %v130 = vmax.f32 %v127, 0.0
  %v131 = vpack.c.bf16 %v130, %v130
  %vm132 = vcmask 584704
  %133 = vst.msk [vmem:[%s3] sm:$0xf] %vm132, %v131
  // Predicated region
  $region14: #{unet_forward.27} parent=0 // pred_check
    _
  $region15: #{unet_forward.27} parent=0 // pred_check_branch
    %135 = sbr.rel (0) target = $region17
  $region16: #{unet_forward.27} parent=0 // pred_region
    _
  $region17: #{unet_forward.27} parent=0 // pred_fallthru
    _
  // Predicated region
  $region18: #{unet_forward.27} parent=0 // pred_check
    _
  $region19: #{unet_forward.27} parent=0 // pred_check_branch
    %137 = sbr.rel (0) target = $region21
  $region20: #{unet_forward.27} parent=0 // pred_region
    _
  $region21: #{unet_forward.27} parent=0 // pred_fallthru
    _

// kernel: unet_forward.28
$region0: #{unet_forward.28}
  #allocation0 [shape = 'u32[]', space=smem, size = 0x4, offset = 0x4, fixed_abs, tag = 'smem constant byte address 0x4 - core index']
  #allocation1 [shape = 'u32[72,128]{1,0:T(1,128)}', space=vmem, size = 0x9000, scoped, tag = 'internal scratch']
  %s0 = inlined_call_operand.vmem [shape: bf16[8,72], index: 0, kind: input, shape index: {}]
  %s1 = inlined_call_operand.vmem [shape: bf16[72,32], index: 1, kind: input, shape index: {}]
  %s2 = inlined_call_operand.vmem [shape: f32[8,1], index: 2, kind: input, shape index: {}]
  %s3 = inlined_call_operand.vmem [shape: bf16[8,32], index: 3, kind: output, shape index: {}]
  %s4 = sld [smem:[#allocation0]]
  $region22: #{unet_forward.28} parent=0
    _
  %s6 = ssub.s32 1, %s4
  %s7 = scalar_select 0, %s6, %s4
  // Predicated region
  $region2: #{unet_forward.28} parent=0 // pred_check
    _
  $region3: #{unet_forward.28} parent=0 // pred_check_branch
    %9 = sbr.rel (0) target = $region5
  $region4: #{unet_forward.28} parent=0 // pred_region
    _
  $region5: #{unet_forward.28} parent=0 // pred_fallthru
    _
  // Predicated region
  $region6: #{unet_forward.28} parent=0 // pred_check
    _
  $region7: #{unet_forward.28} parent=0 // pred_check_branch
    %11 = sbr.rel (0) target = $region9
  $region8: #{unet_forward.28} parent=0 // pred_region
    _
  $region9: #{unet_forward.28} parent=0 // pred_fallthru
    _
  // Predicated region
  $region10: #{unet_forward.28} parent=0 // pred_check
    _
  $region11: #{unet_forward.28} parent=0 // pred_check_branch
    %13 = sbr.rel (0) target = $region13
  $region12: #{unet_forward.28} parent=0 // pred_region
    _
  $region13: #{unet_forward.28} parent=0 // pred_fallthru
    _
  %v15 = vld [vmem:[%s0] sm:$0xf]
  %v16 = vld [vmem:[%s1] sm:$0xf]
  %v17 = vld [vmem:[%s1 + $0x4] sm:$0xf]
  %v18 = vld [vmem:[%s1 + $0x8] sm:$0xf]
  %v19 = vld [vmem:[%s1 + $0xc] sm:$0xf]
  %v20 = vld [vmem:[%s1 + $0x10] sm:$0xf]
  %v21 = vld [vmem:[%s1 + $0x14] sm:$0xf]
  %v22 = vld [vmem:[%s1 + $0x18] sm:$0xf]
  %v23 = vld [vmem:[%s1 + $0x1c] sm:$0xf]
  %v24 = vld [vmem:[%s1 + $0x20] sm:$0xf]
  %v25 = vld [vmem:[%s2] sm:$0xff]
  %27 = vset.pattern.permute.xlu0 0
  %28 = vperm.xlu0 %27, %v25
  %v29 = vpop.permute.xlu0 %28
  %v40 = vunpack.c.l.b16 %v16
  %v41 = vunpack.c.l.b16 %v17
  %v42 = vunpack.c.l.b16 %v18
  %v43 = vunpack.c.l.b16 %v19
  %v44 = vunpack.c.l.b16 %v20
  %v45 = vunpack.c.l.b16 %v21
  %v46 = vunpack.c.l.b16 %v22
  %v47 = vunpack.c.l.b16 %v23
  %v48 = vunpack.c.l.b16 %v24
  %v49 = vpack.c.b16 %v41, %v40
  %v50 = vpack.c.b16 %v43, %v42
  %v51 = vpack.c.b16 %v45, %v44
  %v52 = vpack.c.b16 %v47, %v46
  %v53 = vpack.c.b16 %v48, %v48
  %vm58 = vcmask 588800
  %v60 = vsel %vm58, %v15, 0
  %vm62 = vcmask 1043456
  %v64 = vsel %vm62, %v53, 0
  %66 = vmatpush.bf16.msra.mxu0 0
  %67 = vmatpush.bf16.msra.mxu0 0
  %68 = vmatpush.bf16.msra.mxu0 0
  %69 = vmatpush.bf16.msra.mxu0 %v64
  %70 = vmatpush.bf16.msra.mxu0 %v52
  %71 = vmatpush.bf16.msra.mxu0 %v51
  %72 = vmatpush.bf16.msra.mxu0 %v50
  %73 = vmatpush.bf16.msra.mxu0 %v49
  %74 = vmatmul.bf16.gmra.mxu0 %v60
  %v75 = vpop.f32.mrf.mxu0
  %v76 = vadd.f32 %v29, %v75
  %v77 = vpop.f32.mrf.mxu0
  %78 = vdwg.mxu0
  %v79 = vmax.f32 %v76, 0.0
  %v80 = vpack.c.bf16 %v79, %v79
  %vm81 = vcmask 257024
  %82 = vst.msk [vmem:[%s3] sm:$0xf] %vm81, %v80
  // Predicated region
  $region14: #{unet_forward.28} parent=0 // pred_check
    _
  $region15: #{unet_forward.28} parent=0 // pred_check_branch
    %84 = sbr.rel (0) target = $region17
  $region16: #{unet_forward.28} parent=0 // pred_region
    _
  $region17: #{unet_forward.28} parent=0 // pred_fallthru
    _
  // Predicated region
  $region18: #{unet_forward.28} parent=0 // pred_check
    _
  $region19: #{unet_forward.28} parent=0 // pred_check_branch
    %86 = sbr.rel (0) target = $region21
  $region20: #{unet_forward.28} parent=0 // pred_region
    _
  $region21: #{unet_forward.28} parent=0 // pred_fallthru
    _

// kernel: unet_forward.29
$region0: #{unet_forward.29}
  #allocation0 [shape = 'u32[]', space=smem, size = 0x4, offset = 0x4, fixed_abs, tag = 'smem constant byte address 0x4 - core index']
  #allocation1 [shape = 'u32[72,128]{1,0:T(1,128)}', space=vmem, size = 0x9000, scoped, tag = 'internal scratch']
  %s0 = inlined_call_operand.vmem [shape: bf16[3,8], index: 0, kind: input, shape index: {}]
  %s1 = inlined_call_operand.vmem [shape: f32[3,1], index: 1, kind: input, shape index: {}]
  %s2 = inlined_call_operand.vmem [shape: bf16[27,3], index: 2, kind: input, shape index: {}]
  %s3 = inlined_call_operand.vmem [shape: f32[27,1], index: 3, kind: input, shape index: {}]
  %s4 = inlined_call_operand.vmem [shape: bf16[8,32], index: 4, kind: input, shape index: {}]
  %s5 = inlined_call_operand.vmem [shape: bf16[27,32], index: 5, kind: output, shape index: {}]
  %s6 = sld [smem:[#allocation0]]
  $region30: #{unet_forward.29} parent=0
    _
  %s8 = ssub.s32 1, %s6
  %s9 = scalar_select 0, %s8, %s6
  // Predicated region
  $region2: #{unet_forward.29} parent=0 // pred_check
    _
  $region3: #{unet_forward.29} parent=0 // pred_check_branch
    %11 = sbr.rel (0) target = $region5
  $region4: #{unet_forward.29} parent=0 // pred_region
    _
  $region5: #{unet_forward.29} parent=0 // pred_fallthru
    _
  // Predicated region
  $region6: #{unet_forward.29} parent=0 // pred_check
    _
  $region7: #{unet_forward.29} parent=0 // pred_check_branch
    %13 = sbr.rel (0) target = $region9
  $region8: #{unet_forward.29} parent=0 // pred_region
    _
  $region9: #{unet_forward.29} parent=0 // pred_fallthru
    _
  // Predicated region
  $region10: #{unet_forward.29} parent=0 // pred_check
    _
  $region11: #{unet_forward.29} parent=0 // pred_check_branch
    %15 = sbr.rel (0) target = $region13
  $region12: #{unet_forward.29} parent=0 // pred_region
    _
  $region13: #{unet_forward.29} parent=0 // pred_fallthru
    _
  // Predicated region
  $region14: #{unet_forward.29} parent=0 // pred_check
    _
  $region15: #{unet_forward.29} parent=0 // pred_check_branch
    %17 = sbr.rel (0) target = $region17
  $region16: #{unet_forward.29} parent=0 // pred_region
    _
  $region17: #{unet_forward.29} parent=0 // pred_fallthru
    _
  // Predicated region
  $region18: #{unet_forward.29} parent=0 // pred_check
    _
  $region19: #{unet_forward.29} parent=0 // pred_check_branch
    %19 = sbr.rel (0) target = $region21
  $region20: #{unet_forward.29} parent=0 // pred_region
    _
  $region21: #{unet_forward.29} parent=0 // pred_fallthru
    _
  %v21 = vld [vmem:[%s0] sm:$0x3]
  %v22 = vld [vmem:[%s4] sm:$0xf]
  %v23 = vld [vmem:[%s1] sm:$0x7]
  %25 = vset.pattern.permute.xlu0 0
  %26 = vperm.xlu0 %25, %v23
  %v27 = vpop.permute.xlu0 %26
  %vm29 = vcmask 64512
  %v31 = vsel %vm29, %v21, 0
  %vm33 = vcmask 1043456
  %v35 = vsel %vm33, %v22, 0
  %37 = vmatpush.bf16.msra.mxu0 0
  %38 = vmatpush.bf16.msra.mxu0 0
  %39 = vmatpush.bf16.msra.mxu0 0
  %40 = vmatpush.bf16.msra.mxu0 0
  %41 = vmatpush.bf16.msra.mxu0 0
  %42 = vmatpush.bf16.msra.mxu0 0
  %43 = vmatpush.bf16.msra.mxu0 0
  %44 = vmatpush.bf16.msra.mxu0 %v35
  %45 = vmatmul.bf16.gmra.mxu0 %v31
  %v46 = vpop.f32.mrf.mxu0
  %v47 = vadd.f32 %v27, %v46
  %v48 = vpop.f32.mrf.mxu0
  %49 = vdwg.mxu0
  %v50 = vpack.c.bf16 %v47, %v47
  %v51 = vld [vmem:[%s2] sm:$0xf]
  %v52 = vld [vmem:[%s2 + $0x4] sm:$0xf]
  %v53 = vld [vmem:[%s2 + $0x8] sm:$0xf]
  %v54 = vld [vmem:[%s2 + $0xc] sm:$0x3]
  %v55 = vld [vmem:[%s3] sm:$0xff]
  %v56 = vld [vmem:[%s3 + $0x8] sm:$0xff]
  %v57 = vld [vmem:[%s3 + $0x10] sm:$0xff]
  %v58 = vld [vmem:[%s3 + $0x18] sm:$0x7]
  %60 = vset.pattern.permute.xlu0 0
  %61 = vperm.xlu0 %60, %v55
  %v62 = vpop.permute.xlu0 %61
  %65 = vset.pattern.permute.xlu0 0
  %66 = vperm.xlu0 %65, %v56
  %v67 = vpop.permute.xlu0 %66
  %70 = vset.pattern.permute.xlu0 0
  %71 = vperm.xlu0 %70, %v57
  %v72 = vpop.permute.xlu0 %71
  %75 = vset.pattern.permute.xlu0 0
  %76 = vperm.xlu0 %75, %v58
  %v77 = vpop.permute.xlu0 %76
  %v83 = vunpack.c.l.b16 %v51
  %v84 = vunpack.c.l.b16 %v52
  %v85 = vunpack.c.l.b16 %v53
  %v86 = vunpack.c.l.b16 %v54
  %v87 = vpack.c.b16 %v84, %v83
  %v88 = vpack.c.b16 %v86, %v85
  %vm89 = vcmask 23552
  %v91 = vsel %vm89, %v87, 0
  %v94 = vsel %vm89, %v88, 0
  %vm96 = vcmask 1040384
  %vm97 = vcmask 1041408
  %v98 = vsel %vm96, 4294967295, 65535
  %v99 = vsel %vm97, %v98, 0
  %v101 = vand.u32 %v50, %v99
  %103 = vmatpush.bf16.msra.mxu0 0
  %104 = vmatpush.bf16.msra.mxu0 0
  %105 = vmatpush.bf16.msra.mxu0 0
  %106 = vmatpush.bf16.msra.mxu0 0
  %107 = vmatpush.bf16.msra.mxu0 0
  %108 = vmatpush.bf16.msra.mxu0 0
  %109 = vmatpush.bf16.msra.mxu0 0
  %110 = vmatpush.bf16.msra.mxu0 %v101
  %111 = vmatmul.bf16.gmra.mxu0 %v91
  %v112 = vpop.f32.mrf.mxu0
  %v113 = vadd.f32 %v62, %v112
  %v114 = vpop.f32.mrf.mxu0
  %v115 = vadd.f32 %v67, %v114
  %116 = vmatmul.bf16.gmra.mxu0 %v94
  %v117 = vpop.f32.mrf.mxu0
  %v118 = vadd.f32 %v72, %v117
  %v119 = vpop.f32.mrf.mxu0
  %v120 = vadd.f32 %v77, %v119
  %121 = vdwg.mxu0
  %v122 = vtanh.pop %v113
  %v123 = vtanh.pop %v115
  %v124 = vtanh.pop %v118
  %v125 = vtanh.pop %v120
  %v126 = vadd.f32 %v122, 1.0
  %v127 = vadd.f32 %v123, 1.0
  %v128 = vadd.f32 %v124, 1.0
  %v129 = vadd.f32 %v125, 1.0
  %v130 = vmul.f32 %v126, 0.5
  %v131 = vmul.f32 %v127, 0.5
  %v132 = vmul.f32 %v128, 0.5
  %v133 = vmul.f32 %v129, 0.5
  %v134 = vpack.c.bf16 %v130, %v130
  %v135 = vpack.c.bf16 %v131, %v131
  %v136 = vpack.c.bf16 %v132, %v132
  %v137 = vpack.c.bf16 %v133, %v133
  %vm138 = vcmask 257024
  %139 = vst.msk [vmem:[%s5] sm:$0xf] %vm138, %v134
  %140 = vst.msk [vmem:[%s5 + $0x4] sm:$0xf] %vm138, %v135
  %141 = vst.msk [vmem:[%s5 + $0x8] sm:$0xf] %vm138, %v136
  %vm142 = vcmask 254976
  %vm143 = vsmask.f32 1280
  %vm144 = vmand %vm142, %vm143
  %v145 = vld [vmem:[%s5 + $0xc] sm:$0x3]
  %v146 = vsel %vm144, %v137, %v145
  %147 = vst [vmem:[%s5 + $0xc] sm:$0x3] %v146
  // Predicated region
  $region22: #{unet_forward.29} parent=0 // pred_check
    _
  $region23: #{unet_forward.29} parent=0 // pred_check_branch
    %149 = sbr.rel (0) target = $region25
  $region24: #{unet_forward.29} parent=0 // pred_region
    _
  $region25: #{unet_forward.29} parent=0 // pred_fallthru
    _
  // Predicated region
  $region26: #{unet_forward.29} parent=0 // pred_check
    _
  $region27: #{unet_forward.29} parent=0 // pred_check_branch
    %151 = sbr.rel (0) target = $region29
  $region28: #{unet_forward.29} parent=0 // pred_region
    _
  $region29: #{unet_forward.29} parent=0 // pred_fallthru
    _

</llo_original>
